<compile_context>
chip_gen: v5e
topology: v5e:2x2
jax: 0.10.0
libtpu: 0.0.40
codegen_flags: <defaults>
</compile_context>

<pallas_src>
import functools

import jax
import jax.numpy as jnp
from jax import lax
from jax.experimental import pallas as pl
from jax.experimental.pallas import tpu as pltpu


# ---------------------------------------------------------------------------
# exact (erf-based) GELU, matching torch.nn.GELU() default.
# erf via Abramowitz & Stegun 7.1.26 polynomial (|err| < 1.5e-7).
# ---------------------------------------------------------------------------
def _erf(z):
    a1, a2, a3, a4, a5 = 0.254829592, -0.284496736, 1.421413741, -1.453152027, 1.061405429
    p = 0.3275911
    s = jnp.where(z >= 0.0, 1.0, -1.0)
    za = jnp.abs(z)
    t = 1.0 / (1.0 + p * za)
    poly = ((((a5 * t + a4) * t + a3) * t + a2) * t + a1) * t
    return s * (1.0 - poly * jnp.exp(-za * za))


def _gelu(x):
    return 0.5 * x * (1.0 + _erf(x * 0.7071067811865476))


# ---------------------------------------------------------------------------
# Pallas kernel: whole ParticleGNN forward pass.
# ---------------------------------------------------------------------------
def _gnn_kernel(x_ref, adj_ref, m_ref, mt_ref, invc_ref, w_ref, v_ref, out_ref,
                *, in_dim, hidden, heads, tag_k, n_classes):
    H = hidden
    bf16 = jnp.bfloat16

    def mm(a, b):
        return jnp.dot(a, b, preferred_element_type=jnp.float32)

    def mm_bt(a, b):  # contract last dims: a[P,H] x b[Q,H] -> [P,Q]  (MXU trans-B)
        return lax.dot_general(a, b, (((1,), (1,)), ((), ())),
                               preferred_element_type=jnp.float32)

    # ---- static row offsets into the packed weight matrix -------------------
    o_enc = 0
    o_gat = o_enc + in_dim
    o_tag = o_gat + H
    o_gc = o_tag + (tag_k + 1) * H
    o_cls1 = o_gc + 2 * H
    o_cls2 = o_cls1 + 2 * H

    # row indices into the packed vector-parameter matrix
    ENC_B, GAT_B = 0, 1
    N1_W, N1_B, N1_MS = 2, 3, 4
    TAG_B = 5
    N2_W, N2_B, N2_MS = 6, 7, 8
    GC_B, CLS_B1, CLS_B2 = 9, 10, 11
    ATT_SRC = 12
    ATT_DST = ATT_SRC + heads
    HEAD_MASK = ATT_DST + heads

    def vrow(i):                       # [1, H] row of the packed vector params
        return v_ref[i:i + 1, :]

    x = x_ref[...]                     # [N, in_dim]  f32
    adj = adj_ref[...]                 # [N, N]  bf16 adjacency adj[dst, src]
    M = m_ref[...]                     # [B, N]  one-hot graph membership
    MT = mt_ref[...]                   # [N, B]
    invc = invc_ref[...]               # [B, 1]  1 / nodes-per-graph
    n = x.shape[0]
    n_graphs = M.shape[0]

    # ---- encoder: Linear(input_dim, hidden) + GELU ---------------------------
    h = _gelu(mm(x, w_ref[o_enc:o_enc + in_dim, :]) + vrow(ENC_B))

    # ---- GATConv(hidden, hidden//heads, heads), concat, +self-loops ----------
    ri = lax.broadcasted_iota(jnp.int32, (n, n), 0)
    ci = lax.broadcasted_iota(jnp.int32, (n, n), 1)
    neigh = jnp.logical_or(adj > 0.0, ri == ci)        # edges + self loops (hoisted)

    xp = mm(h, w_ref[o_gat:o_gat + H, :])              # [N, H] (= heads*head_dim)
    att_src = v_ref[ATT_SRC:ATT_SRC + heads, :]        # [heads, H] (zero padded per head)
    att_dst = v_ref[ATT_DST:ATT_DST + heads, :]
    a_src = mm_bt(att_src, xp)                         # [heads, N]  per-head src logits (rows)
    a_dst = mm_bt(xp, att_dst)                         # [N, heads]  per-head dst logits (cols)

    agg = jnp.zeros((n, H), jnp.float32)
    for hd in range(heads):
        dst_col = a_dst[:, hd:hd + 1]                  # [N, 1]
        e = dst_col + a_src[hd:hd + 1, :]              # e[i,j] = a_dst[i] + a_src[j]
        e = jnp.where(e > 0, e, 0.2 * e)               # LeakyReLU(0.2)
        e = jnp.where(neigh, e, -1e30)                 # softmax only over real edges
        # per-row upper bound (softmax is shift-invariant): LeakyReLU(a_dst[i] + max_j a_src[j])
        src_max = jnp.max(a_src[hd:hd + 1, :], axis=1, keepdims=True)   # [1,1] cheap reduction
        bound = dst_col + src_max
        bound = jnp.where(bound > 0, bound, 0.2 * bound)
        p = jnp.exp(e - bound)                         # masked entries underflow to exactly 0
        alpha = p * pl.reciprocal(jnp.sum(p, axis=1, keepdims=True), approx=True)
        msg = xp * v_ref[HEAD_MASK + hd:HEAD_MASK + hd + 1, :]          # head's column slice
        agg = agg + mm(alpha.astype(bf16), msg.astype(bf16))            # alpha dies here
    h = agg + vrow(GAT_B)

    # ---- GraphNorm (two-pass, matches PyG numerically) -----------------------
    def graph_norm(hin, w, b, ms):
        mean = mm(M, hin) * invc                       # [B, F]
        out = hin - ms * mm(MT, mean)                  # x - mean_scale * mean[batch]
        var = mm(M, out * out) * invc                  # [B, F]
        inv_std = lax.rsqrt(var + 1e-5)                # EUP rsqrt instead of sqrt+div
        return w * out * mm(MT, inv_std) + b

    h = jnp.maximum(graph_norm(h, vrow(N1_W), vrow(N1_B), vrow(N1_MS)), 0.0)

    # ---- TAGConv(hidden, hidden), K=3, gcn_norm WITHOUT self-loops -----------
    ones_col = jnp.ones((n, 1), bf16)
    deg = mm(adj, ones_col)                            # in-degree on the MXU, [N, 1]
    dis = jnp.where(deg > 0, lax.rsqrt(deg), 0.0)
    xs = [h]
    for _ in range(tag_k):
        # (D^-1/2 A D^-1/2) x  ==  dis * (A @ (dis * x))  -> no row-vector needed
        xs.append(dis * mm(adj, (dis * xs[-1]).astype(bf16)))
    # fused: concat([x0..xK], axis=1) [N,(K+1)H] @ stacked tag weights [(K+1)H,H]
    h = mm(jnp.concatenate(xs, axis=1),
           w_ref[o_tag:o_tag + (tag_k + 1) * H, :]) + vrow(TAG_B)

    h = jnp.maximum(graph_norm(h, vrow(N2_W), vrow(N2_B), vrow(N2_MS)), 0.0)

    # ---- GraphConv(hidden, hidden), aggr='add' (fused [N,2H] @ [2H,H]) -------
    h = jnp.maximum(
        mm(jnp.concatenate([mm(adj, h.astype(bf16)), h], axis=1),
           w_ref[o_gc:o_gc + 2 * H, :]) + vrow(GC_B), 0.0)

    # ---- global_max_pool / global_mean_pool ----------------------------------
    x_mean = mm(M, h) * invc                            # [B, F]
    maxs = []
    for g in range(n_graphs):                           # static, tiny B; 2-D masked max
        hm = jnp.where(MT[:, g:g + 1] > 0, h, -1e30)
        maxs.append(jnp.max(hm, axis=0, keepdims=True))
    x_max = jnp.concatenate(maxs, axis=0)               # [B, F]

    # ---- classifier: Linear(2H, H) -> Dropout(identity in eval) -> GELU -> Linear(H, C)
    h1 = _gelu(mm(jnp.concatenate([x_max, x_mean], axis=1),
                  w_ref[o_cls1:o_cls1 + 2 * H, :]) + vrow(CLS_B1))
    logits = (mm(h1, w_ref[o_cls2:o_cls2 + H, :]) + vrow(CLS_B2))[:, :n_classes]

    # log_softmax(dim=-1)
    mx = jnp.max(logits, axis=1, keepdims=True)
    lse = mx + jnp.log(jnp.sum(jnp.exp(logits - mx), axis=1, keepdims=True))
    out_ref[...] = logits - lse


# ---------------------------------------------------------------------------
# Wrapper
# ---------------------------------------------------------------------------
def particle_gnn_forward(x, adj, batch_onehot, params):
    n_graphs = batch_onehot.shape[0]
    in_dim, hidden = params["in_dim"], params["hidden"]
    heads, tag_k, n_classes = params["heads"], params["tag_k"], params["n_classes"]

    counts = jnp.sum(batch_onehot, axis=1, keepdims=True)       # [B, 1]
    inv_counts = 1.0 / counts                                   # exact, host/XLA side
    mt = batch_onehot.T                                         # [N, B]
    adj_bf16 = adj.astype(jnp.bfloat16)                         # {0,1} exact; half the DMA/VMEM

    kernel = functools.partial(_gnn_kernel, in_dim=in_dim, hidden=hidden,
                               heads=heads, tag_k=tag_k, n_classes=n_classes)
    args = (x, adj_bf16, batch_onehot, mt, inv_counts, params["w"], params["v"])
    return pl.pallas_call(
        kernel,
        out_shape=jax.ShapeDtypeStruct((n_graphs, n_classes), jnp.float32),
        in_specs=[pl.BlockSpec(memory_space=pltpu.MemorySpace.VMEM) for _ in args],
        out_specs=pl.BlockSpec(memory_space=pltpu.MemorySpace.VMEM),
        compiler_params=pltpu.CompilerParams(vmem_limit_bytes=32 * 1024 * 1024),
    )(*args)


# ---------------------------------------------------------------------------
# Deterministic parameter init + packing (shapes follow ParticleGNN.__init__)
# ---------------------------------------------------------------------------
def init_params(key, in_dim, hidden, heads, n_classes=2, tag_k=3):
    head_dim = hidden // heads
    ks = jax.random.split(key, 16)

    def w(k, shape, scale=0.1):
        return scale * jax.random.normal(k, shape, dtype=jnp.float32)

    enc_w = w(ks[0], (in_dim, hidden));       enc_b = w(ks[1], (hidden,))
    gat_w = w(ks[2], (hidden, heads * head_dim))
    att_src = w(ks[3], (heads, head_dim));    att_dst = w(ks[4], (heads, head_dim))
    gat_b = w(ks[5], (heads * head_dim,))
    tag_w = w(ks[6], (tag_k + 1, hidden, hidden)); tag_b = w(ks[7], (hidden,))
    gc_wrel = w(ks[8], (hidden, hidden));     gc_brel = w(ks[9], (hidden,))
    gc_wroot = w(ks[10], (hidden, hidden))
    cls_w1 = w(ks[11], (2 * hidden, hidden)); cls_b1 = w(ks[12], (hidden,))
    cls_w2 = w(ks[13], (hidden, n_classes));  cls_b2 = w(ks[14], (n_classes,))

    # zero-pad per-head attention vectors / head masks out to full width so the
    # kernel never slices unaligned lane ranges.
    att_src_full = jnp.zeros((heads, hidden), jnp.float32)
    att_dst_full = jnp.zeros((heads, hidden), jnp.float32)
    head_mask = jnp.zeros((heads, hidden), jnp.float32)
    for hd in range(heads):
        lo = hd * head_dim
        att_src_full = att_src_full.at[hd, lo:lo + head_dim].set(att_src[hd])
        att_dst_full = att_dst_full.at[hd, lo:lo + head_dim].set(att_dst[hd])
        head_mask = head_mask.at[hd, lo:lo + head_dim].set(1.0)

    # --- pack all matrix weights into ONE [R, hidden] array (8-aligned blocks) ---
    w_big = jnp.concatenate([
        enc_w,                                              # rows [0, in_dim)
        gat_w,                                              # [in_dim, in_dim+H)
        tag_w.reshape((tag_k + 1) * hidden, hidden),        # next (K+1)*H rows
        jnp.concatenate([gc_wrel, gc_wroot], axis=0),       # next 2H rows
        cls_w1,                                             # next 2H rows
        jnp.pad(cls_w2, ((0, 0), (0, hidden - n_classes))), # next H rows (cols padded)
    ], axis=0).astype(jnp.float32)

    # --- pack all [1,H] vectors + attention vectors into ONE [K, hidden] array ---
    def row(v1d):
        return jnp.pad(v1d, (0, hidden - v1d.shape[0]))[None, :]

    ones, zeros = jnp.ones((1, hidden), jnp.float32), jnp.zeros((1, hidden), jnp.float32)
    vecs = jnp.concatenate([
        row(enc_b), row(gat_b),
        ones, zeros, ones,          # GraphNorm1: weight, bias, mean_scale
        row(tag_b),
        ones, zeros, ones,          # GraphNorm2: weight, bias, mean_scale
        row(gc_brel), row(cls_b1), row(cls_b2),
        att_src_full, att_dst_full, head_mask,
    ], axis=0).astype(jnp.float32)

    return dict(w=w_big, v=vecs, in_dim=in_dim, hidden=hidden, heads=heads,
                tag_k=tag_k, n_classes=n_classes)


if __name__ == "__main__":
    N, B, IN_DIM, HIDDEN, HEADS = 64, 2, 8, 32, 4
    n_per = N // B

    key = jax.random.PRNGKey(0)
    kx, kp = jax.random.split(key)
    x = jax.random.normal(kx, (N, IN_DIM), dtype=jnp.float32)

    # deterministic bidirectional graph: inside each graph, node i connects to
    # i+1, i+3, i+7 (mod nodes-per-graph) in both directions; no self loops.
    dst, src = [], []
    for b in range(B):
        off = b * n_per
        for i in range(n_per):
            for d in (1, 3, 7):
                j = (i + d) % n_per
                dst += [off + i, off + j]
                src += [off + j, off + i]
    adj = jnp.zeros((N, N), jnp.float32).at[jnp.array(dst), jnp.array(src)].set(1.0)

    graph_id = jnp.arange(N) // n_per
    batch_onehot = (graph_id[None, :] == jnp.arange(B)[:, None]).astype(jnp.float32)

    params = init_params(kp, IN_DIM, HIDDEN, HEADS)

    out = particle_gnn_forward(x, adj, batch_onehot, params)
    out = jax.block_until_ready(out)

    assert out.shape == (B, 2)
    assert bool(jnp.all(jnp.isfinite(out)))
    # log-softmax rows must exponentiate to 1
    assert bool(jnp.allclose(jnp.sum(jnp.exp(out), axis=-1), 1.0, atol=1e-4))
    print("KERNEL_OK")
</pallas_src>

<mosaic_0001>
module attributes {stable_mosaic.version = 11 : i64} {
  func.func @_gnn_kernel(%arg0: memref<64x8xf32, #tpu.memory_space<vmem>>, %arg1: memref<64x64xbf16, #tpu.memory_space<vmem>>, %arg2: memref<2x64xf32, #tpu.memory_space<vmem>>, %arg3: memref<64x2xf32, #tpu.memory_space<vmem>>, %arg4: memref<2x1xf32, #tpu.memory_space<vmem>>, %arg5: memref<328x32xf32, #tpu.memory_space<vmem>>, %arg6: memref<24x32xf32, #tpu.memory_space<vmem>>, %arg7: memref<2x2xf32, #tpu.memory_space<vmem>>) attributes {dimension_semantics = [], scalar_prefetch = 0 : i64, scratch_operands = 0 : i64, tpu.core_type = #tpu.core_type<tc>} {
    %c0 = arith.constant 0 : index
    %c0_0 = arith.constant 0 : index
    %0 = vector.load %arg0[%c0, %c0_0] : memref<64x8xf32, #tpu.memory_space<vmem>>, vector<64x8xf32>
    %c0_1 = arith.constant 0 : index
    %c0_2 = arith.constant 0 : index
    %1 = vector.load %arg1[%c0_1, %c0_2] : memref<64x64xbf16, #tpu.memory_space<vmem>>, vector<64x64xbf16>
    %c0_3 = arith.constant 0 : index
    %c0_4 = arith.constant 0 : index
    %2 = vector.load %arg2[%c0_3, %c0_4] : memref<2x64xf32, #tpu.memory_space<vmem>>, vector<2x64xf32>
    %c0_5 = arith.constant 0 : index
    %c0_6 = arith.constant 0 : index
    %3 = vector.load %arg3[%c0_5, %c0_6] : memref<64x2xf32, #tpu.memory_space<vmem>>, vector<64x2xf32>
    %c0_7 = arith.constant 0 : index
    %c0_8 = arith.constant 0 : index
    %4 = vector.load %arg4[%c0_7, %c0_8] : memref<2x1xf32, #tpu.memory_space<vmem>>, vector<2x1xf32>
    %c0_9 = arith.constant 0 : index
    %c0_10 = arith.constant 0 : index
    %5 = vector.load %arg5[%c0_9, %c0_10] : memref<328x32xf32, #tpu.memory_space<vmem>>, vector<8x32xf32>
    %cst = arith.constant dense<0.000000e+00> : vector<64x32xf32>
    %6 = tpu.matmul %0, %5, %cst {dimension_numbers = #tpu.dot_dimension_numbers<[1], [0], [0], [1], [0, 0, 1, 1], [], []>} : vector<64x8xf32>, vector<8x32xf32>, vector<64x32xf32> -> vector<64x32xf32>
    %c0_11 = arith.constant 0 : index
    %c0_12 = arith.constant 0 : index
    %7 = vector.load %arg6[%c0_11, %c0_12] : memref<24x32xf32, #tpu.memory_space<vmem>>, vector<1x32xf32>
    %8 = vector.broadcast %7 : vector<1x32xf32> to vector<64x32xf32>
    %9 = arith.addf %6, %8 : vector<64x32xf32>
    %cst_13 = arith.constant 5.000000e-01 : f32
    %10 = vector.broadcast %cst_13 : f32 to vector<64x32xf32>
    %11 = arith.mulf %10, %9 : vector<64x32xf32>
    %cst_14 = arith.constant 0.707106769 : f32
    %12 = vector.broadcast %cst_14 : f32 to vector<64x32xf32>
    %13 = arith.mulf %9, %12 : vector<64x32xf32>
    %cst_15 = arith.constant 0.000000e+00 : f32
    %14 = vector.broadcast %cst_15 : f32 to vector<64x32xf32>
    %15 = arith.cmpf oge, %13, %14 : vector<64x32xf32>
    %cst_16 = arith.constant 1.000000e+00 : f32
    %cst_17 = arith.constant -1.000000e+00 : f32
    %16 = vector.broadcast %cst_16 : f32 to vector<64x32xf32>
    %17 = vector.broadcast %cst_17 : f32 to vector<64x32xf32>
    %18 = arith.select %15, %16, %17 : vector<64x32xi1>, vector<64x32xf32>
    %19 = math.absf %13 : vector<64x32xf32>
    %cst_18 = arith.constant 0.327591091 : f32
    %20 = vector.broadcast %cst_18 : f32 to vector<64x32xf32>
    %21 = arith.mulf %20, %19 : vector<64x32xf32>
    %cst_19 = arith.constant 1.000000e+00 : f32
    %22 = vector.broadcast %cst_19 : f32 to vector<64x32xf32>
    %23 = arith.addf %22, %21 : vector<64x32xf32>
    %cst_20 = arith.constant 1.000000e+00 : f32
    %24 = vector.broadcast %cst_20 : f32 to vector<64x32xf32>
    %25 = arith.divf %24, %23 : vector<64x32xf32>
    %cst_21 = arith.constant 1.06140542 : f32
    %26 = vector.broadcast %cst_21 : f32 to vector<64x32xf32>
    %27 = arith.mulf %26, %25 : vector<64x32xf32>
    %cst_22 = arith.constant -1.45315206 : f32
    %28 = vector.broadcast %cst_22 : f32 to vector<64x32xf32>
    %29 = arith.addf %27, %28 : vector<64x32xf32>
    %30 = arith.mulf %29, %25 : vector<64x32xf32>
    %cst_23 = arith.constant 1.42141378 : f32
    %31 = vector.broadcast %cst_23 : f32 to vector<64x32xf32>
    %32 = arith.addf %30, %31 : vector<64x32xf32>
    %33 = arith.mulf %32, %25 : vector<64x32xf32>
    %cst_24 = arith.constant -0.284496725 : f32
    %34 = vector.broadcast %cst_24 : f32 to vector<64x32xf32>
    %35 = arith.addf %33, %34 : vector<64x32xf32>
    %36 = arith.mulf %35, %25 : vector<64x32xf32>
    %cst_25 = arith.constant 0.254829586 : f32
    %37 = vector.broadcast %cst_25 : f32 to vector<64x32xf32>
    %38 = arith.addf %36, %37 : vector<64x32xf32>
    %39 = arith.mulf %38, %25 : vector<64x32xf32>
    %cst_26 = arith.constant 0.000000e+00 : f32
    %40 = vector.broadcast %cst_26 : f32 to vector<64x32xf32>
    %41 = arith.subf %40, %19 : vector<64x32xf32>
    %42 = arith.mulf %41, %19 : vector<64x32xf32>
    %43 = math.exp %42 : vector<64x32xf32>
    %44 = arith.mulf %39, %43 : vector<64x32xf32>
    %cst_27 = arith.constant 1.000000e+00 : f32
    %45 = vector.broadcast %cst_27 : f32 to vector<64x32xf32>
    %46 = arith.subf %45, %44 : vector<64x32xf32>
    %47 = arith.mulf %18, %46 : vector<64x32xf32>
    %cst_28 = arith.constant 1.000000e+00 : f32
    %48 = vector.broadcast %cst_28 : f32 to vector<64x32xf32>
    %49 = arith.addf %48, %47 : vector<64x32xf32>
    %50 = arith.mulf %11, %49 : vector<64x32xf32>
    %51 = tpu.iota {dimensions = array<i32: 0>} : vector<64x64xi32>
    %52 = tpu.iota {dimensions = array<i32: 1>} : vector<64x64xi32>
    %cst_29 = arith.constant 0.000000e+00 : bf16
    %53 = vector.broadcast %cst_29 : bf16 to vector<64x64xbf16>
    %54 = arith.cmpf ogt, %1, %53 : vector<64x64xbf16>
    %55 = arith.cmpi eq, %51, %52 : vector<64x64xi32>
    %56 = arith.ori %54, %55 : vector<64x64xi1>
    %c8 = arith.constant 8 : index
    %c0_30 = arith.constant 0 : index
    %57 = vector.load %arg5[%c8, %c0_30] : memref<328x32xf32, #tpu.memory_space<vmem>>, vector<32x32xf32>
    %cst_31 = arith.constant dense<0.000000e+00> : vector<64x32xf32>
    %58 = tpu.matmul %50, %57, %cst_31 {dimension_numbers = #tpu.dot_dimension_numbers<[1], [0], [0], [1], [0, 0, 1, 1], [], []>} : vector<64x32xf32>, vector<32x32xf32>, vector<64x32xf32> -> vector<64x32xf32>
    %c12 = arith.constant 12 : index
    %c0_32 = arith.constant 0 : index
    %59 = vector.load %arg6[%c12, %c0_32] : memref<24x32xf32, #tpu.memory_space<vmem>>, vector<4x32xf32>
    %c16 = arith.constant 16 : index
    %c0_33 = arith.constant 0 : index
    %60 = vector.load %arg6[%c16, %c0_33] : memref<24x32xf32, #tpu.memory_space<vmem>>, vector<4x32xf32>
    %cst_34 = arith.constant dense<0.000000e+00> : vector<4x64xf32>
    %61 = tpu.matmul %59, %58, %cst_34 {dimension_numbers = #tpu.dot_dimension_numbers<[1], [1], [0], [0], [0, 0, 1, 0], [], []>} : vector<4x32xf32>, vector<64x32xf32>, vector<4x64xf32> -> vector<4x64xf32>
    %cst_35 = arith.constant dense<0.000000e+00> : vector<64x4xf32>
    %62 = tpu.matmul %58, %60, %cst_35 {dimension_numbers = #tpu.dot_dimension_numbers<[1], [1], [0], [0], [0, 0, 1, 0], [], []>} : vector<64x32xf32>, vector<4x32xf32>, vector<64x4xf32> -> vector<64x4xf32>
    %cst_36 = arith.constant 0.000000e+00 : f32
    %63 = vector.broadcast %cst_36 : f32 to vector<64x32xf32>
    %64 = vector.extract_strided_slice %62 {offsets = [0, 0], sizes = [64, 1], strides = [1, 1]} : vector<64x4xf32> to vector<64x1xf32>
    %65 = vector.extract_strided_slice %61 {offsets = [0, 0], sizes = [1, 64], strides = [1, 1]} : vector<4x64xf32> to vector<1x64xf32>
    %66 = vector.broadcast %64 : vector<64x1xf32> to vector<64x64xf32>
    %67 = vector.broadcast %65 : vector<1x64xf32> to vector<64x64xf32>
    %68 = arith.addf %66, %67 : vector<64x64xf32>
    %cst_37 = arith.constant 0.000000e+00 : f32
    %69 = vector.broadcast %cst_37 : f32 to vector<64x64xf32>
    %70 = arith.cmpf ogt, %68, %69 : vector<64x64xf32>
    %cst_38 = arith.constant 2.000000e-01 : f32
    %71 = vector.broadcast %cst_38 : f32 to vector<64x64xf32>
    %72 = arith.mulf %71, %68 : vector<64x64xf32>
    %73 = arith.select %70, %68, %72 : vector<64x64xi1>, vector<64x64xf32>
    %cst_39 = arith.constant -1.000000e+30 : f32
    %74 = vector.broadcast %cst_39 : f32 to vector<64x64xf32>
    %75 = arith.select %56, %73, %74 : vector<64x64xi1>, vector<64x64xf32>
    %76 = vector.extract_strided_slice %61 {offsets = [0, 0], sizes = [1, 64], strides = [1, 1]} : vector<4x64xf32> to vector<1x64xf32>
    %cst_40 = arith.constant dense<0xFF800000> : vector<1xf32>
    %77 = vector.multi_reduction <maximumf>, %76, %cst_40 [1] : vector<1x64xf32> to vector<1xf32>
    %78 = vector.shape_cast %77 : vector<1xf32> to vector<1x1xf32>
    %79 = vector.broadcast %78 : vector<1x1xf32> to vector<64x1xf32>
    %80 = arith.addf %64, %79 : vector<64x1xf32>
    %cst_41 = arith.constant 0.000000e+00 : f32
    %81 = vector.broadcast %cst_41 : f32 to vector<64x1xf32>
    %82 = arith.cmpf ogt, %80, %81 : vector<64x1xf32>
    %cst_42 = arith.constant 2.000000e-01 : f32
    %83 = vector.broadcast %cst_42 : f32 to vector<64x1xf32>
    %84 = arith.mulf %83, %80 : vector<64x1xf32>
    %85 = arith.select %82, %80, %84 : vector<64x1xi1>, vector<64x1xf32>
    %86 = vector.broadcast %85 : vector<64x1xf32> to vector<64x64xf32>
    %87 = arith.subf %75, %86 : vector<64x64xf32>
    %88 = math.exp %87 : vector<64x64xf32>
    %cst_43 = arith.constant dense<0.000000e+00> : vector<64xf32>
    %89 = vector.multi_reduction <add>, %88, %cst_43 [1] : vector<64x64xf32> to vector<64xf32>
    %90 = vector.shape_cast %89 : vector<64xf32> to vector<64x1xf32>
    %91 = tpu.reciprocal %90 {approx = true} : vector<64x1xf32> -> vector<64x1xf32>
    %92 = vector.broadcast %91 : vector<64x1xf32> to vector<64x64xf32>
    %93 = arith.mulf %88, %92 : vector<64x64xf32>
    %c20 = arith.constant 20 : index
    %c0_44 = arith.constant 0 : index
    %94 = vector.load %arg6[%c20, %c0_44] : memref<24x32xf32, #tpu.memory_space<vmem>>, vector<1x32xf32>
    %95 = vector.broadcast %94 : vector<1x32xf32> to vector<64x32xf32>
    %96 = arith.mulf %58, %95 : vector<64x32xf32>
    %97 = arith.truncf %93 : vector<64x64xf32> to vector<64x64xbf16>
    %98 = arith.truncf %96 : vector<64x32xf32> to vector<64x32xbf16>
    %cst_45 = arith.constant dense<0.000000e+00> : vector<64x32xf32>
    %99 = tpu.matmul %97, %98, %cst_45 {dimension_numbers = #tpu.dot_dimension_numbers<[1], [0], [0], [1], [0, 0, 1, 1], [], []>} : vector<64x64xbf16>, vector<64x32xbf16>, vector<64x32xf32> -> vector<64x32xf32>
    %100 = arith.addf %63, %99 : vector<64x32xf32>
    %101 = vector.extract_strided_slice %62 {offsets = [0, 1], sizes = [64, 1], strides = [1, 1]} : vector<64x4xf32> to vector<64x1xf32>
    %102 = vector.extract_strided_slice %61 {offsets = [1, 0], sizes = [1, 64], strides = [1, 1]} : vector<4x64xf32> to vector<1x64xf32>
    %103 = vector.broadcast %101 : vector<64x1xf32> to vector<64x64xf32>
    %104 = vector.broadcast %102 : vector<1x64xf32> to vector<64x64xf32>
    %105 = arith.addf %103, %104 : vector<64x64xf32>
    %cst_46 = arith.constant 0.000000e+00 : f32
    %106 = vector.broadcast %cst_46 : f32 to vector<64x64xf32>
    %107 = arith.cmpf ogt, %105, %106 : vector<64x64xf32>
    %cst_47 = arith.constant 2.000000e-01 : f32
    %108 = vector.broadcast %cst_47 : f32 to vector<64x64xf32>
    %109 = arith.mulf %108, %105 : vector<64x64xf32>
    %110 = arith.select %107, %105, %109 : vector<64x64xi1>, vector<64x64xf32>
    %cst_48 = arith.constant -1.000000e+30 : f32
    %111 = vector.broadcast %cst_48 : f32 to vector<64x64xf32>
    %112 = arith.select %56, %110, %111 : vector<64x64xi1>, vector<64x64xf32>
    %113 = vector.extract_strided_slice %61 {offsets = [1, 0], sizes = [1, 64], strides = [1, 1]} : vector<4x64xf32> to vector<1x64xf32>
    %cst_49 = arith.constant dense<0xFF800000> : vector<1xf32>
    %114 = vector.multi_reduction <maximumf>, %113, %cst_49 [1] : vector<1x64xf32> to vector<1xf32>
    %115 = vector.shape_cast %114 : vector<1xf32> to vector<1x1xf32>
    %116 = vector.broadcast %115 : vector<1x1xf32> to vector<64x1xf32>
    %117 = arith.addf %101, %116 : vector<64x1xf32>
    %cst_50 = arith.constant 0.000000e+00 : f32
    %118 = vector.broadcast %cst_50 : f32 to vector<64x1xf32>
    %119 = arith.cmpf ogt, %117, %118 : vector<64x1xf32>
    %cst_51 = arith.constant 2.000000e-01 : f32
    %120 = vector.broadcast %cst_51 : f32 to vector<64x1xf32>
    %121 = arith.mulf %120, %117 : vector<64x1xf32>
    %122 = arith.select %119, %117, %121 : vector<64x1xi1>, vector<64x1xf32>
    %123 = vector.broadcast %122 : vector<64x1xf32> to vector<64x64xf32>
    %124 = arith.subf %112, %123 : vector<64x64xf32>
    %125 = math.exp %124 : vector<64x64xf32>
    %cst_52 = arith.constant dense<0.000000e+00> : vector<64xf32>
    %126 = vector.multi_reduction <add>, %125, %cst_52 [1] : vector<64x64xf32> to vector<64xf32>
    %127 = vector.shape_cast %126 : vector<64xf32> to vector<64x1xf32>
    %128 = tpu.reciprocal %127 {approx = true} : vector<64x1xf32> -> vector<64x1xf32>
    %129 = vector.broadcast %128 : vector<64x1xf32> to vector<64x64xf32>
    %130 = arith.mulf %125, %129 : vector<64x64xf32>
    %c21 = arith.constant 21 : index
    %c0_53 = arith.constant 0 : index
    %131 = vector.load %arg6[%c21, %c0_53] : memref<24x32xf32, #tpu.memory_space<vmem>>, vector<1x32xf32>
    %132 = vector.broadcast %131 : vector<1x32xf32> to vector<64x32xf32>
    %133 = arith.mulf %58, %132 : vector<64x32xf32>
    %134 = arith.truncf %130 : vector<64x64xf32> to vector<64x64xbf16>
    %135 = arith.truncf %133 : vector<64x32xf32> to vector<64x32xbf16>
    %cst_54 = arith.constant dense<0.000000e+00> : vector<64x32xf32>
    %136 = tpu.matmul %134, %135, %cst_54 {dimension_numbers = #tpu.dot_dimension_numbers<[1], [0], [0], [1], [0, 0, 1, 1], [], []>} : vector<64x64xbf16>, vector<64x32xbf16>, vector<64x32xf32> -> vector<64x32xf32>
    %137 = arith.addf %100, %136 : vector<64x32xf32>
    %138 = vector.extract_strided_slice %62 {offsets = [0, 2], sizes = [64, 1], strides = [1, 1]} : vector<64x4xf32> to vector<64x1xf32>
    %139 = vector.extract_strided_slice %61 {offsets = [2, 0], sizes = [1, 64], strides = [1, 1]} : vector<4x64xf32> to vector<1x64xf32>
    %140 = vector.broadcast %138 : vector<64x1xf32> to vector<64x64xf32>
    %141 = vector.broadcast %139 : vector<1x64xf32> to vector<64x64xf32>
    %142 = arith.addf %140, %141 : vector<64x64xf32>
    %cst_55 = arith.constant 0.000000e+00 : f32
    %143 = vector.broadcast %cst_55 : f32 to vector<64x64xf32>
    %144 = arith.cmpf ogt, %142, %143 : vector<64x64xf32>
    %cst_56 = arith.constant 2.000000e-01 : f32
    %145 = vector.broadcast %cst_56 : f32 to vector<64x64xf32>
    %146 = arith.mulf %145, %142 : vector<64x64xf32>
    %147 = arith.select %144, %142, %146 : vector<64x64xi1>, vector<64x64xf32>
    %cst_57 = arith.constant -1.000000e+30 : f32
    %148 = vector.broadcast %cst_57 : f32 to vector<64x64xf32>
    %149 = arith.select %56, %147, %148 : vector<64x64xi1>, vector<64x64xf32>
    %150 = vector.extract_strided_slice %61 {offsets = [2, 0], sizes = [1, 64], strides = [1, 1]} : vector<4x64xf32> to vector<1x64xf32>
    %cst_58 = arith.constant dense<0xFF800000> : vector<1xf32>
    %151 = vector.multi_reduction <maximumf>, %150, %cst_58 [1] : vector<1x64xf32> to vector<1xf32>
    %152 = vector.shape_cast %151 : vector<1xf32> to vector<1x1xf32>
    %153 = vector.broadcast %152 : vector<1x1xf32> to vector<64x1xf32>
    %154 = arith.addf %138, %153 : vector<64x1xf32>
    %cst_59 = arith.constant 0.000000e+00 : f32
    %155 = vector.broadcast %cst_59 : f32 to vector<64x1xf32>
    %156 = arith.cmpf ogt, %154, %155 : vector<64x1xf32>
    %cst_60 = arith.constant 2.000000e-01 : f32
    %157 = vector.broadcast %cst_60 : f32 to vector<64x1xf32>
    %158 = arith.mulf %157, %154 : vector<64x1xf32>
    %159 = arith.select %156, %154, %158 : vector<64x1xi1>, vector<64x1xf32>
    %160 = vector.broadcast %159 : vector<64x1xf32> to vector<64x64xf32>
    %161 = arith.subf %149, %160 : vector<64x64xf32>
    %162 = math.exp %161 : vector<64x64xf32>
    %cst_61 = arith.constant dense<0.000000e+00> : vector<64xf32>
    %163 = vector.multi_reduction <add>, %162, %cst_61 [1] : vector<64x64xf32> to vector<64xf32>
    %164 = vector.shape_cast %163 : vector<64xf32> to vector<64x1xf32>
    %165 = tpu.reciprocal %164 {approx = true} : vector<64x1xf32> -> vector<64x1xf32>
    %166 = vector.broadcast %165 : vector<64x1xf32> to vector<64x64xf32>
    %167 = arith.mulf %162, %166 : vector<64x64xf32>
    %c22 = arith.constant 22 : index
    %c0_62 = arith.constant 0 : index
    %168 = vector.load %arg6[%c22, %c0_62] : memref<24x32xf32, #tpu.memory_space<vmem>>, vector<1x32xf32>
    %169 = vector.broadcast %168 : vector<1x32xf32> to vector<64x32xf32>
    %170 = arith.mulf %58, %169 : vector<64x32xf32>
    %171 = arith.truncf %167 : vector<64x64xf32> to vector<64x64xbf16>
    %172 = arith.truncf %170 : vector<64x32xf32> to vector<64x32xbf16>
    %cst_63 = arith.constant dense<0.000000e+00> : vector<64x32xf32>
    %173 = tpu.matmul %171, %172, %cst_63 {dimension_numbers = #tpu.dot_dimension_numbers<[1], [0], [0], [1], [0, 0, 1, 1], [], []>} : vector<64x64xbf16>, vector<64x32xbf16>, vector<64x32xf32> -> vector<64x32xf32>
    %174 = arith.addf %137, %173 : vector<64x32xf32>
    %175 = vector.extract_strided_slice %62 {offsets = [0, 3], sizes = [64, 1], strides = [1, 1]} : vector<64x4xf32> to vector<64x1xf32>
    %176 = vector.extract_strided_slice %61 {offsets = [3, 0], sizes = [1, 64], strides = [1, 1]} : vector<4x64xf32> to vector<1x64xf32>
    %177 = vector.broadcast %175 : vector<64x1xf32> to vector<64x64xf32>
    %178 = vector.broadcast %176 : vector<1x64xf32> to vector<64x64xf32>
    %179 = arith.addf %177, %178 : vector<64x64xf32>
    %cst_64 = arith.constant 0.000000e+00 : f32
    %180 = vector.broadcast %cst_64 : f32 to vector<64x64xf32>
    %181 = arith.cmpf ogt, %179, %180 : vector<64x64xf32>
    %cst_65 = arith.constant 2.000000e-01 : f32
    %182 = vector.broadcast %cst_65 : f32 to vector<64x64xf32>
    %183 = arith.mulf %182, %179 : vector<64x64xf32>
    %184 = arith.select %181, %179, %183 : vector<64x64xi1>, vector<64x64xf32>
    %cst_66 = arith.constant -1.000000e+30 : f32
    %185 = vector.broadcast %cst_66 : f32 to vector<64x64xf32>
    %186 = arith.select %56, %184, %185 : vector<64x64xi1>, vector<64x64xf32>
    %187 = vector.extract_strided_slice %61 {offsets = [3, 0], sizes = [1, 64], strides = [1, 1]} : vector<4x64xf32> to vector<1x64xf32>
    %cst_67 = arith.constant dense<0xFF800000> : vector<1xf32>
    %188 = vector.multi_reduction <maximumf>, %187, %cst_67 [1] : vector<1x64xf32> to vector<1xf32>
    %189 = vector.shape_cast %188 : vector<1xf32> to vector<1x1xf32>
    %190 = vector.broadcast %189 : vector<1x1xf32> to vector<64x1xf32>
    %191 = arith.addf %175, %190 : vector<64x1xf32>
    %cst_68 = arith.constant 0.000000e+00 : f32
    %192 = vector.broadcast %cst_68 : f32 to vector<64x1xf32>
    %193 = arith.cmpf ogt, %191, %192 : vector<64x1xf32>
    %cst_69 = arith.constant 2.000000e-01 : f32
    %194 = vector.broadcast %cst_69 : f32 to vector<64x1xf32>
    %195 = arith.mulf %194, %191 : vector<64x1xf32>
    %196 = arith.select %193, %191, %195 : vector<64x1xi1>, vector<64x1xf32>
    %197 = vector.broadcast %196 : vector<64x1xf32> to vector<64x64xf32>
    %198 = arith.subf %186, %197 : vector<64x64xf32>
    %199 = math.exp %198 : vector<64x64xf32>
    %cst_70 = arith.constant dense<0.000000e+00> : vector<64xf32>
    %200 = vector.multi_reduction <add>, %199, %cst_70 [1] : vector<64x64xf32> to vector<64xf32>
    %201 = vector.shape_cast %200 : vector<64xf32> to vector<64x1xf32>
    %202 = tpu.reciprocal %201 {approx = true} : vector<64x1xf32> -> vector<64x1xf32>
    %203 = vector.broadcast %202 : vector<64x1xf32> to vector<64x64xf32>
    %204 = arith.mulf %199, %203 : vector<64x64xf32>
    %c23 = arith.constant 23 : index
    %c0_71 = arith.constant 0 : index
    %205 = vector.load %arg6[%c23, %c0_71] : memref<24x32xf32, #tpu.memory_space<vmem>>, vector<1x32xf32>
    %206 = vector.broadcast %205 : vector<1x32xf32> to vector<64x32xf32>
    %207 = arith.mulf %58, %206 : vector<64x32xf32>
    %208 = arith.truncf %204 : vector<64x64xf32> to vector<64x64xbf16>
    %209 = arith.truncf %207 : vector<64x32xf32> to vector<64x32xbf16>
    %cst_72 = arith.constant dense<0.000000e+00> : vector<64x32xf32>
    %210 = tpu.matmul %208, %209, %cst_72 {dimension_numbers = #tpu.dot_dimension_numbers<[1], [0], [0], [1], [0, 0, 1, 1], [], []>} : vector<64x64xbf16>, vector<64x32xbf16>, vector<64x32xf32> -> vector<64x32xf32>
    %211 = arith.addf %174, %210 : vector<64x32xf32>
    %c1 = arith.constant 1 : index
    %c0_73 = arith.constant 0 : index
    %212 = vector.load %arg6[%c1, %c0_73] : memref<24x32xf32, #tpu.memory_space<vmem>>, vector<1x32xf32>
    %213 = vector.broadcast %212 : vector<1x32xf32> to vector<64x32xf32>
    %214 = arith.addf %211, %213 : vector<64x32xf32>
    %c2 = arith.constant 2 : index
    %c0_74 = arith.constant 0 : index
    %215 = vector.load %arg6[%c2, %c0_74] : memref<24x32xf32, #tpu.memory_space<vmem>>, vector<1x32xf32>
    %c3 = arith.constant 3 : index
    %c0_75 = arith.constant 0 : index
    %216 = vector.load %arg6[%c3, %c0_75] : memref<24x32xf32, #tpu.memory_space<vmem>>, vector<1x32xf32>
    %c4 = arith.constant 4 : index
    %c0_76 = arith.constant 0 : index
    %217 = vector.load %arg6[%c4, %c0_76] : memref<24x32xf32, #tpu.memory_space<vmem>>, vector<1x32xf32>
    %cst_77 = arith.constant dense<0.000000e+00> : vector<2x32xf32>
    %218 = tpu.matmul %2, %214, %cst_77 {dimension_numbers = #tpu.dot_dimension_numbers<[1], [0], [0], [1], [0, 0, 1, 1], [], []>} : vector<2x64xf32>, vector<64x32xf32>, vector<2x32xf32> -> vector<2x32xf32>
    %219 = vector.broadcast %4 : vector<2x1xf32> to vector<2x32xf32>
    %220 = arith.mulf %218, %219 : vector<2x32xf32>
    %cst_78 = arith.constant dense<0.000000e+00> : vector<64x32xf32>
    %221 = tpu.matmul %3, %220, %cst_78 {dimension_numbers = #tpu.dot_dimension_numbers<[1], [0], [0], [1], [0, 0, 1, 1], [], []>} : vector<64x2xf32>, vector<2x32xf32>, vector<64x32xf32> -> vector<64x32xf32>
    %222 = vector.broadcast %217 : vector<1x32xf32> to vector<64x32xf32>
    %223 = arith.mulf %222, %221 : vector<64x32xf32>
    %224 = arith.subf %214, %223 : vector<64x32xf32>
    %225 = arith.mulf %224, %224 : vector<64x32xf32>
    %cst_79 = arith.constant dense<0.000000e+00> : vector<2x32xf32>
    %226 = tpu.matmul %2, %225, %cst_79 {dimension_numbers = #tpu.dot_dimension_numbers<[1], [0], [0], [1], [0, 0, 1, 1], [], []>} : vector<2x64xf32>, vector<64x32xf32>, vector<2x32xf32> -> vector<2x32xf32>
    %227 = vector.broadcast %4 : vector<2x1xf32> to vector<2x32xf32>
    %228 = arith.mulf %226, %227 : vector<2x32xf32>
    %cst_80 = arith.constant 9.99999974E-6 : f32
    %229 = vector.broadcast %cst_80 : f32 to vector<2x32xf32>
    %230 = arith.addf %228, %229 : vector<2x32xf32>
    %231 = math.rsqrt %230 : vector<2x32xf32>
    %232 = vector.broadcast %215 : vector<1x32xf32> to vector<64x32xf32>
    %233 = arith.mulf %232, %224 : vector<64x32xf32>
    %cst_81 = arith.constant dense<0.000000e+00> : vector<64x32xf32>
    %234 = tpu.matmul %3, %231, %cst_81 {dimension_numbers = #tpu.dot_dimension_numbers<[1], [0], [0], [1], [0, 0, 1, 1], [], []>} : vector<64x2xf32>, vector<2x32xf32>, vector<64x32xf32> -> vector<64x32xf32>
    %235 = arith.mulf %233, %234 : vector<64x32xf32>
    %236 = vector.broadcast %216 : vector<1x32xf32> to vector<64x32xf32>
    %237 = arith.addf %235, %236 : vector<64x32xf32>
    %cst_82 = arith.constant 0.000000e+00 : f32
    %238 = vector.broadcast %cst_82 : f32 to vector<64x32xf32>
    %239 = arith.maximumf %237, %238 : vector<64x32xf32>
    %cst_83 = arith.constant 1.000000e+00 : bf16
    %240 = vector.broadcast %cst_83 : bf16 to vector<64x1xbf16>
    %cst_84 = arith.constant dense<0.000000e+00> : vector<64x1xf32>
    %241 = tpu.matmul %1, %240, %cst_84 {dimension_numbers = #tpu.dot_dimension_numbers<[1], [0], [0], [1], [0, 0, 1, 1], [], []>} : vector<64x64xbf16>, vector<64x1xbf16>, vector<64x1xf32> -> vector<64x1xf32>
    %cst_85 = arith.constant 0.000000e+00 : f32
    %242 = vector.broadcast %cst_85 : f32 to vector<64x1xf32>
    %243 = arith.cmpf ogt, %241, %242 : vector<64x1xf32>
    %244 = math.rsqrt %241 : vector<64x1xf32>
    %cst_86 = arith.constant 0.000000e+00 : f32
    %245 = vector.broadcast %cst_86 : f32 to vector<64x1xf32>
    %246 = arith.select %243, %244, %245 : vector<64x1xi1>, vector<64x1xf32>
    %247 = vector.broadcast %246 : vector<64x1xf32> to vector<64x32xf32>
    %248 = arith.mulf %247, %239 : vector<64x32xf32>
    %249 = arith.truncf %248 : vector<64x32xf32> to vector<64x32xbf16>
    %cst_87 = arith.constant dense<0.000000e+00> : vector<64x32xf32>
    %250 = tpu.matmul %1, %249, %cst_87 {dimension_numbers = #tpu.dot_dimension_numbers<[1], [0], [0], [1], [0, 0, 1, 1], [], []>} : vector<64x64xbf16>, vector<64x32xbf16>, vector<64x32xf32> -> vector<64x32xf32>
    %251 = vector.broadcast %246 : vector<64x1xf32> to vector<64x32xf32>
    %252 = arith.mulf %251, %250 : vector<64x32xf32>
    %253 = vector.broadcast %246 : vector<64x1xf32> to vector<64x32xf32>
    %254 = arith.mulf %253, %252 : vector<64x32xf32>
    %255 = arith.truncf %254 : vector<64x32xf32> to vector<64x32xbf16>
    %cst_88 = arith.constant dense<0.000000e+00> : vector<64x32xf32>
    %256 = tpu.matmul %1, %255, %cst_88 {dimension_numbers = #tpu.dot_dimension_numbers<[1], [0], [0], [1], [0, 0, 1, 1], [], []>} : vector<64x64xbf16>, vector<64x32xbf16>, vector<64x32xf32> -> vector<64x32xf32>
    %257 = vector.broadcast %246 : vector<64x1xf32> to vector<64x32xf32>
    %258 = arith.mulf %257, %256 : vector<64x32xf32>
    %259 = vector.broadcast %246 : vector<64x1xf32> to vector<64x32xf32>
    %260 = arith.mulf %259, %258 : vector<64x32xf32>
    %261 = arith.truncf %260 : vector<64x32xf32> to vector<64x32xbf16>
    %cst_89 = arith.constant dense<0.000000e+00> : vector<64x32xf32>
    %262 = tpu.matmul %1, %261, %cst_89 {dimension_numbers = #tpu.dot_dimension_numbers<[1], [0], [0], [1], [0, 0, 1, 1], [], []>} : vector<64x64xbf16>, vector<64x32xbf16>, vector<64x32xf32> -> vector<64x32xf32>
    %263 = vector.broadcast %246 : vector<64x1xf32> to vector<64x32xf32>
    %264 = arith.mulf %263, %262 : vector<64x32xf32>
    %265 = tpu.concatenate %239, %252, %258, %264 in 1 : vector<64x32xf32>, vector<64x32xf32>, vector<64x32xf32>, vector<64x32xf32> -> vector<64x128xf32>
    %c40 = arith.constant 40 : index
    %c0_90 = arith.constant 0 : index
    %266 = vector.load %arg5[%c40, %c0_90] : memref<328x32xf32, #tpu.memory_space<vmem>>, vector<128x32xf32>
    %cst_91 = arith.constant dense<0.000000e+00> : vector<64x32xf32>
    %267 = tpu.matmul %265, %266, %cst_91 {dimension_numbers = #tpu.dot_dimension_numbers<[1], [0], [0], [1], [0, 0, 1, 1], [], []>} : vector<64x128xf32>, vector<128x32xf32>, vector<64x32xf32> -> vector<64x32xf32>
    %c5 = arith.constant 5 : index
    %c0_92 = arith.constant 0 : index
    %268 = vector.load %arg6[%c5, %c0_92] : memref<24x32xf32, #tpu.memory_space<vmem>>, vector<1x32xf32>
    %269 = vector.broadcast %268 : vector<1x32xf32> to vector<64x32xf32>
    %270 = arith.addf %267, %269 : vector<64x32xf32>
    %c6 = arith.constant 6 : index
    %c0_93 = arith.constant 0 : index
    %271 = vector.load %arg6[%c6, %c0_93] : memref<24x32xf32, #tpu.memory_space<vmem>>, vector<1x32xf32>
    %c7 = arith.constant 7 : index
    %c0_94 = arith.constant 0 : index
    %272 = vector.load %arg6[%c7, %c0_94] : memref<24x32xf32, #tpu.memory_space<vmem>>, vector<1x32xf32>
    %c8_95 = arith.constant 8 : index
    %c0_96 = arith.constant 0 : index
    %273 = vector.load %arg6[%c8_95, %c0_96] : memref<24x32xf32, #tpu.memory_space<vmem>>, vector<1x32xf32>
    %cst_97 = arith.constant dense<0.000000e+00> : vector<2x32xf32>
    %274 = tpu.matmul %2, %270, %cst_97 {dimension_numbers = #tpu.dot_dimension_numbers<[1], [0], [0], [1], [0, 0, 1, 1], [], []>} : vector<2x64xf32>, vector<64x32xf32>, vector<2x32xf32> -> vector<2x32xf32>
    %275 = vector.broadcast %4 : vector<2x1xf32> to vector<2x32xf32>
    %276 = arith.mulf %274, %275 : vector<2x32xf32>
    %cst_98 = arith.constant dense<0.000000e+00> : vector<64x32xf32>
    %277 = tpu.matmul %3, %276, %cst_98 {dimension_numbers = #tpu.dot_dimension_numbers<[1], [0], [0], [1], [0, 0, 1, 1], [], []>} : vector<64x2xf32>, vector<2x32xf32>, vector<64x32xf32> -> vector<64x32xf32>
    %278 = vector.broadcast %273 : vector<1x32xf32> to vector<64x32xf32>
    %279 = arith.mulf %278, %277 : vector<64x32xf32>
    %280 = arith.subf %270, %279 : vector<64x32xf32>
    %281 = arith.mulf %280, %280 : vector<64x32xf32>
    %cst_99 = arith.constant dense<0.000000e+00> : vector<2x32xf32>
    %282 = tpu.matmul %2, %281, %cst_99 {dimension_numbers = #tpu.dot_dimension_numbers<[1], [0], [0], [1], [0, 0, 1, 1], [], []>} : vector<2x64xf32>, vector<64x32xf32>, vector<2x32xf32> -> vector<2x32xf32>
    %283 = vector.broadcast %4 : vector<2x1xf32> to vector<2x32xf32>
    %284 = arith.mulf %282, %283 : vector<2x32xf32>
    %cst_100 = arith.constant 9.99999974E-6 : f32
    %285 = vector.broadcast %cst_100 : f32 to vector<2x32xf32>
    %286 = arith.addf %284, %285 : vector<2x32xf32>
    %287 = math.rsqrt %286 : vector<2x32xf32>
    %288 = vector.broadcast %271 : vector<1x32xf32> to vector<64x32xf32>
    %289 = arith.mulf %288, %280 : vector<64x32xf32>
    %cst_101 = arith.constant dense<0.000000e+00> : vector<64x32xf32>
    %290 = tpu.matmul %3, %287, %cst_101 {dimension_numbers = #tpu.dot_dimension_numbers<[1], [0], [0], [1], [0, 0, 1, 1], [], []>} : vector<64x2xf32>, vector<2x32xf32>, vector<64x32xf32> -> vector<64x32xf32>
    %291 = arith.mulf %289, %290 : vector<64x32xf32>
    %292 = vector.broadcast %272 : vector<1x32xf32> to vector<64x32xf32>
    %293 = arith.addf %291, %292 : vector<64x32xf32>
    %cst_102 = arith.constant 0.000000e+00 : f32
    %294 = vector.broadcast %cst_102 : f32 to vector<64x32xf32>
    %295 = arith.maximumf %293, %294 : vector<64x32xf32>
    %296 = arith.truncf %295 : vector<64x32xf32> to vector<64x32xbf16>
    %cst_103 = arith.constant dense<0.000000e+00> : vector<64x32xf32>
    %297 = tpu.matmul %1, %296, %cst_103 {dimension_numbers = #tpu.dot_dimension_numbers<[1], [0], [0], [1], [0, 0, 1, 1], [], []>} : vector<64x64xbf16>, vector<64x32xbf16>, vector<64x32xf32> -> vector<64x32xf32>
    %298 = tpu.concatenate %297, %295 in 1 : vector<64x32xf32>, vector<64x32xf32> -> vector<64x64xf32>
    %c168 = arith.constant 168 : index
    %c0_104 = arith.constant 0 : index
    %299 = vector.load %arg5[%c168, %c0_104] : memref<328x32xf32, #tpu.memory_space<vmem>>, vector<64x32xf32>
    %cst_105 = arith.constant dense<0.000000e+00> : vector<64x32xf32>
    %300 = tpu.matmul %298, %299, %cst_105 {dimension_numbers = #tpu.dot_dimension_numbers<[1], [0], [0], [1], [0, 0, 1, 1], [], []>} : vector<64x64xf32>, vector<64x32xf32>, vector<64x32xf32> -> vector<64x32xf32>
    %c9 = arith.constant 9 : index
    %c0_106 = arith.constant 0 : index
    %301 = vector.load %arg6[%c9, %c0_106] : memref<24x32xf32, #tpu.memory_space<vmem>>, vector<1x32xf32>
    %302 = vector.broadcast %301 : vector<1x32xf32> to vector<64x32xf32>
    %303 = arith.addf %300, %302 : vector<64x32xf32>
    %cst_107 = arith.constant 0.000000e+00 : f32
    %304 = vector.broadcast %cst_107 : f32 to vector<64x32xf32>
    %305 = arith.maximumf %303, %304 : vector<64x32xf32>
    %cst_108 = arith.constant dense<0.000000e+00> : vector<2x32xf32>
    %306 = tpu.matmul %2, %305, %cst_108 {dimension_numbers = #tpu.dot_dimension_numbers<[1], [0], [0], [1], [0, 0, 1, 1], [], []>} : vector<2x64xf32>, vector<64x32xf32>, vector<2x32xf32> -> vector<2x32xf32>
    %307 = vector.broadcast %4 : vector<2x1xf32> to vector<2x32xf32>
    %308 = arith.mulf %306, %307 : vector<2x32xf32>
    %309 = vector.extract_strided_slice %3 {offsets = [0, 0], sizes = [64, 1], strides = [1, 1]} : vector<64x2xf32> to vector<64x1xf32>
    %cst_109 = arith.constant 0.000000e+00 : f32
    %310 = vector.broadcast %cst_109 : f32 to vector<64x1xf32>
    %311 = arith.cmpf ogt, %309, %310 : vector<64x1xf32>
    %cst_110 = arith.constant -1.000000e+30 : f32
    %312 = vector.shape_cast %311 : vector<64x1xi1> to vector<64x1xi1>
    %313 = vector.broadcast %312 : vector<64x1xi1> to vector<64x32xi1>
    %314 = vector.broadcast %cst_110 : f32 to vector<64x32xf32>
    %315 = arith.select %313, %305, %314 : vector<64x32xi1>, vector<64x32xf32>
    %cst_111 = arith.constant dense<0xFF800000> : vector<32xf32>
    %316 = vector.multi_reduction <maximumf>, %315, %cst_111 [0] : vector<64x32xf32> to vector<32xf32>
    %317 = vector.shape_cast %316 : vector<32xf32> to vector<1x32xf32>
    %318 = vector.extract_strided_slice %3 {offsets = [0, 1], sizes = [64, 1], strides = [1, 1]} : vector<64x2xf32> to vector<64x1xf32>
    %cst_112 = arith.constant 0.000000e+00 : f32
    %319 = vector.broadcast %cst_112 : f32 to vector<64x1xf32>
    %320 = arith.cmpf ogt, %318, %319 : vector<64x1xf32>
    %cst_113 = arith.constant -1.000000e+30 : f32
    %321 = vector.shape_cast %320 : vector<64x1xi1> to vector<64x1xi1>
    %322 = vector.broadcast %321 : vector<64x1xi1> to vector<64x32xi1>
    %323 = vector.broadcast %cst_113 : f32 to vector<64x32xf32>
    %324 = arith.select %322, %305, %323 : vector<64x32xi1>, vector<64x32xf32>
    %cst_114 = arith.constant dense<0xFF800000> : vector<32xf32>
    %325 = vector.multi_reduction <maximumf>, %324, %cst_114 [0] : vector<64x32xf32> to vector<32xf32>
    %326 = vector.shape_cast %325 : vector<32xf32> to vector<1x32xf32>
    %327 = tpu.concatenate %317, %326 in 0 : vector<1x32xf32>, vector<1x32xf32> -> vector<2x32xf32>
    %328 = tpu.concatenate %327, %308 in 1 : vector<2x32xf32>, vector<2x32xf32> -> vector<2x64xf32>
    %c232 = arith.constant 232 : index
    %c0_115 = arith.constant 0 : index
    %329 = vector.load %arg5[%c232, %c0_115] : memref<328x32xf32, #tpu.memory_space<vmem>>, vector<64x32xf32>
    %cst_116 = arith.constant dense<0.000000e+00> : vector<2x32xf32>
    %330 = tpu.matmul %328, %329, %cst_116 {dimension_numbers = #tpu.dot_dimension_numbers<[1], [0], [0], [1], [0, 0, 1, 1], [], []>} : vector<2x64xf32>, vector<64x32xf32>, vector<2x32xf32> -> vector<2x32xf32>
    %c10 = arith.constant 10 : index
    %c0_117 = arith.constant 0 : index
    %331 = vector.load %arg6[%c10, %c0_117] : memref<24x32xf32, #tpu.memory_space<vmem>>, vector<1x32xf32>
    %332 = vector.broadcast %331 : vector<1x32xf32> to vector<2x32xf32>
    %333 = arith.addf %330, %332 : vector<2x32xf32>
    %cst_118 = arith.constant 5.000000e-01 : f32
    %334 = vector.broadcast %cst_118 : f32 to vector<2x32xf32>
    %335 = arith.mulf %334, %333 : vector<2x32xf32>
    %cst_119 = arith.constant 0.707106769 : f32
    %336 = vector.broadcast %cst_119 : f32 to vector<2x32xf32>
    %337 = arith.mulf %333, %336 : vector<2x32xf32>
    %cst_120 = arith.constant 0.000000e+00 : f32
    %338 = vector.broadcast %cst_120 : f32 to vector<2x32xf32>
    %339 = arith.cmpf oge, %337, %338 : vector<2x32xf32>
    %cst_121 = arith.constant 1.000000e+00 : f32
    %cst_122 = arith.constant -1.000000e+00 : f32
    %340 = vector.broadcast %cst_121 : f32 to vector<2x32xf32>
    %341 = vector.broadcast %cst_122 : f32 to vector<2x32xf32>
    %342 = arith.select %339, %340, %341 : vector<2x32xi1>, vector<2x32xf32>
    %343 = math.absf %337 : vector<2x32xf32>
    %cst_123 = arith.constant 0.327591091 : f32
    %344 = vector.broadcast %cst_123 : f32 to vector<2x32xf32>
    %345 = arith.mulf %344, %343 : vector<2x32xf32>
    %cst_124 = arith.constant 1.000000e+00 : f32
    %346 = vector.broadcast %cst_124 : f32 to vector<2x32xf32>
    %347 = arith.addf %346, %345 : vector<2x32xf32>
    %cst_125 = arith.constant 1.000000e+00 : f32
    %348 = vector.broadcast %cst_125 : f32 to vector<2x32xf32>
    %349 = arith.divf %348, %347 : vector<2x32xf32>
    %cst_126 = arith.constant 1.06140542 : f32
    %350 = vector.broadcast %cst_126 : f32 to vector<2x32xf32>
    %351 = arith.mulf %350, %349 : vector<2x32xf32>
    %cst_127 = arith.constant -1.45315206 : f32
    %352 = vector.broadcast %cst_127 : f32 to vector<2x32xf32>
    %353 = arith.addf %351, %352 : vector<2x32xf32>
    %354 = arith.mulf %353, %349 : vector<2x32xf32>
    %cst_128 = arith.constant 1.42141378 : f32
    %355 = vector.broadcast %cst_128 : f32 to vector<2x32xf32>
    %356 = arith.addf %354, %355 : vector<2x32xf32>
    %357 = arith.mulf %356, %349 : vector<2x32xf32>
    %cst_129 = arith.constant -0.284496725 : f32
    %358 = vector.broadcast %cst_129 : f32 to vector<2x32xf32>
    %359 = arith.addf %357, %358 : vector<2x32xf32>
    %360 = arith.mulf %359, %349 : vector<2x32xf32>
    %cst_130 = arith.constant 0.254829586 : f32
    %361 = vector.broadcast %cst_130 : f32 to vector<2x32xf32>
    %362 = arith.addf %360, %361 : vector<2x32xf32>
    %363 = arith.mulf %362, %349 : vector<2x32xf32>
    %cst_131 = arith.constant 0.000000e+00 : f32
    %364 = vector.broadcast %cst_131 : f32 to vector<2x32xf32>
    %365 = arith.subf %364, %343 : vector<2x32xf32>
    %366 = arith.mulf %365, %343 : vector<2x32xf32>
    %367 = math.exp %366 : vector<2x32xf32>
    %368 = arith.mulf %363, %367 : vector<2x32xf32>
    %cst_132 = arith.constant 1.000000e+00 : f32
    %369 = vector.broadcast %cst_132 : f32 to vector<2x32xf32>
    %370 = arith.subf %369, %368 : vector<2x32xf32>
    %371 = arith.mulf %342, %370 : vector<2x32xf32>
    %cst_133 = arith.constant 1.000000e+00 : f32
    %372 = vector.broadcast %cst_133 : f32 to vector<2x32xf32>
    %373 = arith.addf %372, %371 : vector<2x32xf32>
    %374 = arith.mulf %335, %373 : vector<2x32xf32>
    %c296 = arith.constant 296 : index
    %c0_134 = arith.constant 0 : index
    %375 = vector.load %arg5[%c296, %c0_134] : memref<328x32xf32, #tpu.memory_space<vmem>>, vector<32x32xf32>
    %cst_135 = arith.constant dense<0.000000e+00> : vector<2x32xf32>
    %376 = tpu.matmul %374, %375, %cst_135 {dimension_numbers = #tpu.dot_dimension_numbers<[1], [0], [0], [1], [0, 0, 1, 1], [], []>} : vector<2x32xf32>, vector<32x32xf32>, vector<2x32xf32> -> vector<2x32xf32>
    %c11 = arith.constant 11 : index
    %c0_136 = arith.constant 0 : index
    %377 = vector.load %arg6[%c11, %c0_136] : memref<24x32xf32, #tpu.memory_space<vmem>>, vector<1x32xf32>
    %378 = vector.broadcast %377 : vector<1x32xf32> to vector<2x32xf32>
    %379 = arith.addf %376, %378 : vector<2x32xf32>
    %380 = vector.extract_strided_slice %379 {offsets = [0, 0], sizes = [2, 2], strides = [1, 1]} : vector<2x32xf32> to vector<2x2xf32>
    %cst_137 = arith.constant dense<0xFF800000> : vector<2xf32>
    %381 = vector.multi_reduction <maximumf>, %380, %cst_137 [1] : vector<2x2xf32> to vector<2xf32>
    %382 = vector.shape_cast %381 : vector<2xf32> to vector<2x1xf32>
    %383 = vector.broadcast %382 : vector<2x1xf32> to vector<2x2xf32>
    %384 = arith.subf %380, %383 : vector<2x2xf32>
    %385 = math.exp %384 : vector<2x2xf32>
    %cst_138 = arith.constant dense<0.000000e+00> : vector<2xf32>
    %386 = vector.multi_reduction <add>, %385, %cst_138 [1] : vector<2x2xf32> to vector<2xf32>
    %387 = vector.shape_cast %386 : vector<2xf32> to vector<2x1xf32>
    %388 = math.log %387 : vector<2x1xf32>
    %389 = arith.addf %382, %388 : vector<2x1xf32>
    %390 = vector.broadcast %389 : vector<2x1xf32> to vector<2x2xf32>
    %391 = arith.subf %380, %390 : vector<2x2xf32>
    %c0_139 = arith.constant 0 : index
    %c0_140 = arith.constant 0 : index
    %392 = vector.load %arg7[%c0_139, %c0_140] : memref<2x2xf32, #tpu.memory_space<vmem>>, vector<2x2xf32>
    tpu.vector_store %arg7[%c0_139, %c0_140], %391 {strides = array<i32>} : memref<2x2xf32, #tpu.memory_space<vmem>>, vector<2x2xf32>,
    return
  }
}

</mosaic_0001>

<llo_original>
// kernel: tpu_custom_call.1
$region0: #{tpu_custom_call.1}
  #allocation0 [shape = 'u32[]', space=smem, size = 0x4, offset = 0x4, fixed_abs, tag = 'smem constant byte address 0x4 - core index']
  #allocation1 [shape = 'u32[72,128]{1,0:T(1,128)}', space=vmem, size = 0x9000, scoped, tag = 'internal scratch']
  %s0 = inlined_call_operand.vmem [shape: f32[64,8], index: 0, kind: input, shape index: {}]
  %s1 = inlined_call_operand.vmem [shape: bf16[64,64], index: 1, kind: input, shape index: {}]
  %s2 = inlined_call_operand.vmem [shape: f32[2,64], index: 2, kind: input, shape index: {}]
  %s3 = inlined_call_operand.vmem [shape: f32[64,2], index: 3, kind: input, shape index: {}]
  %s4 = inlined_call_operand.vmem [shape: f32[2,1], index: 4, kind: input, shape index: {}]
  %s5 = inlined_call_operand.vmem [shape: f32[328,32], index: 5, kind: input, shape index: {}]
  %s6 = inlined_call_operand.vmem [shape: f32[24,32], index: 6, kind: input, shape index: {}]
  %s7 = inlined_call_operand.hbm [shape: f32[2,2], index: 7, kind: output, shape index: {}]
  %s8 = sld [smem:[#allocation0]]
  $region38: #{tpu_custom_call.1} parent=0
    _
  %s10 = ssub.s32 1, %s8
  %s11 = scalar_select 0, %s10, %s8
  $region1: #{tpu_custom_call.1} parent=0
    #allocation2 [shape = 'u8[1024]{0}', space=vmem, size = 0x400, scoped, tag = 'output window, operand 0, single buffered']
    #allocation3 [shape = 's32[1]{0}', space=sflag, size = 0x4, scoped, tag = 'scoped memory for tpu_custom_call.1']
    %12 = vsyncpa [#allocation3], 0
    // Predicated region
    $region2: #{tpu_custom_call.1} parent=1 // pred_check
      _
    $region3: #{tpu_custom_call.1} parent=1 // pred_check_branch
      %14 = sbr.rel (0) target = $region5
    $region4: #{tpu_custom_call.1} parent=1 // pred_region
      _
    $region5: #{tpu_custom_call.1} parent=1 // pred_fallthru
      _
    // Predicated region
    $region6: #{tpu_custom_call.1} parent=1 // pred_check
      _
    $region7: #{tpu_custom_call.1} parent=1 // pred_check_branch
      %16 = sbr.rel (0) target = $region9
    $region8: #{tpu_custom_call.1} parent=1 // pred_region
      _
    $region9: #{tpu_custom_call.1} parent=1 // pred_fallthru
      _
    // Predicated region
    $region10: #{tpu_custom_call.1} parent=1 // pred_check
      _
    $region11: #{tpu_custom_call.1} parent=1 // pred_check_branch
      %18 = sbr.rel (0) target = $region13
    $region12: #{tpu_custom_call.1} parent=1 // pred_region
      _
    $region13: #{tpu_custom_call.1} parent=1 // pred_fallthru
      _
    // Predicated region
    $region14: #{tpu_custom_call.1} parent=1 // pred_check
      _
    $region15: #{tpu_custom_call.1} parent=1 // pred_check_branch
      %20 = sbr.rel (0) target = $region17
    $region16: #{tpu_custom_call.1} parent=1 // pred_region
      _
    $region17: #{tpu_custom_call.1} parent=1 // pred_fallthru
      _
    // Predicated region
    $region18: #{tpu_custom_call.1} parent=1 // pred_check
      _
    $region19: #{tpu_custom_call.1} parent=1 // pred_check_branch
      %22 = sbr.rel (0) target = $region21
    $region20: #{tpu_custom_call.1} parent=1 // pred_region
      _
    $region21: #{tpu_custom_call.1} parent=1 // pred_fallthru
      _
    // Predicated region
    $region22: #{tpu_custom_call.1} parent=1 // pred_check
      _
    $region23: #{tpu_custom_call.1} parent=1 // pred_check_branch
      %24 = sbr.rel (0) target = $region25
    $region24: #{tpu_custom_call.1} parent=1 // pred_region
      _
    $region25: #{tpu_custom_call.1} parent=1 // pred_fallthru
      _
    // Predicated region
    $region26: #{tpu_custom_call.1} parent=1 // pred_check
      _
    $region27: #{tpu_custom_call.1} parent=1 // pred_check_branch
      %26 = sbr.rel (0) target = $region29
    $region28: #{tpu_custom_call.1} parent=1 // pred_region
      _
    $region29: #{tpu_custom_call.1} parent=1 // pred_fallthru
      _
    %v29 = vld [vmem:[%s0] sm:$0xff]
    %v30 = vld [vmem:[%s0 + $0x8] sm:$0xff]
    %v31 = vld [vmem:[%s0 + $0x10] sm:$0xff]
    %v32 = vld [vmem:[%s0 + $0x18] sm:$0xff]
    %v33 = vld [vmem:[%s0 + $0x20] sm:$0xff]
    %v34 = vld [vmem:[%s0 + $0x28] sm:$0xff]
    %v35 = vld [vmem:[%s0 + $0x30] sm:$0xff]
    %v36 = vld [vmem:[%s0 + $0x38] sm:$0xff]
    %v37 = vld [vmem:[%s1] sm:$0xf]
    %v38 = vld [vmem:[%s1 + $0x4] sm:$0xf]
    %v39 = vld [vmem:[%s1 + $0x8] sm:$0xf]
    %v40 = vld [vmem:[%s1 + $0xc] sm:$0xf]
    %v41 = vld [vmem:[%s1 + $0x10] sm:$0xf]
    %v42 = vld [vmem:[%s1 + $0x14] sm:$0xf]
    %v43 = vld [vmem:[%s1 + $0x18] sm:$0xf]
    %v44 = vld [vmem:[%s1 + $0x1c] sm:$0xf]
    %v45 = vld [vmem:[%s2] sm:$0x3]
    %v46 = vld [vmem:[%s3] sm:$0xff]
    %v47 = vld [vmem:[%s3 + $0x8] sm:$0xff]
    %v48 = vld [vmem:[%s3 + $0x10] sm:$0xff]
    %v49 = vld [vmem:[%s3 + $0x18] sm:$0xff]
    %v50 = vld [vmem:[%s3 + $0x20] sm:$0xff]
    %v51 = vld [vmem:[%s3 + $0x28] sm:$0xff]
    %v52 = vld [vmem:[%s3 + $0x30] sm:$0xff]
    %v53 = vld [vmem:[%s3 + $0x38] sm:$0xff]
    %v54 = vld [vmem:[%s4] sm:$0x3]
    %v55 = vld [vmem:[%s5] sm:$0xff]
    %v56 = vld [vmem:[%s6] sm:$0x1]
    %v57 = vperm.slane %v56, 0
    %vm58 = vcmask 64512
    %v60 = vsel %vm58, %v29, 0
    %v63 = vsel %vm58, %v30, 0
    %v66 = vsel %vm58, %v31, 0
    %v69 = vsel %vm58, %v32, 0
    %v72 = vsel %vm58, %v33, 0
    %v75 = vsel %vm58, %v34, 0
    %v78 = vsel %vm58, %v35, 0
    %v81 = vsel %vm58, %v36, 0
    %83 = vmatpush.msra.mxu0 0.0
    %84 = vmatpush.msra.mxu0 0.0
    %85 = vmatpush.msra.mxu0 0.0
    %86 = vmatpush.msra.mxu0 0.0
    %87 = vmatpush.msra.mxu0 0.0
    %88 = vmatpush.msra.mxu0 0.0
    %89 = vmatpush.msra.mxu0 0.0
    %90 = vmatpush.msra.mxu0 0.0
    %91 = vmatpush.msra.mxu0 0.0
    %92 = vmatpush.msra.mxu0 0.0
    %93 = vmatpush.msra.mxu0 0.0
    %94 = vmatpush.msra.mxu0 0.0
    %95 = vmatpush.msra.mxu0 0.0
    %96 = vmatpush.msra.mxu0 0.0
    %97 = vmatpush.msra.mxu0 0.0
    %98 = vmatpush.msra.mxu0 %v55
    %99 = vmatmul.f32.gmra.mxu0 %v60
    %v100 = vpop.f32.mrf.mxu0
    %v101 = vadd.f32 %v57, %v100
    %102 = vmatmul.f32.gmra.mxu0 %v63
    %v103 = vpop.f32.mrf.mxu0
    %v104 = vadd.f32 %v57, %v103
    %105 = vmatmul.f32.gmra.mxu0 %v66
    %v106 = vpop.f32.mrf.mxu0
    %v107 = vadd.f32 %v57, %v106
    %108 = vmatmul.f32.gmra.mxu0 %v69
    %v109 = vpop.f32.mrf.mxu0
    %v110 = vadd.f32 %v57, %v109
    %111 = vmatmul.f32.gmra.mxu0 %v72
    %v112 = vpop.f32.mrf.mxu0
    %v113 = vadd.f32 %v57, %v112
    %114 = vmatmul.f32.gmra.mxu0 %v75
    %v115 = vpop.f32.mrf.mxu0
    %v116 = vadd.f32 %v57, %v115
    %117 = vmatmul.f32.gmra.mxu0 %v78
    %v118 = vpop.f32.mrf.mxu0
    %v119 = vadd.f32 %v57, %v118
    %120 = vmatmul.f32.gmra.mxu0 %v81
    %v121 = vpop.f32.mrf.mxu0
    %v122 = vadd.f32 %v57, %v121
    %123 = vdwg.mxu0
    %v124 = vmul.f32 %v101, 0.5
    %v125 = vmul.f32 %v104, 0.5
    %v126 = vmul.f32 %v107, 0.5
    %v127 = vmul.f32 %v110, 0.5
    %v128 = vmul.f32 %v113, 0.5
    %v129 = vmul.f32 %v116, 0.5
    %v130 = vmul.f32 %v119, 0.5
    %v131 = vmul.f32 %v122, 0.5
    %v132 = vmul.f32 %v101, 0.70710677
    %v133 = vmul.f32 %v104, 0.70710677
    %v134 = vmul.f32 %v107, 0.70710677
    %v135 = vmul.f32 %v110, 0.70710677
    %v136 = vmul.f32 %v113, 0.70710677
    %v137 = vmul.f32 %v116, 0.70710677
    %v138 = vmul.f32 %v119, 0.70710677
    %v139 = vmul.f32 %v122, 0.70710677
    %vm140 = vcmp.ge.f32.partialorder %v132, 0.0
    %vm141 = vcmp.ge.f32.partialorder %v133, 0.0
    %vm142 = vcmp.ge.f32.partialorder %v134, 0.0
    %vm143 = vcmp.ge.f32.partialorder %v135, 0.0
    %vm144 = vcmp.ge.f32.partialorder %v136, 0.0
    %vm145 = vcmp.ge.f32.partialorder %v137, 0.0
    %vm146 = vcmp.ge.f32.partialorder %v138, 0.0
    %vm147 = vcmp.ge.f32.partialorder %v139, 0.0
    %v148 = vsel %vm140, 1.0, -1.0
    %v149 = vsel %vm141, 1.0, -1.0
    %v150 = vsel %vm142, 1.0, -1.0
    %v151 = vsel %vm143, 1.0, -1.0
    %v152 = vsel %vm144, 1.0, -1.0
    %v153 = vsel %vm145, 1.0, -1.0
    %v154 = vsel %vm146, 1.0, -1.0
    %v155 = vsel %vm147, 1.0, -1.0
    %v156 = vand.u32 2147483647, %v132
    %v157 = vand.u32 2147483647, %v133
    %v158 = vand.u32 2147483647, %v134
    %v159 = vand.u32 2147483647, %v135
    %v160 = vand.u32 2147483647, %v136
    %v161 = vand.u32 2147483647, %v137
    %v162 = vand.u32 2147483647, %v138
    %v163 = vand.u32 2147483647, %v139
    %v164 = vmul.f32 %v156, 0.3275911
    %v165 = vmul.f32 %v157, 0.3275911
    %v166 = vmul.f32 %v158, 0.3275911
    %v167 = vmul.f32 %v159, 0.3275911
    %v168 = vmul.f32 %v160, 0.3275911
    %v169 = vmul.f32 %v161, 0.3275911
    %v170 = vmul.f32 %v162, 0.3275911
    %v171 = vmul.f32 %v163, 0.3275911
    %v172 = vadd.f32 %v164, 1.0
    %v173 = vadd.f32 %v165, 1.0
    %v174 = vadd.f32 %v166, 1.0
    %v175 = vadd.f32 %v167, 1.0
    %v176 = vadd.f32 %v168, 1.0
    %v177 = vadd.f32 %v169, 1.0
    %v178 = vadd.f32 %v170, 1.0
    %v179 = vadd.f32 %v171, 1.0
    %v180 = vrcp.pop %v172
    %v181 = vmul.f32 %v172, %v180
    %v182 = vsub.f32 1.0, %v181
    %v183 = vmul.f32 %v180, %v182
    %v184 = vadd.f32 %v180, %v183
    %vm185 = vweird.f32 %v172
    %vm186 = vweird.f32 %v180
    %vm187 = vmor %vm185, %vm186
    %v188 = vsel %vm187, %v180, %v184
    %v189 = vand.u32 2147483647, %v172
    %vm190 = vcmp.eq.f32.partialorder %v189, 8.507059e+37
    %v191 = vand.u32 %v172, 2147483648
    %v192 = vor.u32 1.1754944e-38, %v191
    %v193 = vsel %vm190, %v192, %v188
    %v194 = vmul.f32 1.0, %v193
    %v195 = vrcp.pop %v173
    %v196 = vmul.f32 %v173, %v195
    %v197 = vsub.f32 1.0, %v196
    %v198 = vmul.f32 %v195, %v197
    %v199 = vadd.f32 %v195, %v198
    %vm200 = vweird.f32 %v173
    %vm201 = vweird.f32 %v195
    %vm202 = vmor %vm200, %vm201
    %v203 = vsel %vm202, %v195, %v199
    %v204 = vand.u32 2147483647, %v173
    %vm205 = vcmp.eq.f32.partialorder %v204, 8.507059e+37
    %v206 = vand.u32 %v173, 2147483648
    %v207 = vor.u32 1.1754944e-38, %v206
    %v208 = vsel %vm205, %v207, %v203
    %v209 = vmul.f32 1.0, %v208
    %v210 = vrcp.pop %v174
    %v211 = vmul.f32 %v174, %v210
    %v212 = vsub.f32 1.0, %v211
    %v213 = vmul.f32 %v210, %v212
    %v214 = vadd.f32 %v210, %v213
    %vm215 = vweird.f32 %v174
    %vm216 = vweird.f32 %v210
    %vm217 = vmor %vm215, %vm216
    %v218 = vsel %vm217, %v210, %v214
    %v219 = vand.u32 2147483647, %v174
    %vm220 = vcmp.eq.f32.partialorder %v219, 8.507059e+37
    %v221 = vand.u32 %v174, 2147483648
    %v222 = vor.u32 1.1754944e-38, %v221
    %v223 = vsel %vm220, %v222, %v218
    %v224 = vmul.f32 1.0, %v223
    %v225 = vrcp.pop %v175
    %v226 = vmul.f32 %v175, %v225
    %v227 = vsub.f32 1.0, %v226
    %v228 = vmul.f32 %v225, %v227
    %v229 = vadd.f32 %v225, %v228
    %vm230 = vweird.f32 %v175
    %vm231 = vweird.f32 %v225
    %vm232 = vmor %vm230, %vm231
    %v233 = vsel %vm232, %v225, %v229
    %v234 = vand.u32 2147483647, %v175
    %vm235 = vcmp.eq.f32.partialorder %v234, 8.507059e+37
    %v236 = vand.u32 %v175, 2147483648
    %v237 = vor.u32 1.1754944e-38, %v236
    %v238 = vsel %vm235, %v237, %v233
    %v239 = vmul.f32 1.0, %v238
    %v240 = vrcp.pop %v176
    %v241 = vmul.f32 %v176, %v240
    %v242 = vsub.f32 1.0, %v241
    %v243 = vmul.f32 %v240, %v242
    %v244 = vadd.f32 %v240, %v243
    %vm245 = vweird.f32 %v176
    %vm246 = vweird.f32 %v240
    %vm247 = vmor %vm245, %vm246
    %v248 = vsel %vm247, %v240, %v244
    %v249 = vand.u32 2147483647, %v176
    %vm250 = vcmp.eq.f32.partialorder %v249, 8.507059e+37
    %v251 = vand.u32 %v176, 2147483648
    %v252 = vor.u32 1.1754944e-38, %v251
    %v253 = vsel %vm250, %v252, %v248
    %v254 = vmul.f32 1.0, %v253
    %v255 = vrcp.pop %v177
    %v256 = vmul.f32 %v177, %v255
    %v257 = vsub.f32 1.0, %v256
    %v258 = vmul.f32 %v255, %v257
    %v259 = vadd.f32 %v255, %v258
    %vm260 = vweird.f32 %v177
    %vm261 = vweird.f32 %v255
    %vm262 = vmor %vm260, %vm261
    %v263 = vsel %vm262, %v255, %v259
    %v264 = vand.u32 2147483647, %v177
    %vm265 = vcmp.eq.f32.partialorder %v264, 8.507059e+37
    %v266 = vand.u32 %v177, 2147483648
    %v267 = vor.u32 1.1754944e-38, %v266
    %v268 = vsel %vm265, %v267, %v263
    %v269 = vmul.f32 1.0, %v268
    %v270 = vrcp.pop %v178
    %v271 = vmul.f32 %v178, %v270
    %v272 = vsub.f32 1.0, %v271
    %v273 = vmul.f32 %v270, %v272
    %v274 = vadd.f32 %v270, %v273
    %vm275 = vweird.f32 %v178
    %vm276 = vweird.f32 %v270
    %vm277 = vmor %vm275, %vm276
    %v278 = vsel %vm277, %v270, %v274
    %v279 = vand.u32 2147483647, %v178
    %vm280 = vcmp.eq.f32.partialorder %v279, 8.507059e+37
    %v281 = vand.u32 %v178, 2147483648
    %v282 = vor.u32 1.1754944e-38, %v281
    %v283 = vsel %vm280, %v282, %v278
    %v284 = vmul.f32 1.0, %v283
    %v285 = vrcp.pop %v179
    %v286 = vmul.f32 %v179, %v285
    %v287 = vsub.f32 1.0, %v286
    %v288 = vmul.f32 %v285, %v287
    %v289 = vadd.f32 %v285, %v288
    %vm290 = vweird.f32 %v179
    %vm291 = vweird.f32 %v285
    %vm292 = vmor %vm290, %vm291
    %v293 = vsel %vm292, %v285, %v289
    %v294 = vand.u32 2147483647, %v179
    %vm295 = vcmp.eq.f32.partialorder %v294, 8.507059e+37
    %v296 = vand.u32 %v179, 2147483648
    %v297 = vor.u32 1.1754944e-38, %v296
    %v298 = vsel %vm295, %v297, %v293
    %v299 = vmul.f32 1.0, %v298
    %v300 = vmul.f32 %v194, 1.0614054
    %v301 = vmul.f32 %v209, 1.0614054
    %v302 = vmul.f32 %v224, 1.0614054
    %v303 = vmul.f32 %v239, 1.0614054
    %v304 = vmul.f32 %v254, 1.0614054
    %v305 = vmul.f32 %v269, 1.0614054
    %v306 = vmul.f32 %v284, 1.0614054
    %v307 = vmul.f32 %v299, 1.0614054
    %v308 = vadd.f32 %v300, -1.4531521
    %v309 = vadd.f32 %v301, -1.4531521
    %v310 = vadd.f32 %v302, -1.4531521
    %v311 = vadd.f32 %v303, -1.4531521
    %v312 = vadd.f32 %v304, -1.4531521
    %v313 = vadd.f32 %v305, -1.4531521
    %v314 = vadd.f32 %v306, -1.4531521
    %v315 = vadd.f32 %v307, -1.4531521
    %v316 = vmul.f32 %v308, %v194
    %v317 = vmul.f32 %v309, %v209
    %v318 = vmul.f32 %v310, %v224
    %v319 = vmul.f32 %v311, %v239
    %v320 = vmul.f32 %v312, %v254
    %v321 = vmul.f32 %v313, %v269
    %v322 = vmul.f32 %v314, %v284
    %v323 = vmul.f32 %v315, %v299
    %v324 = vadd.f32 %v316, 1.4214138
    %v325 = vadd.f32 %v317, 1.4214138
    %v326 = vadd.f32 %v318, 1.4214138
    %v327 = vadd.f32 %v319, 1.4214138
    %v328 = vadd.f32 %v320, 1.4214138
    %v329 = vadd.f32 %v321, 1.4214138
    %v330 = vadd.f32 %v322, 1.4214138
    %v331 = vadd.f32 %v323, 1.4214138
    %v332 = vmul.f32 %v324, %v194
    %v333 = vmul.f32 %v325, %v209
    %v334 = vmul.f32 %v326, %v224
    %v335 = vmul.f32 %v327, %v239
    %v336 = vmul.f32 %v328, %v254
    %v337 = vmul.f32 %v329, %v269
    %v338 = vmul.f32 %v330, %v284
    %v339 = vmul.f32 %v331, %v299
    %v340 = vadd.f32 %v332, -0.28449672
    %v341 = vadd.f32 %v333, -0.28449672
    %v342 = vadd.f32 %v334, -0.28449672
    %v343 = vadd.f32 %v335, -0.28449672
    %v344 = vadd.f32 %v336, -0.28449672
    %v345 = vadd.f32 %v337, -0.28449672
    %v346 = vadd.f32 %v338, -0.28449672
    %v347 = vadd.f32 %v339, -0.28449672
    %v348 = vmul.f32 %v340, %v194
    %v349 = vmul.f32 %v341, %v209
    %v350 = vmul.f32 %v342, %v224
    %v351 = vmul.f32 %v343, %v239
    %v352 = vmul.f32 %v344, %v254
    %v353 = vmul.f32 %v345, %v269
    %v354 = vmul.f32 %v346, %v284
    %v355 = vmul.f32 %v347, %v299
    %v356 = vadd.f32 %v348, 0.2548296
    %v357 = vadd.f32 %v349, 0.2548296
    %v358 = vadd.f32 %v350, 0.2548296
    %v359 = vadd.f32 %v351, 0.2548296
    %v360 = vadd.f32 %v352, 0.2548296
    %v361 = vadd.f32 %v353, 0.2548296
    %v362 = vadd.f32 %v354, 0.2548296
    %v363 = vadd.f32 %v355, 0.2548296
    %v364 = vmul.f32 %v356, %v194
    %v365 = vmul.f32 %v357, %v209
    %v366 = vmul.f32 %v358, %v224
    %v367 = vmul.f32 %v359, %v239
    %v368 = vmul.f32 %v360, %v254
    %v369 = vmul.f32 %v361, %v269
    %v370 = vmul.f32 %v362, %v284
    %v371 = vmul.f32 %v363, %v299
    %v372 = vsub.f32 0.0, %v156
    %v373 = vsub.f32 0.0, %v157
    %v374 = vsub.f32 0.0, %v158
    %v375 = vsub.f32 0.0, %v159
    %v376 = vsub.f32 0.0, %v160
    %v377 = vsub.f32 0.0, %v161
    %v378 = vsub.f32 0.0, %v162
    %v379 = vsub.f32 0.0, %v163
    %v380 = vmul.f32 %v372, %v156
    %v381 = vmul.f32 %v373, %v157
    %v382 = vmul.f32 %v374, %v158
    %v383 = vmul.f32 %v375, %v159
    %v384 = vmul.f32 %v376, %v160
    %v385 = vmul.f32 %v377, %v161
    %v386 = vmul.f32 %v378, %v162
    %v387 = vmul.f32 %v379, %v163
    %v388 = vmul.f32 %v380, 1.442695
    %v389 = vpow.pop %v388
    %v390 = vmul.f32 %v381, 1.442695
    %v391 = vpow.pop %v390
    %v392 = vmul.f32 %v382, 1.442695
    %v393 = vpow.pop %v392
    %v394 = vmul.f32 %v383, 1.442695
    %v395 = vpow.pop %v394
    %v396 = vmul.f32 %v384, 1.442695
    %v397 = vpow.pop %v396
    %v398 = vmul.f32 %v385, 1.442695
    %v399 = vpow.pop %v398
    %v400 = vmul.f32 %v386, 1.442695
    %v401 = vpow.pop %v400
    %v402 = vmul.f32 %v387, 1.442695
    %v403 = vpow.pop %v402
    %v404 = vmul.f32 %v364, %v389
    %v405 = vmul.f32 %v365, %v391
    %v406 = vmul.f32 %v366, %v393
    %v407 = vmul.f32 %v367, %v395
    %v408 = vmul.f32 %v368, %v397
    %v409 = vmul.f32 %v369, %v399
    %v410 = vmul.f32 %v370, %v401
    %v411 = vmul.f32 %v371, %v403
    %v412 = vsub.f32 1.0, %v404
    %v413 = vsub.f32 1.0, %v405
    %v414 = vsub.f32 1.0, %v406
    %v415 = vsub.f32 1.0, %v407
    %v416 = vsub.f32 1.0, %v408
    %v417 = vsub.f32 1.0, %v409
    %v418 = vsub.f32 1.0, %v410
    %v419 = vsub.f32 1.0, %v411
    %v420 = vmul.f32 %v148, %v412
    %v421 = vmul.f32 %v149, %v413
    %v422 = vmul.f32 %v150, %v414
    %v423 = vmul.f32 %v151, %v415
    %v424 = vmul.f32 %v152, %v416
    %v425 = vmul.f32 %v153, %v417
    %v426 = vmul.f32 %v154, %v418
    %v427 = vmul.f32 %v155, %v419
    %v428 = vadd.f32 %v420, 1.0
    %v429 = vadd.f32 %v421, 1.0
    %v430 = vadd.f32 %v422, 1.0
    %v431 = vadd.f32 %v423, 1.0
    %v432 = vadd.f32 %v424, 1.0
    %v433 = vadd.f32 %v425, 1.0
    %v434 = vadd.f32 %v426, 1.0
    %v435 = vadd.f32 %v427, 1.0
    %v436 = vmul.f32 %v124, %v428
    %v437 = vmul.f32 %v125, %v429
    %v438 = vmul.f32 %v126, %v430
    %v439 = vmul.f32 %v127, %v431
    %v440 = vmul.f32 %v128, %v432
    %v441 = vmul.f32 %v129, %v433
    %v442 = vmul.f32 %v130, %v434
    %v443 = vmul.f32 %v131, %v435
    %v444 = vlaneseq
    %v445 = vshrl.u32 %v444, 7
    %v446 = vadd.s32 %v445, 8
    %v447 = vadd.s32 %v445, 16
    %v448 = vadd.s32 %v445, 24
    %v449 = vadd.s32 %v445, 32
    %v450 = vadd.s32 %v445, 40
    %v451 = vadd.s32 %v445, 48
    %v452 = vadd.s32 %v445, 56
    %v453 = vlaneseq
    %v454 = vand.u32 %v453, 127
    %v455 = vunpack.c.l.bf16 %v37
    %v456 = vunpack.c.l.bf16 %v38
    %v457 = vunpack.c.l.bf16 %v39
    %v458 = vunpack.c.l.bf16 %v40
    %v459 = vunpack.c.l.bf16 %v41
    %v460 = vunpack.c.l.bf16 %v42
    %v461 = vunpack.c.l.bf16 %v43
    %v462 = vunpack.c.l.bf16 %v44
    %vm463 = vcmp.gt.f32.partialorder %v455, 0.0
    %vm464 = vcmp.gt.f32.partialorder %v456, 0.0
    %vm465 = vcmp.gt.f32.partialorder %v457, 0.0
    %vm466 = vcmp.gt.f32.partialorder %v458, 0.0
    %vm467 = vcmp.gt.f32.partialorder %v459, 0.0
    %vm468 = vcmp.gt.f32.partialorder %v460, 0.0
    %vm469 = vcmp.gt.f32.partialorder %v461, 0.0
    %vm470 = vcmp.gt.f32.partialorder %v462, 0.0
    %vm471 = vcmp.eq.s32.totalorder %v445, %v454
    %vm472 = vcmp.eq.s32.totalorder %v446, %v454
    %vm473 = vcmp.eq.s32.totalorder %v447, %v454
    %vm474 = vcmp.eq.s32.totalorder %v448, %v454
    %vm475 = vcmp.eq.s32.totalorder %v449, %v454
    %vm476 = vcmp.eq.s32.totalorder %v450, %v454
    %vm477 = vcmp.eq.s32.totalorder %v451, %v454
    %vm478 = vcmp.eq.s32.totalorder %v452, %v454
    %vm479 = vmor %vm463, %vm471
    %vm480 = vmor %vm464, %vm472
    %vm481 = vmor %vm465, %vm473
    %vm482 = vmor %vm466, %vm474
    %vm483 = vmor %vm467, %vm475
    %vm484 = vmor %vm468, %vm476
    %vm485 = vmor %vm469, %vm477
    %vm486 = vmor %vm470, %vm478
    %v487 = vld [vmem:[%s5 + $0x8] sm:$0xff]
    %v488 = vld [vmem:[%s5 + $0x10] sm:$0xff]
    %v489 = vld [vmem:[%s5 + $0x18] sm:$0xff]
    %v490 = vld [vmem:[%s5 + $0x20] sm:$0xff]
    %vm491 = vcmask 261120
    %v493 = vsel %vm491, %v436, 0
    %v496 = vsel %vm491, %v437, 0
    %v499 = vsel %vm491, %v438, 0
    %v502 = vsel %vm491, %v439, 0
    %v505 = vsel %vm491, %v440, 0
    %v508 = vsel %vm491, %v441, 0
    %v511 = vsel %vm491, %v442, 0
    %v514 = vsel %vm491, %v443, 0
    %516 = vmatpush.msra.mxu0 0.0
    %517 = vmatpush.msra.mxu0 0.0
    %518 = vmatpush.msra.mxu0 0.0
    %519 = vmatpush.msra.mxu0 0.0
    %520 = vmatpush.msra.mxu0 0.0
    %521 = vmatpush.msra.mxu0 0.0
    %522 = vmatpush.msra.mxu0 0.0
    %523 = vmatpush.msra.mxu0 0.0
    %524 = vmatpush.msra.mxu0 0.0
    %525 = vmatpush.msra.mxu0 0.0
    %526 = vmatpush.msra.mxu0 0.0
    %527 = vmatpush.msra.mxu0 0.0
    %528 = vmatpush.msra.mxu0 %v490
    %529 = vmatpush.msra.mxu0 %v489
    %530 = vmatpush.msra.mxu0 %v488
    %531 = vmatpush.msra.mxu0 %v487
    %532 = vmatmul.f32.gmra.mxu0 %v493
    %v533 = vpop.f32.mrf.mxu0
    %v534 = vadd.f32 0.0, %v533
    %535 = vmatmul.f32.gmra.mxu0 %v496
    %v536 = vpop.f32.mrf.mxu0
    %v537 = vadd.f32 0.0, %v536
    %538 = vmatmul.f32.gmra.mxu0 %v499
    %v539 = vpop.f32.mrf.mxu0
    %v540 = vadd.f32 0.0, %v539
    %541 = vmatmul.f32.gmra.mxu0 %v502
    %v542 = vpop.f32.mrf.mxu0
    %v543 = vadd.f32 0.0, %v542
    %544 = vmatmul.f32.gmra.mxu0 %v505
    %v545 = vpop.f32.mrf.mxu0
    %v546 = vadd.f32 0.0, %v545
    %547 = vmatmul.f32.gmra.mxu0 %v508
    %v548 = vpop.f32.mrf.mxu0
    %v549 = vadd.f32 0.0, %v548
    %550 = vmatmul.f32.gmra.mxu0 %v511
    %v551 = vpop.f32.mrf.mxu0
    %v552 = vadd.f32 0.0, %v551
    %553 = vmatmul.f32.gmra.mxu0 %v514
    %v554 = vpop.f32.mrf.mxu0
    %v555 = vadd.f32 0.0, %v554
    %556 = vdwg.mxu0
    %v557 = vld [vmem:[%s6 + $0xc] sm:$0xf]
    %v558 = vld [vmem:[%s6 + $0x10] sm:$0xf]
    %v560 = vsel %vm491, %v557, 0
    %v563 = vsel %vm491, %v534, 0
    %v566 = vsel %vm491, %v537, 0
    %v569 = vsel %vm491, %v540, 0
    %v572 = vsel %vm491, %v543, 0
    %v575 = vsel %vm491, %v546, 0
    %v578 = vsel %vm491, %v549, 0
    %v581 = vsel %vm491, %v552, 0
    %v584 = vsel %vm491, %v555, 0
    %586 = vmatpush.xpose.msra.mxu0 0.0
    %587 = vmatpush.xpose.msra.mxu0 0.0
    %588 = vmatpush.xpose.msra.mxu0 0.0
    %589 = vmatpush.xpose.msra.mxu0 0.0
    %590 = vmatpush.xpose.msra.mxu0 0.0
    %591 = vmatpush.xpose.msra.mxu0 0.0
    %592 = vmatpush.xpose.msra.mxu0 0.0
    %593 = vmatpush.xpose.msra.mxu0 0.0
    %594 = vmatpush.xpose.msra.mxu0 %v584
    %595 = vmatpush.xpose.msra.mxu0 %v581
    %596 = vmatpush.xpose.msra.mxu0 %v578
    %597 = vmatpush.xpose.msra.mxu0 %v575
    %598 = vmatpush.xpose.msra.mxu0 %v572
    %599 = vmatpush.xpose.msra.mxu0 %v569
    %600 = vmatpush.xpose.msra.mxu0 %v566
    %601 = vmatpush.xpose.msra.mxu0 %v563
    %602 = vmatmul.f32.gmra.mxu0 %v560
    %v603 = vpop.f32.mrf.mxu0
    %v604 = vadd.f32 0.0, %v603
    %605 = vdwg.mxu0
    %v607 = vsel %vm491, %v558, 0
    %609 = vmatpush.xpose.msra.mxu0 0.0
    %610 = vmatpush.xpose.msra.mxu0 0.0
    %611 = vmatpush.xpose.msra.mxu0 0.0
    %612 = vmatpush.xpose.msra.mxu0 0.0
    %613 = vmatpush.xpose.msra.mxu0 0.0
    %614 = vmatpush.xpose.msra.mxu0 0.0
    %615 = vmatpush.xpose.msra.mxu0 0.0
    %616 = vmatpush.xpose.msra.mxu0 0.0
    %617 = vmatpush.xpose.msra.mxu0 0.0
    %618 = vmatpush.xpose.msra.mxu0 0.0
    %619 = vmatpush.xpose.msra.mxu0 0.0
    %620 = vmatpush.xpose.msra.mxu0 0.0
    %621 = vmatpush.xpose.msra.mxu0 0.0
    %622 = vmatpush.xpose.msra.mxu0 0.0
    %623 = vmatpush.xpose.msra.mxu0 0.0
    %624 = vmatpush.xpose.msra.mxu0 %v607
    %625 = vmatmul.f32.gmra.mxu0 %v563
    %v626 = vpop.f32.mrf.mxu0
    %v627 = vadd.f32 0.0, %v626
    %628 = vmatmul.f32.gmra.mxu0 %v566
    %v629 = vpop.f32.mrf.mxu0
    %v630 = vadd.f32 0.0, %v629
    %631 = vmatmul.f32.gmra.mxu0 %v569
    %v632 = vpop.f32.mrf.mxu0
    %v633 = vadd.f32 0.0, %v632
    %634 = vmatmul.f32.gmra.mxu0 %v572
    %v635 = vpop.f32.mrf.mxu0
    %v636 = vadd.f32 0.0, %v635
    %637 = vmatmul.f32.gmra.mxu0 %v575
    %v638 = vpop.f32.mrf.mxu0
    %v639 = vadd.f32 0.0, %v638
    %640 = vmatmul.f32.gmra.mxu0 %v578
    %v641 = vpop.f32.mrf.mxu0
    %v642 = vadd.f32 0.0, %v641
    %643 = vmatmul.f32.gmra.mxu0 %v581
    %v644 = vpop.f32.mrf.mxu0
    %v645 = vadd.f32 0.0, %v644
    %646 = vmatmul.f32.gmra.mxu0 %v584
    %v647 = vpop.f32.mrf.mxu0
    %v648 = vadd.f32 0.0, %v647
    %649 = vdwg.mxu0
    %651 = vset.pattern.permute.xlu0 0
    %652 = vperm.xlu0 %651, %v627
    %v653 = vpop.permute.xlu0 %652
    %656 = vset.pattern.permute.xlu0 0
    %657 = vperm.xlu0 %656, %v630
    %v658 = vpop.permute.xlu0 %657
    %661 = vset.pattern.permute.xlu0 0
    %662 = vperm.xlu0 %661, %v633
    %v663 = vpop.permute.xlu0 %662
    %666 = vset.pattern.permute.xlu0 0
    %667 = vperm.xlu0 %666, %v636
    %v668 = vpop.permute.xlu0 %667
    %671 = vset.pattern.permute.xlu0 0
    %672 = vperm.xlu0 %671, %v639
    %v673 = vpop.permute.xlu0 %672
    %676 = vset.pattern.permute.xlu0 0
    %677 = vperm.xlu0 %676, %v642
    %v678 = vpop.permute.xlu0 %677
    %681 = vset.pattern.permute.xlu0 0
    %682 = vperm.xlu0 %681, %v645
    %v683 = vpop.permute.xlu0 %682
    %686 = vset.pattern.permute.xlu0 0
    %687 = vperm.xlu0 %686, %v648
    %v688 = vpop.permute.xlu0 %687
    %v690 = vperm.slane %v604, 0
    %v691 = vadd.f32 %v653, %v690
    %v692 = vadd.f32 %v658, %v690
    %v693 = vadd.f32 %v663, %v690
    %v694 = vadd.f32 %v668, %v690
    %v695 = vadd.f32 %v673, %v690
    %v696 = vadd.f32 %v678, %v690
    %v697 = vadd.f32 %v683, %v690
    %v698 = vadd.f32 %v688, %v690
    %vm699 = vcmp.gt.f32.partialorder %v691, 0.0
    %vm700 = vcmp.gt.f32.partialorder %v692, 0.0
    %vm701 = vcmp.gt.f32.partialorder %v693, 0.0
    %vm702 = vcmp.gt.f32.partialorder %v694, 0.0
    %vm703 = vcmp.gt.f32.partialorder %v695, 0.0
    %vm704 = vcmp.gt.f32.partialorder %v696, 0.0
    %vm705 = vcmp.gt.f32.partialorder %v697, 0.0
    %vm706 = vcmp.gt.f32.partialorder %v698, 0.0
    %v707 = vmul.f32 %v691, 0.2
    %v708 = vmul.f32 %v692, 0.2
    %v709 = vmul.f32 %v693, 0.2
    %v710 = vmul.f32 %v694, 0.2
    %v711 = vmul.f32 %v695, 0.2
    %v712 = vmul.f32 %v696, 0.2
    %v713 = vmul.f32 %v697, 0.2
    %v714 = vmul.f32 %v698, 0.2
    %v715 = vsel %vm699, %v691, %v707
    %v716 = vsel %vm700, %v692, %v708
    %v717 = vsel %vm701, %v693, %v709
    %v718 = vsel %vm702, %v694, %v710
    %v719 = vsel %vm703, %v695, %v711
    %v720 = vsel %vm704, %v696, %v712
    %v721 = vsel %vm705, %v697, %v713
    %v722 = vsel %vm706, %v698, %v714
    %v723 = vsel %vm479, %v715, -1e+30
    %v724 = vsel %vm480, %v716, -1e+30
    %v725 = vsel %vm481, %v717, -1e+30
    %v726 = vsel %vm482, %v718, -1e+30
    %v727 = vsel %vm483, %v719, -1e+30
    %v728 = vsel %vm484, %v720, -1e+30
    %v729 = vsel %vm485, %v721, -1e+30
    %v730 = vsel %vm486, %v722, -1e+30
    %vm731 = vcmask 516096
    %v732 = vsel %vm731, %v604, -inf
    %733 = vmax.xlane.f32.xlu0 %v732
    %v734 = vpop.xlane.xlu0 %733
    %v735 = vperm.slane %v734, 0
    %v736 = vadd.f32 %v627, %v735
    %v737 = vadd.f32 %v630, %v735
    %v738 = vadd.f32 %v633, %v735
    %v739 = vadd.f32 %v636, %v735
    %v740 = vadd.f32 %v639, %v735
    %v741 = vadd.f32 %v642, %v735
    %v742 = vadd.f32 %v645, %v735
    %v743 = vadd.f32 %v648, %v735
    %vm744 = vcmp.gt.f32.partialorder %v736, 0.0
    %vm745 = vcmp.gt.f32.partialorder %v737, 0.0
    %vm746 = vcmp.gt.f32.partialorder %v738, 0.0
    %vm747 = vcmp.gt.f32.partialorder %v739, 0.0
    %vm748 = vcmp.gt.f32.partialorder %v740, 0.0
    %vm749 = vcmp.gt.f32.partialorder %v741, 0.0
    %vm750 = vcmp.gt.f32.partialorder %v742, 0.0
    %vm751 = vcmp.gt.f32.partialorder %v743, 0.0
    %v752 = vmul.f32 %v736, 0.2
    %v753 = vmul.f32 %v737, 0.2
    %v754 = vmul.f32 %v738, 0.2
    %v755 = vmul.f32 %v739, 0.2
    %v756 = vmul.f32 %v740, 0.2
    %v757 = vmul.f32 %v741, 0.2
    %v758 = vmul.f32 %v742, 0.2
    %v759 = vmul.f32 %v743, 0.2
    %v760 = vsel %vm744, %v736, %v752
    %v761 = vsel %vm745, %v737, %v753
    %v762 = vsel %vm746, %v738, %v754
    %v763 = vsel %vm747, %v739, %v755
    %v764 = vsel %vm748, %v740, %v756
    %v765 = vsel %vm749, %v741, %v757
    %v766 = vsel %vm750, %v742, %v758
    %v767 = vsel %vm751, %v743, %v759
    %769 = vset.pattern.permute.xlu0 0
    %770 = vperm.xlu0 %769, %v760
    %v771 = vpop.permute.xlu0 %770
    %774 = vset.pattern.permute.xlu0 0
    %775 = vperm.xlu0 %774, %v761
    %v776 = vpop.permute.xlu0 %775
    %779 = vset.pattern.permute.xlu0 0
    %780 = vperm.xlu0 %779, %v762
    %v781 = vpop.permute.xlu0 %780
    %784 = vset.pattern.permute.xlu0 0
    %785 = vperm.xlu0 %784, %v763
    %v786 = vpop.permute.xlu0 %785
    %789 = vset.pattern.permute.xlu0 0
    %790 = vperm.xlu0 %789, %v764
    %v791 = vpop.permute.xlu0 %790
    %794 = vset.pattern.permute.xlu0 0
    %795 = vperm.xlu0 %794, %v765
    %v796 = vpop.permute.xlu0 %795
    %799 = vset.pattern.permute.xlu0 0
    %800 = vperm.xlu0 %799, %v766
    %v801 = vpop.permute.xlu0 %800
    %804 = vset.pattern.permute.xlu0 0
    %805 = vperm.xlu0 %804, %v767
    %v806 = vpop.permute.xlu0 %805
    %v808 = vsub.f32 %v723, %v771
    %v809 = vsub.f32 %v724, %v776
    %v810 = vsub.f32 %v725, %v781
    %v811 = vsub.f32 %v726, %v786
    %v812 = vsub.f32 %v727, %v791
    %v813 = vsub.f32 %v728, %v796
    %v814 = vsub.f32 %v729, %v801
    %v815 = vsub.f32 %v730, %v806
    %v816 = vmul.f32 %v808, 1.442695
    %v817 = vpow.pop %v816
    %v818 = vmul.f32 %v809, 1.442695
    %v819 = vpow.pop %v818
    %v820 = vmul.f32 %v810, 1.442695
    %v821 = vpow.pop %v820
    %v822 = vmul.f32 %v811, 1.442695
    %v823 = vpow.pop %v822
    %v824 = vmul.f32 %v812, 1.442695
    %v825 = vpow.pop %v824
    %v826 = vmul.f32 %v813, 1.442695
    %v827 = vpow.pop %v826
    %v828 = vmul.f32 %v814, 1.442695
    %v829 = vpow.pop %v828
    %v830 = vmul.f32 %v815, 1.442695
    %v831 = vpow.pop %v830
    %vm832 = vcmask 523264
    %v833 = vsel %vm832, %v817, 0.0
    %834 = vadd.xlane.f32.xlu0 %v833
    %v835 = vpop.xlane.xlu0 %834
    %v836 = vsel %vm832, %v819, 0.0
    %837 = vadd.xlane.f32.xlu0 %v836
    %v838 = vpop.xlane.xlu0 %837
    %v839 = vsel %vm832, %v821, 0.0
    %840 = vadd.xlane.f32.xlu0 %v839
    %v841 = vpop.xlane.xlu0 %840
    %v842 = vsel %vm832, %v823, 0.0
    %843 = vadd.xlane.f32.xlu0 %v842
    %v844 = vpop.xlane.xlu0 %843
    %v845 = vsel %vm832, %v825, 0.0
    %846 = vadd.xlane.f32.xlu0 %v845
    %v847 = vpop.xlane.xlu0 %846
    %v848 = vsel %vm832, %v827, 0.0
    %849 = vadd.xlane.f32.xlu0 %v848
    %v850 = vpop.xlane.xlu0 %849
    %v851 = vsel %vm832, %v829, 0.0
    %852 = vadd.xlane.f32.xlu0 %v851
    %v853 = vpop.xlane.xlu0 %852
    %v854 = vsel %vm832, %v831, 0.0
    %855 = vadd.xlane.f32.xlu0 %v854
    %v856 = vpop.xlane.xlu0 %855
    %v857 = vrcp.pop %v835
    %v858 = vrcp.pop %v838
    %v859 = vrcp.pop %v841
    %v860 = vrcp.pop %v844
    %v861 = vrcp.pop %v847
    %v862 = vrcp.pop %v850
    %v863 = vrcp.pop %v853
    %v864 = vrcp.pop %v856
    %v865 = vmul.f32 %v817, %v857
    %v866 = vmul.f32 %v819, %v858
    %v867 = vmul.f32 %v821, %v859
    %v868 = vmul.f32 %v823, %v860
    %v869 = vmul.f32 %v825, %v861
    %v870 = vmul.f32 %v827, %v862
    %v871 = vmul.f32 %v829, %v863
    %v872 = vmul.f32 %v831, %v864
    %v873 = vld [vmem:[%s6 + $0x14] sm:$0x1]
    %v874 = vperm.slane %v873, 0
    %v875 = vmul.f32 %v534, %v874
    %v876 = vmul.f32 %v537, %v874
    %v877 = vmul.f32 %v540, %v874
    %v878 = vmul.f32 %v543, %v874
    %v879 = vmul.f32 %v546, %v874
    %v880 = vmul.f32 %v549, %v874
    %v881 = vmul.f32 %v552, %v874
    %v882 = vmul.f32 %v555, %v874
    %v883 = vpack.c.bf16 %v866, %v865
    %v884 = vpack.c.bf16 %v868, %v867
    %v885 = vpack.c.bf16 %v870, %v869
    %v886 = vpack.c.bf16 %v872, %v871
    %v887 = vpack.c.bf16 %v876, %v875
    %v888 = vpack.c.bf16 %v878, %v877
    %v889 = vpack.c.bf16 %v880, %v879
    %v890 = vpack.c.bf16 %v882, %v881
    %891 = vset.pattern.permute.xlu0 1
    %892 = vperm.xlu0 %891, %v627
    %v893 = vpop.permute.xlu0 %892
    %895 = vset.pattern.permute.xlu0 1
    %896 = vperm.xlu0 %895, %v630
    %v897 = vpop.permute.xlu0 %896
    %899 = vset.pattern.permute.xlu0 1
    %900 = vperm.xlu0 %899, %v633
    %v901 = vpop.permute.xlu0 %900
    %903 = vset.pattern.permute.xlu0 1
    %904 = vperm.xlu0 %903, %v636
    %v905 = vpop.permute.xlu0 %904
    %907 = vset.pattern.permute.xlu0 1
    %908 = vperm.xlu0 %907, %v639
    %v909 = vpop.permute.xlu0 %908
    %911 = vset.pattern.permute.xlu0 1
    %912 = vperm.xlu0 %911, %v642
    %v913 = vpop.permute.xlu0 %912
    %915 = vset.pattern.permute.xlu0 1
    %916 = vperm.xlu0 %915, %v645
    %v917 = vpop.permute.xlu0 %916
    %919 = vset.pattern.permute.xlu0 1
    %920 = vperm.xlu0 %919, %v648
    %v921 = vpop.permute.xlu0 %920
    %v923 = vperm.slane %v604, 1
    %v924 = vadd.f32 %v893, %v923
    %v925 = vadd.f32 %v897, %v923
    %v926 = vadd.f32 %v901, %v923
    %v927 = vadd.f32 %v905, %v923
    %v928 = vadd.f32 %v909, %v923
    %v929 = vadd.f32 %v913, %v923
    %v930 = vadd.f32 %v917, %v923
    %v931 = vadd.f32 %v921, %v923
    %vm932 = vcmp.gt.f32.partialorder %v924, 0.0
    %vm933 = vcmp.gt.f32.partialorder %v925, 0.0
    %vm934 = vcmp.gt.f32.partialorder %v926, 0.0
    %vm935 = vcmp.gt.f32.partialorder %v927, 0.0
    %vm936 = vcmp.gt.f32.partialorder %v928, 0.0
    %vm937 = vcmp.gt.f32.partialorder %v929, 0.0
    %vm938 = vcmp.gt.f32.partialorder %v930, 0.0
    %vm939 = vcmp.gt.f32.partialorder %v931, 0.0
    %v940 = vmul.f32 %v924, 0.2
    %v941 = vmul.f32 %v925, 0.2
    %v942 = vmul.f32 %v926, 0.2
    %v943 = vmul.f32 %v927, 0.2
    %v944 = vmul.f32 %v928, 0.2
    %v945 = vmul.f32 %v929, 0.2
    %v946 = vmul.f32 %v930, 0.2
    %v947 = vmul.f32 %v931, 0.2
    %v948 = vsel %vm932, %v924, %v940
    %v949 = vsel %vm933, %v925, %v941
    %v950 = vsel %vm934, %v926, %v942
    %v951 = vsel %vm935, %v927, %v943
    %v952 = vsel %vm936, %v928, %v944
    %v953 = vsel %vm937, %v929, %v945
    %v954 = vsel %vm938, %v930, %v946
    %v955 = vsel %vm939, %v931, %v947
    %v956 = vsel %vm479, %v948, -1e+30
    %v957 = vsel %vm480, %v949, -1e+30
    %v958 = vsel %vm481, %v950, -1e+30
    %v959 = vsel %vm482, %v951, -1e+30
    %v960 = vsel %vm483, %v952, -1e+30
    %v961 = vsel %vm484, %v953, -1e+30
    %v962 = vsel %vm485, %v954, -1e+30
    %v963 = vsel %vm486, %v955, -1e+30
    %vm964 = vcmask 517121
    %v965 = vsel %vm964, %v604, -inf
    %966 = vmax.xlane.f32.xlu0 %v965
    %v967 = vpop.xlane.xlu0 %966
    %v968 = vperm.slane %v967, 1
    %v969 = vadd.f32 %v627, %v968
    %v970 = vadd.f32 %v630, %v968
    %v971 = vadd.f32 %v633, %v968
    %v972 = vadd.f32 %v636, %v968
    %v973 = vadd.f32 %v639, %v968
    %v974 = vadd.f32 %v642, %v968
    %v975 = vadd.f32 %v645, %v968
    %v976 = vadd.f32 %v648, %v968
    %vm977 = vcmp.gt.f32.partialorder %v969, 0.0
    %vm978 = vcmp.gt.f32.partialorder %v970, 0.0
    %vm979 = vcmp.gt.f32.partialorder %v971, 0.0
    %vm980 = vcmp.gt.f32.partialorder %v972, 0.0
    %vm981 = vcmp.gt.f32.partialorder %v973, 0.0
    %vm982 = vcmp.gt.f32.partialorder %v974, 0.0
    %vm983 = vcmp.gt.f32.partialorder %v975, 0.0
    %vm984 = vcmp.gt.f32.partialorder %v976, 0.0
    %v985 = vmul.f32 %v969, 0.2
    %v986 = vmul.f32 %v970, 0.2
    %v987 = vmul.f32 %v971, 0.2
    %v988 = vmul.f32 %v972, 0.2
    %v989 = vmul.f32 %v973, 0.2
    %v990 = vmul.f32 %v974, 0.2
    %v991 = vmul.f32 %v975, 0.2
    %v992 = vmul.f32 %v976, 0.2
    %v993 = vsel %vm977, %v969, %v985
    %v994 = vsel %vm978, %v970, %v986
    %v995 = vsel %vm979, %v971, %v987
    %v996 = vsel %vm980, %v972, %v988
    %v997 = vsel %vm981, %v973, %v989
    %v998 = vsel %vm982, %v974, %v990
    %v999 = vsel %vm983, %v975, %v991
    %v1000 = vsel %vm984, %v976, %v992
    %1002 = vset.pattern.permute.xlu0 1
    %1003 = vperm.xlu0 %1002, %v993
    %v1004 = vpop.permute.xlu0 %1003
    %1007 = vset.pattern.permute.xlu0 1
    %1008 = vperm.xlu0 %1007, %v994
    %v1009 = vpop.permute.xlu0 %1008
    %1012 = vset.pattern.permute.xlu0 1
    %1013 = vperm.xlu0 %1012, %v995
    %v1014 = vpop.permute.xlu0 %1013
    %1017 = vset.pattern.permute.xlu0 1
    %1018 = vperm.xlu0 %1017, %v996
    %v1019 = vpop.permute.xlu0 %1018
    %1022 = vset.pattern.permute.xlu0 1
    %1023 = vperm.xlu0 %1022, %v997
    %v1024 = vpop.permute.xlu0 %1023
    %1027 = vset.pattern.permute.xlu0 1
    %1028 = vperm.xlu0 %1027, %v998
    %v1029 = vpop.permute.xlu0 %1028
    %1032 = vset.pattern.permute.xlu0 1
    %1033 = vperm.xlu0 %1032, %v999
    %v1034 = vpop.permute.xlu0 %1033
    %1037 = vset.pattern.permute.xlu0 1
    %1038 = vperm.xlu0 %1037, %v1000
    %v1039 = vpop.permute.xlu0 %1038
    %v1041 = vsub.f32 %v956, %v1004
    %v1042 = vsub.f32 %v957, %v1009
    %v1043 = vsub.f32 %v958, %v1014
    %v1044 = vsub.f32 %v959, %v1019
    %v1045 = vsub.f32 %v960, %v1024
    %v1046 = vsub.f32 %v961, %v1029
    %v1047 = vsub.f32 %v962, %v1034
    %v1048 = vsub.f32 %v963, %v1039
    %v1049 = vmul.f32 %v1041, 1.442695
    %v1050 = vpow.pop %v1049
    %v1051 = vmul.f32 %v1042, 1.442695
    %v1052 = vpow.pop %v1051
    %v1053 = vmul.f32 %v1043, 1.442695
    %v1054 = vpow.pop %v1053
    %v1055 = vmul.f32 %v1044, 1.442695
    %v1056 = vpow.pop %v1055
    %v1057 = vmul.f32 %v1045, 1.442695
    %v1058 = vpow.pop %v1057
    %v1059 = vmul.f32 %v1046, 1.442695
    %v1060 = vpow.pop %v1059
    %v1061 = vmul.f32 %v1047, 1.442695
    %v1062 = vpow.pop %v1061
    %v1063 = vmul.f32 %v1048, 1.442695
    %v1064 = vpow.pop %v1063
    %v1065 = vsel %vm832, %v1050, 0.0
    %1066 = vadd.xlane.f32.xlu0 %v1065
    %v1067 = vpop.xlane.xlu0 %1066
    %v1068 = vsel %vm832, %v1052, 0.0
    %1069 = vadd.xlane.f32.xlu0 %v1068
    %v1070 = vpop.xlane.xlu0 %1069
    %v1071 = vsel %vm832, %v1054, 0.0
    %1072 = vadd.xlane.f32.xlu0 %v1071
    %v1073 = vpop.xlane.xlu0 %1072
    %v1074 = vsel %vm832, %v1056, 0.0
    %1075 = vadd.xlane.f32.xlu0 %v1074
    %v1076 = vpop.xlane.xlu0 %1075
    %v1077 = vsel %vm832, %v1058, 0.0
    %1078 = vadd.xlane.f32.xlu0 %v1077
    %v1079 = vpop.xlane.xlu0 %1078
    %v1080 = vsel %vm832, %v1060, 0.0
    %1081 = vadd.xlane.f32.xlu0 %v1080
    %v1082 = vpop.xlane.xlu0 %1081
    %v1083 = vsel %vm832, %v1062, 0.0
    %1084 = vadd.xlane.f32.xlu0 %v1083
    %v1085 = vpop.xlane.xlu0 %1084
    %v1086 = vsel %vm832, %v1064, 0.0
    %1087 = vadd.xlane.f32.xlu0 %v1086
    %v1088 = vpop.xlane.xlu0 %1087
    %v1089 = vrcp.pop %v1067
    %v1090 = vrcp.pop %v1070
    %v1091 = vrcp.pop %v1073
    %v1092 = vrcp.pop %v1076
    %v1093 = vrcp.pop %v1079
    %v1094 = vrcp.pop %v1082
    %v1095 = vrcp.pop %v1085
    %v1096 = vrcp.pop %v1088
    %v1097 = vmul.f32 %v1050, %v1089
    %v1098 = vmul.f32 %v1052, %v1090
    %v1099 = vmul.f32 %v1054, %v1091
    %v1100 = vmul.f32 %v1056, %v1092
    %v1101 = vmul.f32 %v1058, %v1093
    %v1102 = vmul.f32 %v1060, %v1094
    %v1103 = vmul.f32 %v1062, %v1095
    %v1104 = vmul.f32 %v1064, %v1096
    %v1105 = vld [vmem:[%s6 + $0x15] sm:$0x1]
    %v1106 = vperm.slane %v1105, 0
    %v1107 = vmul.f32 %v534, %v1106
    %v1108 = vmul.f32 %v537, %v1106
    %v1109 = vmul.f32 %v540, %v1106
    %v1110 = vmul.f32 %v543, %v1106
    %v1111 = vmul.f32 %v546, %v1106
    %v1112 = vmul.f32 %v549, %v1106
    %v1113 = vmul.f32 %v552, %v1106
    %v1114 = vmul.f32 %v555, %v1106
    %v1115 = vpack.c.bf16 %v1098, %v1097
    %v1116 = vpack.c.bf16 %v1100, %v1099
    %v1117 = vpack.c.bf16 %v1102, %v1101
    %v1118 = vpack.c.bf16 %v1104, %v1103
    %v1119 = vpack.c.bf16 %v1108, %v1107
    %v1120 = vpack.c.bf16 %v1110, %v1109
    %v1121 = vpack.c.bf16 %v1112, %v1111
    %v1122 = vpack.c.bf16 %v1114, %v1113
    %v1124 = vsel %vm832, %v1115, 0
    %v1127 = vsel %vm832, %v1116, 0
    %v1130 = vsel %vm832, %v1117, 0
    %v1133 = vsel %vm832, %v1118, 0
    %1135 = vmatpush.bf16.msra.mxu0 0
    %1136 = vmatpush.bf16.msra.mxu0 0
    %1137 = vmatpush.bf16.msra.mxu0 0
    %1138 = vmatpush.bf16.msra.mxu0 0
    %1139 = vmatpush.bf16.msra.mxu0 %v1122
    %1140 = vmatpush.bf16.msra.mxu0 %v1121
    %1141 = vmatpush.bf16.msra.mxu0 %v1120
    %1142 = vmatpush.bf16.msra.mxu0 %v1119
    %1143 = vmatmul.bf16.gmra.mxu0 %v1124
    %v1144 = vpop.f32.mrf.mxu0
    %v1145 = vadd.f32 0.0, %v1144
    %v1146 = vpop.f32.mrf.mxu0
    %v1147 = vadd.f32 0.0, %v1146
    %1148 = vmatmul.bf16.gmra.mxu0 %v1127
    %v1149 = vpop.f32.mrf.mxu0
    %v1150 = vadd.f32 0.0, %v1149
    %v1151 = vpop.f32.mrf.mxu0
    %v1152 = vadd.f32 0.0, %v1151
    %1153 = vmatmul.bf16.gmra.mxu0 %v1130
    %v1154 = vpop.f32.mrf.mxu0
    %v1155 = vadd.f32 0.0, %v1154
    %v1156 = vpop.f32.mrf.mxu0
    %v1157 = vadd.f32 0.0, %v1156
    %1158 = vmatmul.bf16.gmra.mxu0 %v1133
    %v1159 = vpop.f32.mrf.mxu0
    %v1160 = vadd.f32 0.0, %v1159
    %v1161 = vpop.f32.mrf.mxu0
    %v1162 = vadd.f32 0.0, %v1161
    %1163 = vdwg.mxu0
    %v1165 = vsel %vm832, %v883, 0
    %v1168 = vsel %vm832, %v884, 0
    %v1171 = vsel %vm832, %v885, 0
    %v1174 = vsel %vm832, %v886, 0
    %1176 = vmatpush.bf16.msra.mxu0 0
    %1177 = vmatpush.bf16.msra.mxu0 0
    %1178 = vmatpush.bf16.msra.mxu0 0
    %1179 = vmatpush.bf16.msra.mxu0 0
    %1180 = vmatpush.bf16.msra.mxu0 %v890
    %1181 = vmatpush.bf16.msra.mxu0 %v889
    %1182 = vmatpush.bf16.msra.mxu0 %v888
    %1183 = vmatpush.bf16.msra.mxu0 %v887
    %1184 = vmatmul.bf16.gmra.mxu0 %v1165
    %v1185 = vpop.f32.mrf.mxu0
    %v1186 = vadd.f32 %v1145, %v1185
    %v1187 = vpop.f32.mrf.mxu0
    %v1188 = vadd.f32 %v1147, %v1187
    %1189 = vmatmul.bf16.gmra.mxu0 %v1168
    %v1190 = vpop.f32.mrf.mxu0
    %v1191 = vadd.f32 %v1150, %v1190
    %v1192 = vpop.f32.mrf.mxu0
    %v1193 = vadd.f32 %v1152, %v1192
    %1194 = vmatmul.bf16.gmra.mxu0 %v1171
    %v1195 = vpop.f32.mrf.mxu0
    %v1196 = vadd.f32 %v1155, %v1195
    %v1197 = vpop.f32.mrf.mxu0
    %v1198 = vadd.f32 %v1157, %v1197
    %1199 = vmatmul.bf16.gmra.mxu0 %v1174
    %v1200 = vpop.f32.mrf.mxu0
    %v1201 = vadd.f32 %v1160, %v1200
    %v1202 = vpop.f32.mrf.mxu0
    %v1203 = vadd.f32 %v1162, %v1202
    %1204 = vdwg.mxu0
    %1205 = vset.pattern.permute.xlu0 2
    %1206 = vperm.xlu0 %1205, %v627
    %v1207 = vpop.permute.xlu0 %1206
    %1209 = vset.pattern.permute.xlu0 2
    %1210 = vperm.xlu0 %1209, %v630
    %v1211 = vpop.permute.xlu0 %1210
    %1213 = vset.pattern.permute.xlu0 2
    %1214 = vperm.xlu0 %1213, %v633
    %v1215 = vpop.permute.xlu0 %1214
    %1217 = vset.pattern.permute.xlu0 2
    %1218 = vperm.xlu0 %1217, %v636
    %v1219 = vpop.permute.xlu0 %1218
    %1221 = vset.pattern.permute.xlu0 2
    %1222 = vperm.xlu0 %1221, %v639
    %v1223 = vpop.permute.xlu0 %1222
    %1225 = vset.pattern.permute.xlu0 2
    %1226 = vperm.xlu0 %1225, %v642
    %v1227 = vpop.permute.xlu0 %1226
    %1229 = vset.pattern.permute.xlu0 2
    %1230 = vperm.xlu0 %1229, %v645
    %v1231 = vpop.permute.xlu0 %1230
    %1233 = vset.pattern.permute.xlu0 2
    %1234 = vperm.xlu0 %1233, %v648
    %v1235 = vpop.permute.xlu0 %1234
    %v1237 = vperm.slane %v604, 2
    %v1238 = vadd.f32 %v1207, %v1237
    %v1239 = vadd.f32 %v1211, %v1237
    %v1240 = vadd.f32 %v1215, %v1237
    %v1241 = vadd.f32 %v1219, %v1237
    %v1242 = vadd.f32 %v1223, %v1237
    %v1243 = vadd.f32 %v1227, %v1237
    %v1244 = vadd.f32 %v1231, %v1237
    %v1245 = vadd.f32 %v1235, %v1237
    %vm1246 = vcmp.gt.f32.partialorder %v1238, 0.0
    %vm1247 = vcmp.gt.f32.partialorder %v1239, 0.0
    %vm1248 = vcmp.gt.f32.partialorder %v1240, 0.0
    %vm1249 = vcmp.gt.f32.partialorder %v1241, 0.0
    %vm1250 = vcmp.gt.f32.partialorder %v1242, 0.0
    %vm1251 = vcmp.gt.f32.partialorder %v1243, 0.0
    %vm1252 = vcmp.gt.f32.partialorder %v1244, 0.0
    %vm1253 = vcmp.gt.f32.partialorder %v1245, 0.0
    %v1254 = vmul.f32 %v1238, 0.2
    %v1255 = vmul.f32 %v1239, 0.2
    %v1256 = vmul.f32 %v1240, 0.2
    %v1257 = vmul.f32 %v1241, 0.2
    %v1258 = vmul.f32 %v1242, 0.2
    %v1259 = vmul.f32 %v1243, 0.2
    %v1260 = vmul.f32 %v1244, 0.2
    %v1261 = vmul.f32 %v1245, 0.2
    %v1262 = vsel %vm1246, %v1238, %v1254
    %v1263 = vsel %vm1247, %v1239, %v1255
    %v1264 = vsel %vm1248, %v1240, %v1256
    %v1265 = vsel %vm1249, %v1241, %v1257
    %v1266 = vsel %vm1250, %v1242, %v1258
    %v1267 = vsel %vm1251, %v1243, %v1259
    %v1268 = vsel %vm1252, %v1244, %v1260
    %v1269 = vsel %vm1253, %v1245, %v1261
    %v1270 = vsel %vm479, %v1262, -1e+30
    %v1271 = vsel %vm480, %v1263, -1e+30
    %v1272 = vsel %vm481, %v1264, -1e+30
    %v1273 = vsel %vm482, %v1265, -1e+30
    %v1274 = vsel %vm483, %v1266, -1e+30
    %v1275 = vsel %vm484, %v1267, -1e+30
    %v1276 = vsel %vm485, %v1268, -1e+30
    %v1277 = vsel %vm486, %v1269, -1e+30
    %vm1278 = vcmask 518146
    %v1279 = vsel %vm1278, %v604, -inf
    %1280 = vmax.xlane.f32.xlu0 %v1279
    %v1281 = vpop.xlane.xlu0 %1280
    %v1282 = vperm.slane %v1281, 2
    %v1283 = vadd.f32 %v627, %v1282
    %v1284 = vadd.f32 %v630, %v1282
    %v1285 = vadd.f32 %v633, %v1282
    %v1286 = vadd.f32 %v636, %v1282
    %v1287 = vadd.f32 %v639, %v1282
    %v1288 = vadd.f32 %v642, %v1282
    %v1289 = vadd.f32 %v645, %v1282
    %v1290 = vadd.f32 %v648, %v1282
    %vm1291 = vcmp.gt.f32.partialorder %v1283, 0.0
    %vm1292 = vcmp.gt.f32.partialorder %v1284, 0.0
    %vm1293 = vcmp.gt.f32.partialorder %v1285, 0.0
    %vm1294 = vcmp.gt.f32.partialorder %v1286, 0.0
    %vm1295 = vcmp.gt.f32.partialorder %v1287, 0.0
    %vm1296 = vcmp.gt.f32.partialorder %v1288, 0.0
    %vm1297 = vcmp.gt.f32.partialorder %v1289, 0.0
    %vm1298 = vcmp.gt.f32.partialorder %v1290, 0.0
    %v1299 = vmul.f32 %v1283, 0.2
    %v1300 = vmul.f32 %v1284, 0.2
    %v1301 = vmul.f32 %v1285, 0.2
    %v1302 = vmul.f32 %v1286, 0.2
    %v1303 = vmul.f32 %v1287, 0.2
    %v1304 = vmul.f32 %v1288, 0.2
    %v1305 = vmul.f32 %v1289, 0.2
    %v1306 = vmul.f32 %v1290, 0.2
    %v1307 = vsel %vm1291, %v1283, %v1299
    %v1308 = vsel %vm1292, %v1284, %v1300
    %v1309 = vsel %vm1293, %v1285, %v1301
    %v1310 = vsel %vm1294, %v1286, %v1302
    %v1311 = vsel %vm1295, %v1287, %v1303
    %v1312 = vsel %vm1296, %v1288, %v1304
    %v1313 = vsel %vm1297, %v1289, %v1305
    %v1314 = vsel %vm1298, %v1290, %v1306
    %1316 = vset.pattern.permute.xlu0 2
    %1317 = vperm.xlu0 %1316, %v1307
    %v1318 = vpop.permute.xlu0 %1317
    %1321 = vset.pattern.permute.xlu0 2
    %1322 = vperm.xlu0 %1321, %v1308
    %v1323 = vpop.permute.xlu0 %1322
    %1326 = vset.pattern.permute.xlu0 2
    %1327 = vperm.xlu0 %1326, %v1309
    %v1328 = vpop.permute.xlu0 %1327
    %1331 = vset.pattern.permute.xlu0 2
    %1332 = vperm.xlu0 %1331, %v1310
    %v1333 = vpop.permute.xlu0 %1332
    %1336 = vset.pattern.permute.xlu0 2
    %1337 = vperm.xlu0 %1336, %v1311
    %v1338 = vpop.permute.xlu0 %1337
    %1341 = vset.pattern.permute.xlu0 2
    %1342 = vperm.xlu0 %1341, %v1312
    %v1343 = vpop.permute.xlu0 %1342
    %1346 = vset.pattern.permute.xlu0 2
    %1347 = vperm.xlu0 %1346, %v1313
    %v1348 = vpop.permute.xlu0 %1347
    %1351 = vset.pattern.permute.xlu0 2
    %1352 = vperm.xlu0 %1351, %v1314
    %v1353 = vpop.permute.xlu0 %1352
    %v1355 = vsub.f32 %v1270, %v1318
    %v1356 = vsub.f32 %v1271, %v1323
    %v1357 = vsub.f32 %v1272, %v1328
    %v1358 = vsub.f32 %v1273, %v1333
    %v1359 = vsub.f32 %v1274, %v1338
    %v1360 = vsub.f32 %v1275, %v1343
    %v1361 = vsub.f32 %v1276, %v1348
    %v1362 = vsub.f32 %v1277, %v1353
    %v1363 = vmul.f32 %v1355, 1.442695
    %v1364 = vpow.pop %v1363
    %v1365 = vmul.f32 %v1356, 1.442695
    %v1366 = vpow.pop %v1365
    %v1367 = vmul.f32 %v1357, 1.442695
    %v1368 = vpow.pop %v1367
    %v1369 = vmul.f32 %v1358, 1.442695
    %v1370 = vpow.pop %v1369
    %v1371 = vmul.f32 %v1359, 1.442695
    %v1372 = vpow.pop %v1371
    %v1373 = vmul.f32 %v1360, 1.442695
    %v1374 = vpow.pop %v1373
    %v1375 = vmul.f32 %v1361, 1.442695
    %v1376 = vpow.pop %v1375
    %v1377 = vmul.f32 %v1362, 1.442695
    %v1378 = vpow.pop %v1377
    %v1379 = vsel %vm832, %v1364, 0.0
    %1380 = vadd.xlane.f32.xlu0 %v1379
    %v1381 = vpop.xlane.xlu0 %1380
    %v1382 = vsel %vm832, %v1366, 0.0
    %1383 = vadd.xlane.f32.xlu0 %v1382
    %v1384 = vpop.xlane.xlu0 %1383
    %v1385 = vsel %vm832, %v1368, 0.0
    %1386 = vadd.xlane.f32.xlu0 %v1385
    %v1387 = vpop.xlane.xlu0 %1386
    %v1388 = vsel %vm832, %v1370, 0.0
    %1389 = vadd.xlane.f32.xlu0 %v1388
    %v1390 = vpop.xlane.xlu0 %1389
    %v1391 = vsel %vm832, %v1372, 0.0
    %1392 = vadd.xlane.f32.xlu0 %v1391
    %v1393 = vpop.xlane.xlu0 %1392
    %v1394 = vsel %vm832, %v1374, 0.0
    %1395 = vadd.xlane.f32.xlu0 %v1394
    %v1396 = vpop.xlane.xlu0 %1395
    %v1397 = vsel %vm832, %v1376, 0.0
    %1398 = vadd.xlane.f32.xlu0 %v1397
    %v1399 = vpop.xlane.xlu0 %1398
    %v1400 = vsel %vm832, %v1378, 0.0
    %1401 = vadd.xlane.f32.xlu0 %v1400
    %v1402 = vpop.xlane.xlu0 %1401
    %v1403 = vrcp.pop %v1381
    %v1404 = vrcp.pop %v1384
    %v1405 = vrcp.pop %v1387
    %v1406 = vrcp.pop %v1390
    %v1407 = vrcp.pop %v1393
    %v1408 = vrcp.pop %v1396
    %v1409 = vrcp.pop %v1399
    %v1410 = vrcp.pop %v1402
    %v1411 = vmul.f32 %v1364, %v1403
    %v1412 = vmul.f32 %v1366, %v1404
    %v1413 = vmul.f32 %v1368, %v1405
    %v1414 = vmul.f32 %v1370, %v1406
    %v1415 = vmul.f32 %v1372, %v1407
    %v1416 = vmul.f32 %v1374, %v1408
    %v1417 = vmul.f32 %v1376, %v1409
    %v1418 = vmul.f32 %v1378, %v1410
    %v1419 = vld [vmem:[%s6 + $0x16] sm:$0x1]
    %v1420 = vperm.slane %v1419, 0
    %v1421 = vmul.f32 %v534, %v1420
    %v1422 = vmul.f32 %v537, %v1420
    %v1423 = vmul.f32 %v540, %v1420
    %v1424 = vmul.f32 %v543, %v1420
    %v1425 = vmul.f32 %v546, %v1420
    %v1426 = vmul.f32 %v549, %v1420
    %v1427 = vmul.f32 %v552, %v1420
    %v1428 = vmul.f32 %v555, %v1420
    %v1429 = vpack.c.bf16 %v1412, %v1411
    %v1430 = vpack.c.bf16 %v1414, %v1413
    %v1431 = vpack.c.bf16 %v1416, %v1415
    %v1432 = vpack.c.bf16 %v1418, %v1417
    %v1433 = vpack.c.bf16 %v1422, %v1421
    %v1434 = vpack.c.bf16 %v1424, %v1423
    %v1435 = vpack.c.bf16 %v1426, %v1425
    %v1436 = vpack.c.bf16 %v1428, %v1427
    %v1438 = vsel %vm832, %v1429, 0
    %v1441 = vsel %vm832, %v1430, 0
    %v1444 = vsel %vm832, %v1431, 0
    %v1447 = vsel %vm832, %v1432, 0
    %1449 = vmatpush.bf16.msra.mxu0 0
    %1450 = vmatpush.bf16.msra.mxu0 0
    %1451 = vmatpush.bf16.msra.mxu0 0
    %1452 = vmatpush.bf16.msra.mxu0 0
    %1453 = vmatpush.bf16.msra.mxu0 %v1436
    %1454 = vmatpush.bf16.msra.mxu0 %v1435
    %1455 = vmatpush.bf16.msra.mxu0 %v1434
    %1456 = vmatpush.bf16.msra.mxu0 %v1433
    %1457 = vmatmul.bf16.gmra.mxu0 %v1438
    %v1458 = vpop.f32.mrf.mxu0
    %v1459 = vadd.f32 0.0, %v1458
    %v1460 = vpop.f32.mrf.mxu0
    %v1461 = vadd.f32 0.0, %v1460
    %1462 = vmatmul.bf16.gmra.mxu0 %v1441
    %v1463 = vpop.f32.mrf.mxu0
    %v1464 = vadd.f32 0.0, %v1463
    %v1465 = vpop.f32.mrf.mxu0
    %v1466 = vadd.f32 0.0, %v1465
    %1467 = vmatmul.bf16.gmra.mxu0 %v1444
    %v1468 = vpop.f32.mrf.mxu0
    %v1469 = vadd.f32 0.0, %v1468
    %v1470 = vpop.f32.mrf.mxu0
    %v1471 = vadd.f32 0.0, %v1470
    %1472 = vmatmul.bf16.gmra.mxu0 %v1447
    %v1473 = vpop.f32.mrf.mxu0
    %v1474 = vadd.f32 0.0, %v1473
    %v1475 = vpop.f32.mrf.mxu0
    %v1476 = vadd.f32 0.0, %v1475
    %1477 = vdwg.mxu0
    %v1478 = vadd.f32 %v1186, %v1459
    %v1479 = vadd.f32 %v1188, %v1461
    %v1480 = vadd.f32 %v1191, %v1464
    %v1481 = vadd.f32 %v1193, %v1466
    %v1482 = vadd.f32 %v1196, %v1469
    %v1483 = vadd.f32 %v1198, %v1471
    %v1484 = vadd.f32 %v1201, %v1474
    %v1485 = vadd.f32 %v1203, %v1476
    %1486 = vset.pattern.permute.xlu0 3
    %1487 = vperm.xlu0 %1486, %v627
    %v1488 = vpop.permute.xlu0 %1487
    %1490 = vset.pattern.permute.xlu0 3
    %1491 = vperm.xlu0 %1490, %v630
    %v1492 = vpop.permute.xlu0 %1491
    %1494 = vset.pattern.permute.xlu0 3
    %1495 = vperm.xlu0 %1494, %v633
    %v1496 = vpop.permute.xlu0 %1495
    %1498 = vset.pattern.permute.xlu0 3
    %1499 = vperm.xlu0 %1498, %v636
    %v1500 = vpop.permute.xlu0 %1499
    %1502 = vset.pattern.permute.xlu0 3
    %1503 = vperm.xlu0 %1502, %v639
    %v1504 = vpop.permute.xlu0 %1503
    %1506 = vset.pattern.permute.xlu0 3
    %1507 = vperm.xlu0 %1506, %v642
    %v1508 = vpop.permute.xlu0 %1507
    %1510 = vset.pattern.permute.xlu0 3
    %1511 = vperm.xlu0 %1510, %v645
    %v1512 = vpop.permute.xlu0 %1511
    %1514 = vset.pattern.permute.xlu0 3
    %1515 = vperm.xlu0 %1514, %v648
    %v1516 = vpop.permute.xlu0 %1515
    %v1518 = vperm.slane %v604, 3
    %v1519 = vadd.f32 %v1488, %v1518
    %v1520 = vadd.f32 %v1492, %v1518
    %v1521 = vadd.f32 %v1496, %v1518
    %v1522 = vadd.f32 %v1500, %v1518
    %v1523 = vadd.f32 %v1504, %v1518
    %v1524 = vadd.f32 %v1508, %v1518
    %v1525 = vadd.f32 %v1512, %v1518
    %v1526 = vadd.f32 %v1516, %v1518
    %vm1527 = vcmp.gt.f32.partialorder %v1519, 0.0
    %vm1528 = vcmp.gt.f32.partialorder %v1520, 0.0
    %vm1529 = vcmp.gt.f32.partialorder %v1521, 0.0
    %vm1530 = vcmp.gt.f32.partialorder %v1522, 0.0
    %vm1531 = vcmp.gt.f32.partialorder %v1523, 0.0
    %vm1532 = vcmp.gt.f32.partialorder %v1524, 0.0
    %vm1533 = vcmp.gt.f32.partialorder %v1525, 0.0
    %vm1534 = vcmp.gt.f32.partialorder %v1526, 0.0
    %v1535 = vmul.f32 %v1519, 0.2
    %v1536 = vmul.f32 %v1520, 0.2
    %v1537 = vmul.f32 %v1521, 0.2
    %v1538 = vmul.f32 %v1522, 0.2
    %v1539 = vmul.f32 %v1523, 0.2
    %v1540 = vmul.f32 %v1524, 0.2
    %v1541 = vmul.f32 %v1525, 0.2
    %v1542 = vmul.f32 %v1526, 0.2
    %v1543 = vsel %vm1527, %v1519, %v1535
    %v1544 = vsel %vm1528, %v1520, %v1536
    %v1545 = vsel %vm1529, %v1521, %v1537
    %v1546 = vsel %vm1530, %v1522, %v1538
    %v1547 = vsel %vm1531, %v1523, %v1539
    %v1548 = vsel %vm1532, %v1524, %v1540
    %v1549 = vsel %vm1533, %v1525, %v1541
    %v1550 = vsel %vm1534, %v1526, %v1542
    %v1551 = vsel %vm479, %v1543, -1e+30
    %v1552 = vsel %vm480, %v1544, -1e+30
    %v1553 = vsel %vm481, %v1545, -1e+30
    %v1554 = vsel %vm482, %v1546, -1e+30
    %v1555 = vsel %vm483, %v1547, -1e+30
    %v1556 = vsel %vm484, %v1548, -1e+30
    %v1557 = vsel %vm485, %v1549, -1e+30
    %v1558 = vsel %vm486, %v1550, -1e+30
    %vm1559 = vcmask 519171
    %v1560 = vsel %vm1559, %v604, -inf
    %1561 = vmax.xlane.f32.xlu0 %v1560
    %v1562 = vpop.xlane.xlu0 %1561
    %v1563 = vperm.slane %v1562, 3
    %v1564 = vadd.f32 %v627, %v1563
    %v1565 = vadd.f32 %v630, %v1563
    %v1566 = vadd.f32 %v633, %v1563
    %v1567 = vadd.f32 %v636, %v1563
    %v1568 = vadd.f32 %v639, %v1563
    %v1569 = vadd.f32 %v642, %v1563
    %v1570 = vadd.f32 %v645, %v1563
    %v1571 = vadd.f32 %v648, %v1563
    %vm1572 = vcmp.gt.f32.partialorder %v1564, 0.0
    %vm1573 = vcmp.gt.f32.partialorder %v1565, 0.0
    %vm1574 = vcmp.gt.f32.partialorder %v1566, 0.0
    %vm1575 = vcmp.gt.f32.partialorder %v1567, 0.0
    %vm1576 = vcmp.gt.f32.partialorder %v1568, 0.0
    %vm1577 = vcmp.gt.f32.partialorder %v1569, 0.0
    %vm1578 = vcmp.gt.f32.partialorder %v1570, 0.0
    %vm1579 = vcmp.gt.f32.partialorder %v1571, 0.0
    %v1580 = vmul.f32 %v1564, 0.2
    %v1581 = vmul.f32 %v1565, 0.2
    %v1582 = vmul.f32 %v1566, 0.2
    %v1583 = vmul.f32 %v1567, 0.2
    %v1584 = vmul.f32 %v1568, 0.2
    %v1585 = vmul.f32 %v1569, 0.2
    %v1586 = vmul.f32 %v1570, 0.2
    %v1587 = vmul.f32 %v1571, 0.2
    %v1588 = vsel %vm1572, %v1564, %v1580
    %v1589 = vsel %vm1573, %v1565, %v1581
    %v1590 = vsel %vm1574, %v1566, %v1582
    %v1591 = vsel %vm1575, %v1567, %v1583
    %v1592 = vsel %vm1576, %v1568, %v1584
    %v1593 = vsel %vm1577, %v1569, %v1585
    %v1594 = vsel %vm1578, %v1570, %v1586
    %v1595 = vsel %vm1579, %v1571, %v1587
    %1597 = vset.pattern.permute.xlu0 3
    %1598 = vperm.xlu0 %1597, %v1588
    %v1599 = vpop.permute.xlu0 %1598
    %1602 = vset.pattern.permute.xlu0 3
    %1603 = vperm.xlu0 %1602, %v1589
    %v1604 = vpop.permute.xlu0 %1603
    %1607 = vset.pattern.permute.xlu0 3
    %1608 = vperm.xlu0 %1607, %v1590
    %v1609 = vpop.permute.xlu0 %1608
    %1612 = vset.pattern.permute.xlu0 3
    %1613 = vperm.xlu0 %1612, %v1591
    %v1614 = vpop.permute.xlu0 %1613
    %1617 = vset.pattern.permute.xlu0 3
    %1618 = vperm.xlu0 %1617, %v1592
    %v1619 = vpop.permute.xlu0 %1618
    %1622 = vset.pattern.permute.xlu0 3
    %1623 = vperm.xlu0 %1622, %v1593
    %v1624 = vpop.permute.xlu0 %1623
    %1627 = vset.pattern.permute.xlu0 3
    %1628 = vperm.xlu0 %1627, %v1594
    %v1629 = vpop.permute.xlu0 %1628
    %1632 = vset.pattern.permute.xlu0 3
    %1633 = vperm.xlu0 %1632, %v1595
    %v1634 = vpop.permute.xlu0 %1633
    %v1636 = vsub.f32 %v1551, %v1599
    %v1637 = vsub.f32 %v1552, %v1604
    %v1638 = vsub.f32 %v1553, %v1609
    %v1639 = vsub.f32 %v1554, %v1614
    %v1640 = vsub.f32 %v1555, %v1619
    %v1641 = vsub.f32 %v1556, %v1624
    %v1642 = vsub.f32 %v1557, %v1629
    %v1643 = vsub.f32 %v1558, %v1634
    %v1644 = vmul.f32 %v1636, 1.442695
    %v1645 = vpow.pop %v1644
    %v1646 = vmul.f32 %v1637, 1.442695
    %v1647 = vpow.pop %v1646
    %v1648 = vmul.f32 %v1638, 1.442695
    %v1649 = vpow.pop %v1648
    %v1650 = vmul.f32 %v1639, 1.442695
    %v1651 = vpow.pop %v1650
    %v1652 = vmul.f32 %v1640, 1.442695
    %v1653 = vpow.pop %v1652
    %v1654 = vmul.f32 %v1641, 1.442695
    %v1655 = vpow.pop %v1654
    %v1656 = vmul.f32 %v1642, 1.442695
    %v1657 = vpow.pop %v1656
    %v1658 = vmul.f32 %v1643, 1.442695
    %v1659 = vpow.pop %v1658
    %v1660 = vsel %vm832, %v1645, 0.0
    %1661 = vadd.xlane.f32.xlu0 %v1660
    %v1662 = vpop.xlane.xlu0 %1661
    %v1663 = vsel %vm832, %v1647, 0.0
    %1664 = vadd.xlane.f32.xlu0 %v1663
    %v1665 = vpop.xlane.xlu0 %1664
    %v1666 = vsel %vm832, %v1649, 0.0
    %1667 = vadd.xlane.f32.xlu0 %v1666
    %v1668 = vpop.xlane.xlu0 %1667
    %v1669 = vsel %vm832, %v1651, 0.0
    %1670 = vadd.xlane.f32.xlu0 %v1669
    %v1671 = vpop.xlane.xlu0 %1670
    %v1672 = vsel %vm832, %v1653, 0.0
    %1673 = vadd.xlane.f32.xlu0 %v1672
    %v1674 = vpop.xlane.xlu0 %1673
    %v1675 = vsel %vm832, %v1655, 0.0
    %1676 = vadd.xlane.f32.xlu0 %v1675
    %v1677 = vpop.xlane.xlu0 %1676
    %v1678 = vsel %vm832, %v1657, 0.0
    %1679 = vadd.xlane.f32.xlu0 %v1678
    %v1680 = vpop.xlane.xlu0 %1679
    %v1681 = vsel %vm832, %v1659, 0.0
    %1682 = vadd.xlane.f32.xlu0 %v1681
    %v1683 = vpop.xlane.xlu0 %1682
    %v1684 = vrcp.pop %v1662
    %v1685 = vrcp.pop %v1665
    %v1686 = vrcp.pop %v1668
    %v1687 = vrcp.pop %v1671
    %v1688 = vrcp.pop %v1674
    %v1689 = vrcp.pop %v1677
    %v1690 = vrcp.pop %v1680
    %v1691 = vrcp.pop %v1683
    %v1692 = vmul.f32 %v1645, %v1684
    %v1693 = vmul.f32 %v1647, %v1685
    %v1694 = vmul.f32 %v1649, %v1686
    %v1695 = vmul.f32 %v1651, %v1687
    %v1696 = vmul.f32 %v1653, %v1688
    %v1697 = vmul.f32 %v1655, %v1689
    %v1698 = vmul.f32 %v1657, %v1690
    %v1699 = vmul.f32 %v1659, %v1691
    %v1700 = vld [vmem:[%s6 + $0x17] sm:$0x1]
    %v1701 = vperm.slane %v1700, 0
    %v1702 = vmul.f32 %v534, %v1701
    %v1703 = vmul.f32 %v537, %v1701
    %v1704 = vmul.f32 %v540, %v1701
    %v1705 = vmul.f32 %v543, %v1701
    %v1706 = vmul.f32 %v546, %v1701
    %v1707 = vmul.f32 %v549, %v1701
    %v1708 = vmul.f32 %v552, %v1701
    %v1709 = vmul.f32 %v555, %v1701
    %v1710 = vpack.c.bf16 %v1693, %v1692
    %v1711 = vpack.c.bf16 %v1695, %v1694
    %v1712 = vpack.c.bf16 %v1697, %v1696
    %v1713 = vpack.c.bf16 %v1699, %v1698
    %v1714 = vpack.c.bf16 %v1703, %v1702
    %v1715 = vpack.c.bf16 %v1705, %v1704
    %v1716 = vpack.c.bf16 %v1707, %v1706
    %v1717 = vpack.c.bf16 %v1709, %v1708
    %v1719 = vsel %vm832, %v1710, 0
    %v1722 = vsel %vm832, %v1711, 0
    %v1725 = vsel %vm832, %v1712, 0
    %v1728 = vsel %vm832, %v1713, 0
    %1730 = vmatpush.bf16.msra.mxu0 0
    %1731 = vmatpush.bf16.msra.mxu0 0
    %1732 = vmatpush.bf16.msra.mxu0 0
    %1733 = vmatpush.bf16.msra.mxu0 0
    %1734 = vmatpush.bf16.msra.mxu0 %v1717
    %1735 = vmatpush.bf16.msra.mxu0 %v1716
    %1736 = vmatpush.bf16.msra.mxu0 %v1715
    %1737 = vmatpush.bf16.msra.mxu0 %v1714
    %1738 = vmatmul.bf16.gmra.mxu0 %v1719
    %v1739 = vpop.f32.mrf.mxu0
    %v1740 = vadd.f32 0.0, %v1739
    %v1741 = vpop.f32.mrf.mxu0
    %v1742 = vadd.f32 0.0, %v1741
    %1743 = vmatmul.bf16.gmra.mxu0 %v1722
    %v1744 = vpop.f32.mrf.mxu0
    %v1745 = vadd.f32 0.0, %v1744
    %v1746 = vpop.f32.mrf.mxu0
    %v1747 = vadd.f32 0.0, %v1746
    %1748 = vmatmul.bf16.gmra.mxu0 %v1725
    %v1749 = vpop.f32.mrf.mxu0
    %v1750 = vadd.f32 0.0, %v1749
    %v1751 = vpop.f32.mrf.mxu0
    %v1752 = vadd.f32 0.0, %v1751
    %1753 = vmatmul.bf16.gmra.mxu0 %v1728
    %v1754 = vpop.f32.mrf.mxu0
    %v1755 = vadd.f32 0.0, %v1754
    %v1756 = vpop.f32.mrf.mxu0
    %v1757 = vadd.f32 0.0, %v1756
    %1758 = vdwg.mxu0
    %v1759 = vadd.f32 %v1478, %v1740
    %v1760 = vadd.f32 %v1479, %v1742
    %v1761 = vadd.f32 %v1480, %v1745
    %v1762 = vadd.f32 %v1481, %v1747
    %v1763 = vadd.f32 %v1482, %v1750
    %v1764 = vadd.f32 %v1483, %v1752
    %v1765 = vadd.f32 %v1484, %v1755
    %v1766 = vadd.f32 %v1485, %v1757
    %v1767 = vld [vmem:[%s6 + $0x1] sm:$0x1]
    %v1768 = vperm.slane %v1767, 0
    %v1769 = vadd.f32 %v1759, %v1768
    %v1770 = vadd.f32 %v1760, %v1768
    %v1771 = vadd.f32 %v1761, %v1768
    %v1772 = vadd.f32 %v1762, %v1768
    %v1773 = vadd.f32 %v1763, %v1768
    %v1774 = vadd.f32 %v1764, %v1768
    %v1775 = vadd.f32 %v1765, %v1768
    %v1776 = vadd.f32 %v1766, %v1768
    %v1777 = vld [vmem:[%s6 + $0x2] sm:$0x1]
    %v1778 = vld [vmem:[%s6 + $0x3] sm:$0x1]
    %v1779 = vld [vmem:[%s6 + $0x4] sm:$0x1]
    %v1781 = vsel %vm832, %v45, 0
    %1783 = vmatpush.msra.mxu0 0.0
    %1784 = vmatpush.msra.mxu0 0.0
    %1785 = vmatpush.msra.mxu0 0.0
    %1786 = vmatpush.msra.mxu0 0.0
    %1787 = vmatpush.msra.mxu0 0.0
    %1788 = vmatpush.msra.mxu0 0.0
    %1789 = vmatpush.msra.mxu0 0.0
    %1790 = vmatpush.msra.mxu0 0.0
    %1791 = vmatpush.msra.mxu0 %v1776
    %1792 = vmatpush.msra.mxu0 %v1775
    %1793 = vmatpush.msra.mxu0 %v1774
    %1794 = vmatpush.msra.mxu0 %v1773
    %1795 = vmatpush.msra.mxu0 %v1772
    %1796 = vmatpush.msra.mxu0 %v1771
    %1797 = vmatpush.msra.mxu0 %v1770
    %1798 = vmatpush.msra.mxu0 %v1769
    %1799 = vmatmul.f32.gmra.mxu0 %v1781
    %v1800 = vpop.f32.mrf.mxu0
    %v1801 = vadd.f32 0.0, %v1800
    %1802 = vdwg.mxu0
    %1804 = vset.pattern.permute.xlu0 0
    %1805 = vperm.xlu0 %1804, %v54
    %v1806 = vpop.permute.xlu0 %1805
    %v1808 = vmul.f32 %v1801, %v1806
    %vm1809 = vcmask 15360
    %v1811 = vsel %vm1809, %v46, 0
    %v1814 = vsel %vm1809, %v47, 0
    %v1817 = vsel %vm1809, %v48, 0
    %v1820 = vsel %vm1809, %v49, 0
    %v1823 = vsel %vm1809, %v50, 0
    %v1826 = vsel %vm1809, %v51, 0
    %v1829 = vsel %vm1809, %v52, 0
    %v1832 = vsel %vm1809, %v53, 0
    %vm1834 = vcmask 1041408
    %v1836 = vsel %vm1834, %v1808, 0
    %1838 = vmatpush.msra.mxu0 0.0
    %1839 = vmatpush.msra.mxu0 0.0
    %1840 = vmatpush.msra.mxu0 0.0
    %1841 = vmatpush.msra.mxu0 0.0
    %1842 = vmatpush.msra.mxu0 0.0
    %1843 = vmatpush.msra.mxu0 0.0
    %1844 = vmatpush.msra.mxu0 0.0
    %1845 = vmatpush.msra.mxu0 0.0
    %1846 = vmatpush.msra.mxu0 0.0
    %1847 = vmatpush.msra.mxu0 0.0
    %1848 = vmatpush.msra.mxu0 0.0
    %1849 = vmatpush.msra.mxu0 0.0
    %1850 = vmatpush.msra.mxu0 0.0
    %1851 = vmatpush.msra.mxu0 0.0
    %1852 = vmatpush.msra.mxu0 0.0
    %1853 = vmatpush.msra.mxu0 %v1836
    %1854 = vmatmul.f32.gmra.mxu0 %v1811
    %v1855 = vpop.f32.mrf.mxu0
    %v1856 = vadd.f32 0.0, %v1855
    %1857 = vmatmul.f32.gmra.mxu0 %v1814
    %v1858 = vpop.f32.mrf.mxu0
    %v1859 = vadd.f32 0.0, %v1858
    %1860 = vmatmul.f32.gmra.mxu0 %v1817
    %v1861 = vpop.f32.mrf.mxu0
    %v1862 = vadd.f32 0.0, %v1861
    %1863 = vmatmul.f32.gmra.mxu0 %v1820
    %v1864 = vpop.f32.mrf.mxu0
    %v1865 = vadd.f32 0.0, %v1864
    %1866 = vmatmul.f32.gmra.mxu0 %v1823
    %v1867 = vpop.f32.mrf.mxu0
    %v1868 = vadd.f32 0.0, %v1867
    %1869 = vmatmul.f32.gmra.mxu0 %v1826
    %v1870 = vpop.f32.mrf.mxu0
    %v1871 = vadd.f32 0.0, %v1870
    %1872 = vmatmul.f32.gmra.mxu0 %v1829
    %v1873 = vpop.f32.mrf.mxu0
    %v1874 = vadd.f32 0.0, %v1873
    %1875 = vmatmul.f32.gmra.mxu0 %v1832
    %v1876 = vpop.f32.mrf.mxu0
    %v1877 = vadd.f32 0.0, %v1876
    %1878 = vdwg.mxu0
    %v1879 = vperm.slane %v1779, 0
    %v1880 = vmul.f32 %v1879, %v1856
    %v1881 = vmul.f32 %v1879, %v1859
    %v1882 = vmul.f32 %v1879, %v1862
    %v1883 = vmul.f32 %v1879, %v1865
    %v1884 = vmul.f32 %v1879, %v1868
    %v1885 = vmul.f32 %v1879, %v1871
    %v1886 = vmul.f32 %v1879, %v1874
    %v1887 = vmul.f32 %v1879, %v1877
    %v1888 = vsub.f32 %v1769, %v1880
    %v1889 = vsub.f32 %v1770, %v1881
    %v1890 = vsub.f32 %v1771, %v1882
    %v1891 = vsub.f32 %v1772, %v1883
    %v1892 = vsub.f32 %v1773, %v1884
    %v1893 = vsub.f32 %v1774, %v1885
    %v1894 = vsub.f32 %v1775, %v1886
    %v1895 = vsub.f32 %v1776, %v1887
    %v1896 = vmul.f32 %v1888, %v1888
    %v1897 = vmul.f32 %v1889, %v1889
    %v1898 = vmul.f32 %v1890, %v1890
    %v1899 = vmul.f32 %v1891, %v1891
    %v1900 = vmul.f32 %v1892, %v1892
    %v1901 = vmul.f32 %v1893, %v1893
    %v1902 = vmul.f32 %v1894, %v1894
    %v1903 = vmul.f32 %v1895, %v1895
    %1904 = vmatpush.msra.mxu0 0.0
    %1905 = vmatpush.msra.mxu0 0.0
    %1906 = vmatpush.msra.mxu0 0.0
    %1907 = vmatpush.msra.mxu0 0.0
    %1908 = vmatpush.msra.mxu0 0.0
    %1909 = vmatpush.msra.mxu0 0.0
    %1910 = vmatpush.msra.mxu0 0.0
    %1911 = vmatpush.msra.mxu0 0.0
    %1912 = vmatpush.msra.mxu0 %v1903
    %1913 = vmatpush.msra.mxu0 %v1902
    %1914 = vmatpush.msra.mxu0 %v1901
    %1915 = vmatpush.msra.mxu0 %v1900
    %1916 = vmatpush.msra.mxu0 %v1899
    %1917 = vmatpush.msra.mxu0 %v1898
    %1918 = vmatpush.msra.mxu0 %v1897
    %1919 = vmatpush.msra.mxu0 %v1896
    %1920 = vmatmul.f32.gmra.mxu0 %v1781
    %v1921 = vpop.f32.mrf.mxu0
    %v1922 = vadd.f32 0.0, %v1921
    %1923 = vdwg.mxu0
    %v1924 = vmul.f32 %v1922, %v1806
    %v1925 = vadd.f32 %v1924, 1e-05
    %v1926 = vrsqrt.pop %v1925
    %v1927 = vmul.f32 %v1926, %v1925
    %v1928 = vmul.f32 %v1927, %v1926
    %v1929 = vmul.f32 0.5, %v1928
    %v1930 = vsub.f32 1.5, %v1929
    %v1931 = vmul.f32 %v1926, %v1930
    %vm1932 = vweird.f32 %v1925
    %vm1933 = vweird.f32 %v1926
    %vm1934 = vmor %vm1932, %vm1933
    %v1935 = vsel %vm1934, %v1926, %v1931
    %v1936 = vperm.slane %v1777, 0
    %v1937 = vmul.f32 %v1936, %v1888
    %v1938 = vmul.f32 %v1936, %v1889
    %v1939 = vmul.f32 %v1936, %v1890
    %v1940 = vmul.f32 %v1936, %v1891
    %v1941 = vmul.f32 %v1936, %v1892
    %v1942 = vmul.f32 %v1936, %v1893
    %v1943 = vmul.f32 %v1936, %v1894
    %v1944 = vmul.f32 %v1936, %v1895
    %v1946 = vsel %vm1834, %v1935, 0
    %1948 = vmatpush.msra.mxu0 0.0
    %1949 = vmatpush.msra.mxu0 0.0
    %1950 = vmatpush.msra.mxu0 0.0
    %1951 = vmatpush.msra.mxu0 0.0
    %1952 = vmatpush.msra.mxu0 0.0
    %1953 = vmatpush.msra.mxu0 0.0
    %1954 = vmatpush.msra.mxu0 0.0
    %1955 = vmatpush.msra.mxu0 0.0
    %1956 = vmatpush.msra.mxu0 0.0
    %1957 = vmatpush.msra.mxu0 0.0
    %1958 = vmatpush.msra.mxu0 0.0
    %1959 = vmatpush.msra.mxu0 0.0
    %1960 = vmatpush.msra.mxu0 0.0
    %1961 = vmatpush.msra.mxu0 0.0
    %1962 = vmatpush.msra.mxu0 0.0
    %1963 = vmatpush.msra.mxu0 %v1946
    %1964 = vmatmul.f32.gmra.mxu0 %v1811
    %v1965 = vpop.f32.mrf.mxu0
    %v1966 = vadd.f32 0.0, %v1965
    %1967 = vmatmul.f32.gmra.mxu0 %v1814
    %v1968 = vpop.f32.mrf.mxu0
    %v1969 = vadd.f32 0.0, %v1968
    %1970 = vmatmul.f32.gmra.mxu0 %v1817
    %v1971 = vpop.f32.mrf.mxu0
    %v1972 = vadd.f32 0.0, %v1971
    %1973 = vmatmul.f32.gmra.mxu0 %v1820
    %v1974 = vpop.f32.mrf.mxu0
    %v1975 = vadd.f32 0.0, %v1974
    %1976 = vmatmul.f32.gmra.mxu0 %v1823
    %v1977 = vpop.f32.mrf.mxu0
    %v1978 = vadd.f32 0.0, %v1977
    %1979 = vmatmul.f32.gmra.mxu0 %v1826
    %v1980 = vpop.f32.mrf.mxu0
    %v1981 = vadd.f32 0.0, %v1980
    %1982 = vmatmul.f32.gmra.mxu0 %v1829
    %v1983 = vpop.f32.mrf.mxu0
    %v1984 = vadd.f32 0.0, %v1983
    %1985 = vmatmul.f32.gmra.mxu0 %v1832
    %v1986 = vpop.f32.mrf.mxu0
    %v1987 = vadd.f32 0.0, %v1986
    %1988 = vdwg.mxu0
    %v1989 = vmul.f32 %v1937, %v1966
    %v1990 = vmul.f32 %v1938, %v1969
    %v1991 = vmul.f32 %v1939, %v1972
    %v1992 = vmul.f32 %v1940, %v1975
    %v1993 = vmul.f32 %v1941, %v1978
    %v1994 = vmul.f32 %v1942, %v1981
    %v1995 = vmul.f32 %v1943, %v1984
    %v1996 = vmul.f32 %v1944, %v1987
    %v1997 = vperm.slane %v1778, 0
    %v1998 = vadd.f32 %v1989, %v1997
    %v1999 = vadd.f32 %v1990, %v1997
    %v2000 = vadd.f32 %v1991, %v1997
    %v2001 = vadd.f32 %v1992, %v1997
    %v2002 = vadd.f32 %v1993, %v1997
    %v2003 = vadd.f32 %v1994, %v1997
    %v2004 = vadd.f32 %v1995, %v1997
    %v2005 = vadd.f32 %v1996, %v1997
    %v2006 = vmax.f32 %v1998, 0.0
    %v2007 = vmax.f32 %v1999, 0.0
    %v2008 = vmax.f32 %v2000, 0.0
    %v2009 = vmax.f32 %v2001, 0.0
    %v2010 = vmax.f32 %v2002, 0.0
    %v2011 = vmax.f32 %v2003, 0.0
    %v2012 = vmax.f32 %v2004, 0.0
    %v2013 = vmax.f32 %v2005, 0.0
    %v2022 = vunpack.c.l.b16 %v37
    %v2023 = vunpack.c.l.b16 %v38
    %v2024 = vunpack.c.l.b16 %v39
    %v2025 = vunpack.c.l.b16 %v40
    %v2026 = vunpack.c.l.b16 %v41
    %v2027 = vunpack.c.l.b16 %v42
    %v2028 = vunpack.c.l.b16 %v43
    %v2029 = vunpack.c.l.b16 %v44
    %v2030 = vpack.c.b16 %v2023, %v2022
    %v2031 = vpack.c.b16 %v2025, %v2024
    %v2032 = vpack.c.b16 %v2027, %v2026
    %v2033 = vpack.c.b16 %v2029, %v2028
    %v2035 = vsel %vm832, %v2030, 0
    %v2038 = vsel %vm832, %v2031, 0
    %v2041 = vsel %vm832, %v2032, 0
    %v2044 = vsel %vm832, %v2033, 0
    %2046 = vmatpush.bf16.msra.mxu0 0
    %2047 = vmatpush.bf16.msra.mxu0 0
    %2048 = vmatpush.bf16.msra.mxu0 0
    %2049 = vmatpush.bf16.msra.mxu0 0
    %2050 = vmatpush.bf16.msra.mxu0 1065369472
    %2051 = vmatpush.bf16.msra.mxu0 1065369472
    %2052 = vmatpush.bf16.msra.mxu0 1065369472
    %2053 = vmatpush.bf16.msra.mxu0 1065369472
    %2054 = vmatmul.bf16.gmra.mxu0 %v2035
    %v2055 = vpop.f32.mrf.mxu0
    %v2056 = vadd.f32 0.0, %v2055
    %v2057 = vpop.f32.mrf.mxu0
    %v2058 = vadd.f32 0.0, %v2057
    %2059 = vmatmul.bf16.gmra.mxu0 %v2038
    %v2060 = vpop.f32.mrf.mxu0
    %v2061 = vadd.f32 0.0, %v2060
    %v2062 = vpop.f32.mrf.mxu0
    %v2063 = vadd.f32 0.0, %v2062
    %2064 = vmatmul.bf16.gmra.mxu0 %v2041
    %v2065 = vpop.f32.mrf.mxu0
    %v2066 = vadd.f32 0.0, %v2065
    %v2067 = vpop.f32.mrf.mxu0
    %v2068 = vadd.f32 0.0, %v2067
    %2069 = vmatmul.bf16.gmra.mxu0 %v2044
    %v2070 = vpop.f32.mrf.mxu0
    %v2071 = vadd.f32 0.0, %v2070
    %v2072 = vpop.f32.mrf.mxu0
    %v2073 = vadd.f32 0.0, %v2072
    %2074 = vdwg.mxu0
    %vm2075 = vcmp.gt.f32.partialorder %v2056, 0.0
    %vm2076 = vcmp.gt.f32.partialorder %v2058, 0.0
    %vm2077 = vcmp.gt.f32.partialorder %v2061, 0.0
    %vm2078 = vcmp.gt.f32.partialorder %v2063, 0.0
    %vm2079 = vcmp.gt.f32.partialorder %v2066, 0.0
    %vm2080 = vcmp.gt.f32.partialorder %v2068, 0.0
    %vm2081 = vcmp.gt.f32.partialorder %v2071, 0.0
    %vm2082 = vcmp.gt.f32.partialorder %v2073, 0.0
    %v2083 = vrsqrt.pop %v2056
    %v2084 = vmul.f32 %v2083, %v2056
    %v2085 = vmul.f32 %v2084, %v2083
    %v2086 = vmul.f32 0.5, %v2085
    %v2087 = vsub.f32 1.5, %v2086
    %v2088 = vmul.f32 %v2083, %v2087
    %vm2089 = vweird.f32 %v2056
    %vm2090 = vweird.f32 %v2083
    %vm2091 = vmor %vm2089, %vm2090
    %v2092 = vsel %vm2091, %v2083, %v2088
    %v2093 = vrsqrt.pop %v2058
    %v2094 = vmul.f32 %v2093, %v2058
    %v2095 = vmul.f32 %v2094, %v2093
    %v2096 = vmul.f32 0.5, %v2095
    %v2097 = vsub.f32 1.5, %v2096
    %v2098 = vmul.f32 %v2093, %v2097
    %vm2099 = vweird.f32 %v2058
    %vm2100 = vweird.f32 %v2093
    %vm2101 = vmor %vm2099, %vm2100
    %v2102 = vsel %vm2101, %v2093, %v2098
    %v2103 = vrsqrt.pop %v2061
    %v2104 = vmul.f32 %v2103, %v2061
    %v2105 = vmul.f32 %v2104, %v2103
    %v2106 = vmul.f32 0.5, %v2105
    %v2107 = vsub.f32 1.5, %v2106
    %v2108 = vmul.f32 %v2103, %v2107
    %vm2109 = vweird.f32 %v2061
    %vm2110 = vweird.f32 %v2103
    %vm2111 = vmor %vm2109, %vm2110
    %v2112 = vsel %vm2111, %v2103, %v2108
    %v2113 = vrsqrt.pop %v2063
    %v2114 = vmul.f32 %v2113, %v2063
    %v2115 = vmul.f32 %v2114, %v2113
    %v2116 = vmul.f32 0.5, %v2115
    %v2117 = vsub.f32 1.5, %v2116
    %v2118 = vmul.f32 %v2113, %v2117
    %vm2119 = vweird.f32 %v2063
    %vm2120 = vweird.f32 %v2113
    %vm2121 = vmor %vm2119, %vm2120
    %v2122 = vsel %vm2121, %v2113, %v2118
    %v2123 = vrsqrt.pop %v2066
    %v2124 = vmul.f32 %v2123, %v2066
    %v2125 = vmul.f32 %v2124, %v2123
    %v2126 = vmul.f32 0.5, %v2125
    %v2127 = vsub.f32 1.5, %v2126
    %v2128 = vmul.f32 %v2123, %v2127
    %vm2129 = vweird.f32 %v2066
    %vm2130 = vweird.f32 %v2123
    %vm2131 = vmor %vm2129, %vm2130
    %v2132 = vsel %vm2131, %v2123, %v2128
    %v2133 = vrsqrt.pop %v2068
    %v2134 = vmul.f32 %v2133, %v2068
    %v2135 = vmul.f32 %v2134, %v2133
    %v2136 = vmul.f32 0.5, %v2135
    %v2137 = vsub.f32 1.5, %v2136
    %v2138 = vmul.f32 %v2133, %v2137
    %vm2139 = vweird.f32 %v2068
    %vm2140 = vweird.f32 %v2133
    %vm2141 = vmor %vm2139, %vm2140
    %v2142 = vsel %vm2141, %v2133, %v2138
    %v2143 = vrsqrt.pop %v2071
    %v2144 = vmul.f32 %v2143, %v2071
    %v2145 = vmul.f32 %v2144, %v2143
    %v2146 = vmul.f32 0.5, %v2145
    %v2147 = vsub.f32 1.5, %v2146
    %v2148 = vmul.f32 %v2143, %v2147
    %vm2149 = vweird.f32 %v2071
    %vm2150 = vweird.f32 %v2143
    %vm2151 = vmor %vm2149, %vm2150
    %v2152 = vsel %vm2151, %v2143, %v2148
    %v2153 = vrsqrt.pop %v2073
    %v2154 = vmul.f32 %v2153, %v2073
    %v2155 = vmul.f32 %v2154, %v2153
    %v2156 = vmul.f32 0.5, %v2155
    %v2157 = vsub.f32 1.5, %v2156
    %v2158 = vmul.f32 %v2153, %v2157
    %vm2159 = vweird.f32 %v2073
    %vm2160 = vweird.f32 %v2153
    %vm2161 = vmor %vm2159, %vm2160
    %v2162 = vsel %vm2161, %v2153, %v2158
    %v2163 = vsel %vm2075, %v2092, 0.0
    %v2164 = vsel %vm2076, %v2102, 0.0
    %v2165 = vsel %vm2077, %v2112, 0.0
    %v2166 = vsel %vm2078, %v2122, 0.0
    %v2167 = vsel %vm2079, %v2132, 0.0
    %v2168 = vsel %vm2080, %v2142, 0.0
    %v2169 = vsel %vm2081, %v2152, 0.0
    %v2170 = vsel %vm2082, %v2162, 0.0
    %2172 = vset.pattern.permute.xlu0 0
    %2173 = vperm.xlu0 %2172, %v2163
    %v2174 = vpop.permute.xlu0 %2173
    %2177 = vset.pattern.permute.xlu0 0
    %2178 = vperm.xlu0 %2177, %v2164
    %v2179 = vpop.permute.xlu0 %2178
    %2182 = vset.pattern.permute.xlu0 0
    %2183 = vperm.xlu0 %2182, %v2165
    %v2184 = vpop.permute.xlu0 %2183
    %2187 = vset.pattern.permute.xlu0 0
    %2188 = vperm.xlu0 %2187, %v2166
    %v2189 = vpop.permute.xlu0 %2188
    %2192 = vset.pattern.permute.xlu0 0
    %2193 = vperm.xlu0 %2192, %v2167
    %v2194 = vpop.permute.xlu0 %2193
    %2197 = vset.pattern.permute.xlu0 0
    %2198 = vperm.xlu0 %2197, %v2168
    %v2199 = vpop.permute.xlu0 %2198
    %2202 = vset.pattern.permute.xlu0 0
    %2203 = vperm.xlu0 %2202, %v2169
    %v2204 = vpop.permute.xlu0 %2203
    %2207 = vset.pattern.permute.xlu0 0
    %2208 = vperm.xlu0 %2207, %v2170
    %v2209 = vpop.permute.xlu0 %2208
    %v2211 = vmul.f32 %v2174, %v2006
    %v2212 = vmul.f32 %v2179, %v2007
    %v2213 = vmul.f32 %v2184, %v2008
    %v2214 = vmul.f32 %v2189, %v2009
    %v2215 = vmul.f32 %v2194, %v2010
    %v2216 = vmul.f32 %v2199, %v2011
    %v2217 = vmul.f32 %v2204, %v2012
    %v2218 = vmul.f32 %v2209, %v2013
    %v2219 = vpack.c.bf16 %v2212, %v2211
    %v2220 = vpack.c.bf16 %v2214, %v2213
    %v2221 = vpack.c.bf16 %v2216, %v2215
    %v2222 = vpack.c.bf16 %v2218, %v2217
    %2223 = vmatpush.bf16.msra.mxu0 0
    %2224 = vmatpush.bf16.msra.mxu0 0
    %2225 = vmatpush.bf16.msra.mxu0 0
    %2226 = vmatpush.bf16.msra.mxu0 0
    %2227 = vmatpush.bf16.msra.mxu0 %v2222
    %2228 = vmatpush.bf16.msra.mxu0 %v2221
    %2229 = vmatpush.bf16.msra.mxu0 %v2220
    %2230 = vmatpush.bf16.msra.mxu0 %v2219
    %2231 = vmatmul.bf16.gmra.mxu0 %v2035
    %v2232 = vpop.f32.mrf.mxu0
    %v2233 = vadd.f32 0.0, %v2232
    %v2234 = vpop.f32.mrf.mxu0
    %v2235 = vadd.f32 0.0, %v2234
    %2236 = vmatmul.bf16.gmra.mxu0 %v2038
    %v2237 = vpop.f32.mrf.mxu0
    %v2238 = vadd.f32 0.0, %v2237
    %v2239 = vpop.f32.mrf.mxu0
    %v2240 = vadd.f32 0.0, %v2239
    %2241 = vmatmul.bf16.gmra.mxu0 %v2041
    %v2242 = vpop.f32.mrf.mxu0
    %v2243 = vadd.f32 0.0, %v2242
    %v2244 = vpop.f32.mrf.mxu0
    %v2245 = vadd.f32 0.0, %v2244
    %2246 = vmatmul.bf16.gmra.mxu0 %v2044
    %v2247 = vpop.f32.mrf.mxu0
    %v2248 = vadd.f32 0.0, %v2247
    %v2249 = vpop.f32.mrf.mxu0
    %v2250 = vadd.f32 0.0, %v2249
    %2251 = vdwg.mxu0
    %v2252 = vmul.f32 %v2174, %v2233
    %v2253 = vmul.f32 %v2179, %v2235
    %v2254 = vmul.f32 %v2184, %v2238
    %v2255 = vmul.f32 %v2189, %v2240
    %v2256 = vmul.f32 %v2194, %v2243
    %v2257 = vmul.f32 %v2199, %v2245
    %v2258 = vmul.f32 %v2204, %v2248
    %v2259 = vmul.f32 %v2209, %v2250
    %v2260 = vmul.f32 %v2174, %v2252
    %v2261 = vmul.f32 %v2179, %v2253
    %v2262 = vmul.f32 %v2184, %v2254
    %v2263 = vmul.f32 %v2189, %v2255
    %v2264 = vmul.f32 %v2194, %v2256
    %v2265 = vmul.f32 %v2199, %v2257
    %v2266 = vmul.f32 %v2204, %v2258
    %v2267 = vmul.f32 %v2209, %v2259
    %v2268 = vpack.c.bf16 %v2261, %v2260
    %v2269 = vpack.c.bf16 %v2263, %v2262
    %v2270 = vpack.c.bf16 %v2265, %v2264
    %v2271 = vpack.c.bf16 %v2267, %v2266
    %2272 = vmatpush.bf16.msra.mxu0 0
    %2273 = vmatpush.bf16.msra.mxu0 0
    %2274 = vmatpush.bf16.msra.mxu0 0
    %2275 = vmatpush.bf16.msra.mxu0 0
    %2276 = vmatpush.bf16.msra.mxu0 %v2271
    %2277 = vmatpush.bf16.msra.mxu0 %v2270
    %2278 = vmatpush.bf16.msra.mxu0 %v2269
    %2279 = vmatpush.bf16.msra.mxu0 %v2268
    %2280 = vmatmul.bf16.gmra.mxu0 %v2035
    %v2281 = vpop.f32.mrf.mxu0
    %v2282 = vadd.f32 0.0, %v2281
    %v2283 = vpop.f32.mrf.mxu0
    %v2284 = vadd.f32 0.0, %v2283
    %2285 = vmatmul.bf16.gmra.mxu0 %v2038
    %v2286 = vpop.f32.mrf.mxu0
    %v2287 = vadd.f32 0.0, %v2286
    %v2288 = vpop.f32.mrf.mxu0
    %v2289 = vadd.f32 0.0, %v2288
    %2290 = vmatmul.bf16.gmra.mxu0 %v2041
    %v2291 = vpop.f32.mrf.mxu0
    %v2292 = vadd.f32 0.0, %v2291
    %v2293 = vpop.f32.mrf.mxu0
    %v2294 = vadd.f32 0.0, %v2293
    %2295 = vmatmul.bf16.gmra.mxu0 %v2044
    %v2296 = vpop.f32.mrf.mxu0
    %v2297 = vadd.f32 0.0, %v2296
    %v2298 = vpop.f32.mrf.mxu0
    %v2299 = vadd.f32 0.0, %v2298
    %2300 = vdwg.mxu0
    %v2301 = vmul.f32 %v2174, %v2282
    %v2302 = vmul.f32 %v2179, %v2284
    %v2303 = vmul.f32 %v2184, %v2287
    %v2304 = vmul.f32 %v2189, %v2289
    %v2305 = vmul.f32 %v2194, %v2292
    %v2306 = vmul.f32 %v2199, %v2294
    %v2307 = vmul.f32 %v2204, %v2297
    %v2308 = vmul.f32 %v2209, %v2299
    %v2309 = vmul.f32 %v2174, %v2301
    %v2310 = vmul.f32 %v2179, %v2302
    %v2311 = vmul.f32 %v2184, %v2303
    %v2312 = vmul.f32 %v2189, %v2304
    %v2313 = vmul.f32 %v2194, %v2305
    %v2314 = vmul.f32 %v2199, %v2306
    %v2315 = vmul.f32 %v2204, %v2307
    %v2316 = vmul.f32 %v2209, %v2308
    %v2317 = vpack.c.bf16 %v2310, %v2309
    %v2318 = vpack.c.bf16 %v2312, %v2311
    %v2319 = vpack.c.bf16 %v2314, %v2313
    %v2320 = vpack.c.bf16 %v2316, %v2315
    %2321 = vmatpush.bf16.msra.mxu0 0
    %2322 = vmatpush.bf16.msra.mxu0 0
    %2323 = vmatpush.bf16.msra.mxu0 0
    %2324 = vmatpush.bf16.msra.mxu0 0
    %2325 = vmatpush.bf16.msra.mxu0 %v2320
    %2326 = vmatpush.bf16.msra.mxu0 %v2319
    %2327 = vmatpush.bf16.msra.mxu0 %v2318
    %2328 = vmatpush.bf16.msra.mxu0 %v2317
    %2329 = vmatmul.bf16.gmra.mxu0 %v2035
    %v2330 = vpop.f32.mrf.mxu0
    %v2331 = vadd.f32 0.0, %v2330
    %v2332 = vpop.f32.mrf.mxu0
    %v2333 = vadd.f32 0.0, %v2332
    %2334 = vmatmul.bf16.gmra.mxu0 %v2038
    %v2335 = vpop.f32.mrf.mxu0
    %v2336 = vadd.f32 0.0, %v2335
    %v2337 = vpop.f32.mrf.mxu0
    %v2338 = vadd.f32 0.0, %v2337
    %2339 = vmatmul.bf16.gmra.mxu0 %v2041
    %v2340 = vpop.f32.mrf.mxu0
    %v2341 = vadd.f32 0.0, %v2340
    %v2342 = vpop.f32.mrf.mxu0
    %v2343 = vadd.f32 0.0, %v2342
    %2344 = vmatmul.bf16.gmra.mxu0 %v2044
    %v2345 = vpop.f32.mrf.mxu0
    %v2346 = vadd.f32 0.0, %v2345
    %v2347 = vpop.f32.mrf.mxu0
    %v2348 = vadd.f32 0.0, %v2347
    %2349 = vdwg.mxu0
    %v2350 = vmul.f32 %v2174, %v2331
    %v2351 = vmul.f32 %v2179, %v2333
    %v2352 = vmul.f32 %v2184, %v2336
    %v2353 = vmul.f32 %v2189, %v2338
    %v2354 = vmul.f32 %v2194, %v2341
    %v2355 = vmul.f32 %v2199, %v2343
    %v2356 = vmul.f32 %v2204, %v2346
    %v2357 = vmul.f32 %v2209, %v2348
    %2366 = vrot.lane.b32.xlu0 %v2252, 32
    %v2367 = vpop.permute.xlu0 %2366
    %2368 = vrot.lane.b32.xlu0 %v2253, 32
    %v2369 = vpop.permute.xlu0 %2368
    %2370 = vrot.lane.b32.xlu0 %v2254, 32
    %v2371 = vpop.permute.xlu0 %2370
    %2372 = vrot.lane.b32.xlu0 %v2255, 32
    %v2373 = vpop.permute.xlu0 %2372
    %2374 = vrot.lane.b32.xlu0 %v2256, 32
    %v2375 = vpop.permute.xlu0 %2374
    %2376 = vrot.lane.b32.xlu0 %v2257, 32
    %v2377 = vpop.permute.xlu0 %2376
    %2378 = vrot.lane.b32.xlu0 %v2258, 32
    %v2379 = vpop.permute.xlu0 %2378
    %2380 = vrot.lane.b32.xlu0 %v2259, 32
    %v2381 = vpop.permute.xlu0 %2380
    %2398 = vrot.lane.b32.xlu0 %v2301, 64
    %v2399 = vpop.permute.xlu0 %2398
    %2400 = vrot.lane.b32.xlu0 %v2302, 64
    %v2401 = vpop.permute.xlu0 %2400
    %2402 = vrot.lane.b32.xlu0 %v2303, 64
    %v2403 = vpop.permute.xlu0 %2402
    %2404 = vrot.lane.b32.xlu0 %v2304, 64
    %v2405 = vpop.permute.xlu0 %2404
    %2406 = vrot.lane.b32.xlu0 %v2305, 64
    %v2407 = vpop.permute.xlu0 %2406
    %2408 = vrot.lane.b32.xlu0 %v2306, 64
    %v2409 = vpop.permute.xlu0 %2408
    %2410 = vrot.lane.b32.xlu0 %v2307, 64
    %v2411 = vpop.permute.xlu0 %2410
    %2412 = vrot.lane.b32.xlu0 %v2308, 64
    %v2413 = vpop.permute.xlu0 %2412
    %2430 = vrot.lane.b32.xlu0 %v2350, 96
    %v2431 = vpop.permute.xlu0 %2430
    %2432 = vrot.lane.b32.xlu0 %v2351, 96
    %v2433 = vpop.permute.xlu0 %2432
    %2434 = vrot.lane.b32.xlu0 %v2352, 96
    %v2435 = vpop.permute.xlu0 %2434
    %2436 = vrot.lane.b32.xlu0 %v2353, 96
    %v2437 = vpop.permute.xlu0 %2436
    %2438 = vrot.lane.b32.xlu0 %v2354, 96
    %v2439 = vpop.permute.xlu0 %2438
    %2440 = vrot.lane.b32.xlu0 %v2355, 96
    %v2441 = vpop.permute.xlu0 %2440
    %2442 = vrot.lane.b32.xlu0 %v2356, 96
    %v2443 = vpop.permute.xlu0 %2442
    %2444 = vrot.lane.b32.xlu0 %v2357, 96
    %v2445 = vpop.permute.xlu0 %2444
    %v2454 = vsel %vm491, %v2006, %v2367
    %v2455 = vsel %vm491, %v2007, %v2369
    %v2456 = vsel %vm491, %v2008, %v2371
    %v2457 = vsel %vm491, %v2009, %v2373
    %v2458 = vsel %vm491, %v2010, %v2375
    %v2459 = vsel %vm491, %v2011, %v2377
    %v2460 = vsel %vm491, %v2012, %v2379
    %v2461 = vsel %vm491, %v2013, %v2381
    %v2462 = vsel %vm832, %v2454, %v2399
    %v2463 = vsel %vm832, %v2455, %v2401
    %v2464 = vsel %vm832, %v2456, %v2403
    %v2465 = vsel %vm832, %v2457, %v2405
    %v2466 = vsel %vm832, %v2458, %v2407
    %v2467 = vsel %vm832, %v2459, %v2409
    %v2468 = vsel %vm832, %v2460, %v2411
    %v2469 = vsel %vm832, %v2461, %v2413
    %vm2470 = vcmask 785408
    %v2471 = vsel %vm2470, %v2462, %v2431
    %v2472 = vsel %vm2470, %v2463, %v2433
    %v2473 = vsel %vm2470, %v2464, %v2435
    %v2474 = vsel %vm2470, %v2465, %v2437
    %v2475 = vsel %vm2470, %v2466, %v2439
    %v2476 = vsel %vm2470, %v2467, %v2441
    %v2477 = vsel %vm2470, %v2468, %v2443
    %v2478 = vsel %vm2470, %v2469, %v2445
    %v2479 = vld [vmem:[%s5 + $0x28] sm:$0xff]
    %v2480 = vld [vmem:[%s5 + $0x30] sm:$0xff]
    %v2481 = vld [vmem:[%s5 + $0x38] sm:$0xff]
    %v2482 = vld [vmem:[%s5 + $0x40] sm:$0xff]
    %v2483 = vld [vmem:[%s5 + $0x48] sm:$0xff]
    %v2484 = vld [vmem:[%s5 + $0x50] sm:$0xff]
    %v2485 = vld [vmem:[%s5 + $0x58] sm:$0xff]
    %v2486 = vld [vmem:[%s5 + $0x60] sm:$0xff]
    %v2487 = vld [vmem:[%s5 + $0x68] sm:$0xff]
    %v2488 = vld [vmem:[%s5 + $0x70] sm:$0xff]
    %v2489 = vld [vmem:[%s5 + $0x78] sm:$0xff]
    %v2490 = vld [vmem:[%s5 + $0x80] sm:$0xff]
    %v2491 = vld [vmem:[%s5 + $0x88] sm:$0xff]
    %v2492 = vld [vmem:[%s5 + $0x90] sm:$0xff]
    %v2493 = vld [vmem:[%s5 + $0x98] sm:$0xff]
    %v2494 = vld [vmem:[%s5 + $0xa0] sm:$0xff]
    %v2495 = vld [vmem:[%s6 + $0x5] sm:$0x1]
    %v2496 = vperm.slane %v2495, 0
    %2497 = vmatpush.msra.mxu0 %v2494
    %2498 = vmatpush.msra.mxu0 %v2493
    %2499 = vmatpush.msra.mxu0 %v2492
    %2500 = vmatpush.msra.mxu0 %v2491
    %2501 = vmatpush.msra.mxu0 %v2490
    %2502 = vmatpush.msra.mxu0 %v2489
    %2503 = vmatpush.msra.mxu0 %v2488
    %2504 = vmatpush.msra.mxu0 %v2487
    %2505 = vmatpush.msra.mxu0 %v2486
    %2506 = vmatpush.msra.mxu0 %v2485
    %2507 = vmatpush.msra.mxu0 %v2484
    %2508 = vmatpush.msra.mxu0 %v2483
    %2509 = vmatpush.msra.mxu0 %v2482
    %2510 = vmatpush.msra.mxu0 %v2481
    %2511 = vmatpush.msra.mxu0 %v2480
    %2512 = vmatpush.msra.mxu0 %v2479
    %2513 = vmatmul.f32.gmra.mxu0 %v2471
    %v2514 = vpop.f32.mrf.mxu0
    %v2515 = vadd.f32 %v2496, %v2514
    %2516 = vmatmul.f32.gmra.mxu0 %v2472
    %v2517 = vpop.f32.mrf.mxu0
    %v2518 = vadd.f32 %v2496, %v2517
    %2519 = vmatmul.f32.gmra.mxu0 %v2473
    %v2520 = vpop.f32.mrf.mxu0
    %v2521 = vadd.f32 %v2496, %v2520
    %2522 = vmatmul.f32.gmra.mxu0 %v2474
    %v2523 = vpop.f32.mrf.mxu0
    %v2524 = vadd.f32 %v2496, %v2523
    %2525 = vmatmul.f32.gmra.mxu0 %v2475
    %v2526 = vpop.f32.mrf.mxu0
    %v2527 = vadd.f32 %v2496, %v2526
    %2528 = vmatmul.f32.gmra.mxu0 %v2476
    %v2529 = vpop.f32.mrf.mxu0
    %v2530 = vadd.f32 %v2496, %v2529
    %2531 = vmatmul.f32.gmra.mxu0 %v2477
    %v2532 = vpop.f32.mrf.mxu0
    %v2533 = vadd.f32 %v2496, %v2532
    %2534 = vmatmul.f32.gmra.mxu0 %v2478
    %v2535 = vpop.f32.mrf.mxu0
    %v2536 = vadd.f32 %v2496, %v2535
    %2537 = vdwg.mxu0
    %v2538 = vld [vmem:[%s6 + $0x6] sm:$0x1]
    %v2539 = vld [vmem:[%s6 + $0x7] sm:$0x1]
    %v2540 = vld [vmem:[%s6 + $0x8] sm:$0x1]
    %2541 = vmatpush.msra.mxu0 0.0
    %2542 = vmatpush.msra.mxu0 0.0
    %2543 = vmatpush.msra.mxu0 0.0
    %2544 = vmatpush.msra.mxu0 0.0
    %2545 = vmatpush.msra.mxu0 0.0
    %2546 = vmatpush.msra.mxu0 0.0
    %2547 = vmatpush.msra.mxu0 0.0
    %2548 = vmatpush.msra.mxu0 0.0
    %2549 = vmatpush.msra.mxu0 %v2536
    %2550 = vmatpush.msra.mxu0 %v2533
    %2551 = vmatpush.msra.mxu0 %v2530
    %2552 = vmatpush.msra.mxu0 %v2527
    %2553 = vmatpush.msra.mxu0 %v2524
    %2554 = vmatpush.msra.mxu0 %v2521
    %2555 = vmatpush.msra.mxu0 %v2518
    %2556 = vmatpush.msra.mxu0 %v2515
    %2557 = vmatmul.f32.gmra.mxu0 %v1781
    %v2558 = vpop.f32.mrf.mxu0
    %v2559 = vadd.f32 0.0, %v2558
    %2560 = vdwg.mxu0
    %v2561 = vmul.f32 %v2559, %v1806
    %v2563 = vsel %vm1834, %v2561, 0
    %2565 = vmatpush.msra.mxu0 0.0
    %2566 = vmatpush.msra.mxu0 0.0
    %2567 = vmatpush.msra.mxu0 0.0
    %2568 = vmatpush.msra.mxu0 0.0
    %2569 = vmatpush.msra.mxu0 0.0
    %2570 = vmatpush.msra.mxu0 0.0
    %2571 = vmatpush.msra.mxu0 0.0
    %2572 = vmatpush.msra.mxu0 0.0
    %2573 = vmatpush.msra.mxu0 0.0
    %2574 = vmatpush.msra.mxu0 0.0
    %2575 = vmatpush.msra.mxu0 0.0
    %2576 = vmatpush.msra.mxu0 0.0
    %2577 = vmatpush.msra.mxu0 0.0
    %2578 = vmatpush.msra.mxu0 0.0
    %2579 = vmatpush.msra.mxu0 0.0
    %2580 = vmatpush.msra.mxu0 %v2563
    %2581 = vmatmul.f32.gmra.mxu0 %v1811
    %v2582 = vpop.f32.mrf.mxu0
    %v2583 = vadd.f32 0.0, %v2582
    %2584 = vmatmul.f32.gmra.mxu0 %v1814
    %v2585 = vpop.f32.mrf.mxu0
    %v2586 = vadd.f32 0.0, %v2585
    %2587 = vmatmul.f32.gmra.mxu0 %v1817
    %v2588 = vpop.f32.mrf.mxu0
    %v2589 = vadd.f32 0.0, %v2588
    %2590 = vmatmul.f32.gmra.mxu0 %v1820
    %v2591 = vpop.f32.mrf.mxu0
    %v2592 = vadd.f32 0.0, %v2591
    %2593 = vmatmul.f32.gmra.mxu0 %v1823
    %v2594 = vpop.f32.mrf.mxu0
    %v2595 = vadd.f32 0.0, %v2594
    %2596 = vmatmul.f32.gmra.mxu0 %v1826
    %v2597 = vpop.f32.mrf.mxu0
    %v2598 = vadd.f32 0.0, %v2597
    %2599 = vmatmul.f32.gmra.mxu0 %v1829
    %v2600 = vpop.f32.mrf.mxu0
    %v2601 = vadd.f32 0.0, %v2600
    %2602 = vmatmul.f32.gmra.mxu0 %v1832
    %v2603 = vpop.f32.mrf.mxu0
    %v2604 = vadd.f32 0.0, %v2603
    %2605 = vdwg.mxu0
    %v2606 = vperm.slane %v2540, 0
    %v2607 = vmul.f32 %v2606, %v2583
    %v2608 = vmul.f32 %v2606, %v2586
    %v2609 = vmul.f32 %v2606, %v2589
    %v2610 = vmul.f32 %v2606, %v2592
    %v2611 = vmul.f32 %v2606, %v2595
    %v2612 = vmul.f32 %v2606, %v2598
    %v2613 = vmul.f32 %v2606, %v2601
    %v2614 = vmul.f32 %v2606, %v2604
    %v2615 = vsub.f32 %v2515, %v2607
    %v2616 = vsub.f32 %v2518, %v2608
    %v2617 = vsub.f32 %v2521, %v2609
    %v2618 = vsub.f32 %v2524, %v2610
    %v2619 = vsub.f32 %v2527, %v2611
    %v2620 = vsub.f32 %v2530, %v2612
    %v2621 = vsub.f32 %v2533, %v2613
    %v2622 = vsub.f32 %v2536, %v2614
    %v2623 = vmul.f32 %v2615, %v2615
    %v2624 = vmul.f32 %v2616, %v2616
    %v2625 = vmul.f32 %v2617, %v2617
    %v2626 = vmul.f32 %v2618, %v2618
    %v2627 = vmul.f32 %v2619, %v2619
    %v2628 = vmul.f32 %v2620, %v2620
    %v2629 = vmul.f32 %v2621, %v2621
    %v2630 = vmul.f32 %v2622, %v2622
    %2631 = vmatpush.msra.mxu0 0.0
    %2632 = vmatpush.msra.mxu0 0.0
    %2633 = vmatpush.msra.mxu0 0.0
    %2634 = vmatpush.msra.mxu0 0.0
    %2635 = vmatpush.msra.mxu0 0.0
    %2636 = vmatpush.msra.mxu0 0.0
    %2637 = vmatpush.msra.mxu0 0.0
    %2638 = vmatpush.msra.mxu0 0.0
    %2639 = vmatpush.msra.mxu0 %v2630
    %2640 = vmatpush.msra.mxu0 %v2629
    %2641 = vmatpush.msra.mxu0 %v2628
    %2642 = vmatpush.msra.mxu0 %v2627
    %2643 = vmatpush.msra.mxu0 %v2626
    %2644 = vmatpush.msra.mxu0 %v2625
    %2645 = vmatpush.msra.mxu0 %v2624
    %2646 = vmatpush.msra.mxu0 %v2623
    %2647 = vmatmul.f32.gmra.mxu0 %v1781
    %v2648 = vpop.f32.mrf.mxu0
    %v2649 = vadd.f32 0.0, %v2648
    %2650 = vdwg.mxu0
    %v2651 = vmul.f32 %v2649, %v1806
    %v2652 = vadd.f32 %v2651, 1e-05
    %v2653 = vrsqrt.pop %v2652
    %v2654 = vmul.f32 %v2653, %v2652
    %v2655 = vmul.f32 %v2654, %v2653
    %v2656 = vmul.f32 0.5, %v2655
    %v2657 = vsub.f32 1.5, %v2656
    %v2658 = vmul.f32 %v2653, %v2657
    %vm2659 = vweird.f32 %v2652
    %vm2660 = vweird.f32 %v2653
    %vm2661 = vmor %vm2659, %vm2660
    %v2662 = vsel %vm2661, %v2653, %v2658
    %v2663 = vperm.slane %v2538, 0
    %v2664 = vmul.f32 %v2663, %v2615
    %v2665 = vmul.f32 %v2663, %v2616
    %v2666 = vmul.f32 %v2663, %v2617
    %v2667 = vmul.f32 %v2663, %v2618
    %v2668 = vmul.f32 %v2663, %v2619
    %v2669 = vmul.f32 %v2663, %v2620
    %v2670 = vmul.f32 %v2663, %v2621
    %v2671 = vmul.f32 %v2663, %v2622
    %v2673 = vsel %vm1834, %v2662, 0
    %2675 = vmatpush.msra.mxu0 0.0
    %2676 = vmatpush.msra.mxu0 0.0
    %2677 = vmatpush.msra.mxu0 0.0
    %2678 = vmatpush.msra.mxu0 0.0
    %2679 = vmatpush.msra.mxu0 0.0
    %2680 = vmatpush.msra.mxu0 0.0
    %2681 = vmatpush.msra.mxu0 0.0
    %2682 = vmatpush.msra.mxu0 0.0
    %2683 = vmatpush.msra.mxu0 0.0
    %2684 = vmatpush.msra.mxu0 0.0
    %2685 = vmatpush.msra.mxu0 0.0
    %2686 = vmatpush.msra.mxu0 0.0
    %2687 = vmatpush.msra.mxu0 0.0
    %2688 = vmatpush.msra.mxu0 0.0
    %2689 = vmatpush.msra.mxu0 0.0
    %2690 = vmatpush.msra.mxu0 %v2673
    %2691 = vmatmul.f32.gmra.mxu0 %v1811
    %v2692 = vpop.f32.mrf.mxu0
    %v2693 = vadd.f32 0.0, %v2692
    %2694 = vmatmul.f32.gmra.mxu0 %v1814
    %v2695 = vpop.f32.mrf.mxu0
    %v2696 = vadd.f32 0.0, %v2695
    %2697 = vmatmul.f32.gmra.mxu0 %v1817
    %v2698 = vpop.f32.mrf.mxu0
    %v2699 = vadd.f32 0.0, %v2698
    %2700 = vmatmul.f32.gmra.mxu0 %v1820
    %v2701 = vpop.f32.mrf.mxu0
    %v2702 = vadd.f32 0.0, %v2701
    %2703 = vmatmul.f32.gmra.mxu0 %v1823
    %v2704 = vpop.f32.mrf.mxu0
    %v2705 = vadd.f32 0.0, %v2704
    %2706 = vmatmul.f32.gmra.mxu0 %v1826
    %v2707 = vpop.f32.mrf.mxu0
    %v2708 = vadd.f32 0.0, %v2707
    %2709 = vmatmul.f32.gmra.mxu0 %v1829
    %v2710 = vpop.f32.mrf.mxu0
    %v2711 = vadd.f32 0.0, %v2710
    %2712 = vmatmul.f32.gmra.mxu0 %v1832
    %v2713 = vpop.f32.mrf.mxu0
    %v2714 = vadd.f32 0.0, %v2713
    %2715 = vdwg.mxu0
    %v2716 = vmul.f32 %v2664, %v2693
    %v2717 = vmul.f32 %v2665, %v2696
    %v2718 = vmul.f32 %v2666, %v2699
    %v2719 = vmul.f32 %v2667, %v2702
    %v2720 = vmul.f32 %v2668, %v2705
    %v2721 = vmul.f32 %v2669, %v2708
    %v2722 = vmul.f32 %v2670, %v2711
    %v2723 = vmul.f32 %v2671, %v2714
    %v2724 = vperm.slane %v2539, 0
    %v2725 = vadd.f32 %v2716, %v2724
    %v2726 = vadd.f32 %v2717, %v2724
    %v2727 = vadd.f32 %v2718, %v2724
    %v2728 = vadd.f32 %v2719, %v2724
    %v2729 = vadd.f32 %v2720, %v2724
    %v2730 = vadd.f32 %v2721, %v2724
    %v2731 = vadd.f32 %v2722, %v2724
    %v2732 = vadd.f32 %v2723, %v2724
    %v2733 = vmax.f32 %v2725, 0.0
    %v2734 = vmax.f32 %v2726, 0.0
    %v2735 = vmax.f32 %v2727, 0.0
    %v2736 = vmax.f32 %v2728, 0.0
    %v2737 = vmax.f32 %v2729, 0.0
    %v2738 = vmax.f32 %v2730, 0.0
    %v2739 = vmax.f32 %v2731, 0.0
    %v2740 = vmax.f32 %v2732, 0.0
    %v2741 = vpack.c.bf16 %v2734, %v2733
    %v2742 = vpack.c.bf16 %v2736, %v2735
    %v2743 = vpack.c.bf16 %v2738, %v2737
    %v2744 = vpack.c.bf16 %v2740, %v2739
    %2745 = vmatpush.bf16.msra.mxu0 0
    %2746 = vmatpush.bf16.msra.mxu0 0
    %2747 = vmatpush.bf16.msra.mxu0 0
    %2748 = vmatpush.bf16.msra.mxu0 0
    %2749 = vmatpush.bf16.msra.mxu0 %v2744
    %2750 = vmatpush.bf16.msra.mxu0 %v2743
    %2751 = vmatpush.bf16.msra.mxu0 %v2742
    %2752 = vmatpush.bf16.msra.mxu0 %v2741
    %2753 = vmatmul.bf16.gmra.mxu0 %v2035
    %v2754 = vpop.f32.mrf.mxu0
    %v2755 = vadd.f32 0.0, %v2754
    %v2756 = vpop.f32.mrf.mxu0
    %v2757 = vadd.f32 0.0, %v2756
    %2758 = vmatmul.bf16.gmra.mxu0 %v2038
    %v2759 = vpop.f32.mrf.mxu0
    %v2760 = vadd.f32 0.0, %v2759
    %v2761 = vpop.f32.mrf.mxu0
    %v2762 = vadd.f32 0.0, %v2761
    %2763 = vmatmul.bf16.gmra.mxu0 %v2041
    %v2764 = vpop.f32.mrf.mxu0
    %v2765 = vadd.f32 0.0, %v2764
    %v2766 = vpop.f32.mrf.mxu0
    %v2767 = vadd.f32 0.0, %v2766
    %2768 = vmatmul.bf16.gmra.mxu0 %v2044
    %v2769 = vpop.f32.mrf.mxu0
    %v2770 = vadd.f32 0.0, %v2769
    %v2771 = vpop.f32.mrf.mxu0
    %v2772 = vadd.f32 0.0, %v2771
    %2773 = vdwg.mxu0
    %2782 = vrot.lane.b32.xlu0 %v2733, 32
    %v2783 = vpop.permute.xlu0 %2782
    %2784 = vrot.lane.b32.xlu0 %v2734, 32
    %v2785 = vpop.permute.xlu0 %2784
    %2786 = vrot.lane.b32.xlu0 %v2735, 32
    %v2787 = vpop.permute.xlu0 %2786
    %2788 = vrot.lane.b32.xlu0 %v2736, 32
    %v2789 = vpop.permute.xlu0 %2788
    %2790 = vrot.lane.b32.xlu0 %v2737, 32
    %v2791 = vpop.permute.xlu0 %2790
    %2792 = vrot.lane.b32.xlu0 %v2738, 32
    %v2793 = vpop.permute.xlu0 %2792
    %2794 = vrot.lane.b32.xlu0 %v2739, 32
    %v2795 = vpop.permute.xlu0 %2794
    %2796 = vrot.lane.b32.xlu0 %v2740, 32
    %v2797 = vpop.permute.xlu0 %2796
    %v2806 = vsel %vm491, %v2755, %v2783
    %v2807 = vsel %vm491, %v2757, %v2785
    %v2808 = vsel %vm491, %v2760, %v2787
    %v2809 = vsel %vm491, %v2762, %v2789
    %v2810 = vsel %vm491, %v2765, %v2791
    %v2811 = vsel %vm491, %v2767, %v2793
    %v2812 = vsel %vm491, %v2770, %v2795
    %v2813 = vsel %vm491, %v2772, %v2797
    %v2814 = vld [vmem:[%s5 + $0xa8] sm:$0xff]
    %v2815 = vld [vmem:[%s5 + $0xb0] sm:$0xff]
    %v2816 = vld [vmem:[%s5 + $0xb8] sm:$0xff]
    %v2817 = vld [vmem:[%s5 + $0xc0] sm:$0xff]
    %v2818 = vld [vmem:[%s5 + $0xc8] sm:$0xff]
    %v2819 = vld [vmem:[%s5 + $0xd0] sm:$0xff]
    %v2820 = vld [vmem:[%s5 + $0xd8] sm:$0xff]
    %v2821 = vld [vmem:[%s5 + $0xe0] sm:$0xff]
    %v2822 = vld [vmem:[%s6 + $0x9] sm:$0x1]
    %v2823 = vperm.slane %v2822, 0
    %v2825 = vsel %vm832, %v2806, 0
    %v2828 = vsel %vm832, %v2807, 0
    %v2831 = vsel %vm832, %v2808, 0
    %v2834 = vsel %vm832, %v2809, 0
    %v2837 = vsel %vm832, %v2810, 0
    %v2840 = vsel %vm832, %v2811, 0
    %v2843 = vsel %vm832, %v2812, 0
    %v2846 = vsel %vm832, %v2813, 0
    %2848 = vmatpush.msra.mxu0 0.0
    %2849 = vmatpush.msra.mxu0 0.0
    %2850 = vmatpush.msra.mxu0 0.0
    %2851 = vmatpush.msra.mxu0 0.0
    %2852 = vmatpush.msra.mxu0 0.0
    %2853 = vmatpush.msra.mxu0 0.0
    %2854 = vmatpush.msra.mxu0 0.0
    %2855 = vmatpush.msra.mxu0 0.0
    %2856 = vmatpush.msra.mxu0 %v2821
    %2857 = vmatpush.msra.mxu0 %v2820
    %2858 = vmatpush.msra.mxu0 %v2819
    %2859 = vmatpush.msra.mxu0 %v2818
    %2860 = vmatpush.msra.mxu0 %v2817
    %2861 = vmatpush.msra.mxu0 %v2816
    %2862 = vmatpush.msra.mxu0 %v2815
    %2863 = vmatpush.msra.mxu0 %v2814
    %2864 = vmatmul.f32.gmra.mxu0 %v2825
    %v2865 = vpop.f32.mrf.mxu0
    %v2866 = vadd.f32 %v2823, %v2865
    %2867 = vmatmul.f32.gmra.mxu0 %v2828
    %v2868 = vpop.f32.mrf.mxu0
    %v2869 = vadd.f32 %v2823, %v2868
    %2870 = vmatmul.f32.gmra.mxu0 %v2831
    %v2871 = vpop.f32.mrf.mxu0
    %v2872 = vadd.f32 %v2823, %v2871
    %2873 = vmatmul.f32.gmra.mxu0 %v2834
    %v2874 = vpop.f32.mrf.mxu0
    %v2875 = vadd.f32 %v2823, %v2874
    %2876 = vmatmul.f32.gmra.mxu0 %v2837
    %v2877 = vpop.f32.mrf.mxu0
    %v2878 = vadd.f32 %v2823, %v2877
    %2879 = vmatmul.f32.gmra.mxu0 %v2840
    %v2880 = vpop.f32.mrf.mxu0
    %v2881 = vadd.f32 %v2823, %v2880
    %2882 = vmatmul.f32.gmra.mxu0 %v2843
    %v2883 = vpop.f32.mrf.mxu0
    %v2884 = vadd.f32 %v2823, %v2883
    %2885 = vmatmul.f32.gmra.mxu0 %v2846
    %v2886 = vpop.f32.mrf.mxu0
    %v2887 = vadd.f32 %v2823, %v2886
    %2888 = vdwg.mxu0
    %v2889 = vmax.f32 %v2866, 0.0
    %v2890 = vmax.f32 %v2869, 0.0
    %v2891 = vmax.f32 %v2872, 0.0
    %v2892 = vmax.f32 %v2875, 0.0
    %v2893 = vmax.f32 %v2878, 0.0
    %v2894 = vmax.f32 %v2881, 0.0
    %v2895 = vmax.f32 %v2884, 0.0
    %v2896 = vmax.f32 %v2887, 0.0
    %2897 = vmatpush.msra.mxu0 0.0
    %2898 = vmatpush.msra.mxu0 0.0
    %2899 = vmatpush.msra.mxu0 0.0
    %2900 = vmatpush.msra.mxu0 0.0
    %2901 = vmatpush.msra.mxu0 0.0
    %2902 = vmatpush.msra.mxu0 0.0
    %2903 = vmatpush.msra.mxu0 0.0
    %2904 = vmatpush.msra.mxu0 0.0
    %2905 = vmatpush.msra.mxu0 %v2896
    %2906 = vmatpush.msra.mxu0 %v2895
    %2907 = vmatpush.msra.mxu0 %v2894
    %2908 = vmatpush.msra.mxu0 %v2893
    %2909 = vmatpush.msra.mxu0 %v2892
    %2910 = vmatpush.msra.mxu0 %v2891
    %2911 = vmatpush.msra.mxu0 %v2890
    %2912 = vmatpush.msra.mxu0 %v2889
    %2913 = vmatmul.f32.gmra.mxu0 %v1781
    %v2914 = vpop.f32.mrf.mxu0
    %v2915 = vadd.f32 0.0, %v2914
    %2916 = vdwg.mxu0
    %v2917 = vmul.f32 %v2915, %v1806
    %vm2918 = vcmp.gt.f32.partialorder %v46, 0.0
    %vm2919 = vcmp.gt.f32.partialorder %v47, 0.0
    %vm2920 = vcmp.gt.f32.partialorder %v48, 0.0
    %vm2921 = vcmp.gt.f32.partialorder %v49, 0.0
    %vm2922 = vcmp.gt.f32.partialorder %v50, 0.0
    %vm2923 = vcmp.gt.f32.partialorder %v51, 0.0
    %vm2924 = vcmp.gt.f32.partialorder %v52, 0.0
    %vm2925 = vcmp.gt.f32.partialorder %v53, 0.0
    %v2926 = vsel %vm2918, 1, 0
    %v2927 = vsel %vm2919, 1, 0
    %v2928 = vsel %vm2920, 1, 0
    %v2929 = vsel %vm2921, 1, 0
    %v2930 = vsel %vm2922, 1, 0
    %v2931 = vsel %vm2923, 1, 0
    %v2932 = vsel %vm2924, 1, 0
    %v2933 = vsel %vm2925, 1, 0
    %2934 = vset.pattern.permute.xlu0 0
    %2935 = vperm.xlu0 %2934, %v2926
    %v2936 = vpop.permute.xlu0 %2935
    %2937 = vset.pattern.permute.xlu0 0
    %2938 = vperm.xlu0 %2937, %v2927
    %v2939 = vpop.permute.xlu0 %2938
    %2940 = vset.pattern.permute.xlu0 0
    %2941 = vperm.xlu0 %2940, %v2928
    %v2942 = vpop.permute.xlu0 %2941
    %2943 = vset.pattern.permute.xlu0 0
    %2944 = vperm.xlu0 %2943, %v2929
    %v2945 = vpop.permute.xlu0 %2944
    %2946 = vset.pattern.permute.xlu0 0
    %2947 = vperm.xlu0 %2946, %v2930
    %v2948 = vpop.permute.xlu0 %2947
    %2949 = vset.pattern.permute.xlu0 0
    %2950 = vperm.xlu0 %2949, %v2931
    %v2951 = vpop.permute.xlu0 %2950
    %2952 = vset.pattern.permute.xlu0 0
    %2953 = vperm.xlu0 %2952, %v2932
    %v2954 = vpop.permute.xlu0 %2953
    %2955 = vset.pattern.permute.xlu0 0
    %2956 = vperm.xlu0 %2955, %v2933
    %v2957 = vpop.permute.xlu0 %2956
    %vm2958 = vcmp.eq.s32.totalorder %v2936, 1
    %vm2959 = vcmp.eq.s32.totalorder %v2939, 1
    %vm2960 = vcmp.eq.s32.totalorder %v2942, 1
    %vm2961 = vcmp.eq.s32.totalorder %v2945, 1
    %vm2962 = vcmp.eq.s32.totalorder %v2948, 1
    %vm2963 = vcmp.eq.s32.totalorder %v2951, 1
    %vm2964 = vcmp.eq.s32.totalorder %v2954, 1
    %vm2965 = vcmp.eq.s32.totalorder %v2957, 1
    %v2966 = vsel %vm2958, %v2889, -1e+30
    %v2967 = vsel %vm2959, %v2890, -1e+30
    %v2968 = vsel %vm2960, %v2891, -1e+30
    %v2969 = vsel %vm2961, %v2892, -1e+30
    %v2970 = vsel %vm2962, %v2893, -1e+30
    %v2971 = vsel %vm2963, %v2894, -1e+30
    %v2972 = vsel %vm2964, %v2895, -1e+30
    %v2973 = vsel %vm2965, %v2896, -1e+30
    %v2974 = vsel %vm491, %v2966, -inf
    %v2975 = vsel %vm491, %v2967, -inf
    %v2976 = vsel %vm491, %v2968, -inf
    %v2977 = vsel %vm491, %v2969, -inf
    %v2978 = vsel %vm491, %v2970, -inf
    %v2979 = vmax.f32 %v2974, %v2978
    %v2980 = vsel %vm491, %v2971, -inf
    %v2981 = vmax.f32 %v2975, %v2980
    %v2982 = vsel %vm491, %v2972, -inf
    %v2983 = vmax.f32 %v2976, %v2982
    %v2984 = vsel %vm491, %v2973, -inf
    %v2985 = vmax.f32 %v2977, %v2984
    %v2986 = vmax.f32 %v2979, %v2981
    %v2987 = vmax.f32 %v2983, %v2985
    %v2988 = vmax.f32 %v2986, %v2987
    %v2989 = vrot.slane %v2988, 4
    %v2990 = vmax.f32 %v2988, %v2989
    %v2991 = vrot.slane %v2990, 2
    %v2992 = vmax.f32 %v2990, %v2991
    %v2993 = vrot.slane %v2992, 1
    %v2994 = vmax.f32 %v2992, %v2993
    %2995 = vset.pattern.permute.xlu0 1
    %2996 = vperm.xlu0 %2995, %v2926
    %v2997 = vpop.permute.xlu0 %2996
    %2998 = vset.pattern.permute.xlu0 1
    %2999 = vperm.xlu0 %2998, %v2927
    %v3000 = vpop.permute.xlu0 %2999
    %3001 = vset.pattern.permute.xlu0 1
    %3002 = vperm.xlu0 %3001, %v2928
    %v3003 = vpop.permute.xlu0 %3002
    %3004 = vset.pattern.permute.xlu0 1
    %3005 = vperm.xlu0 %3004, %v2929
    %v3006 = vpop.permute.xlu0 %3005
    %3007 = vset.pattern.permute.xlu0 1
    %3008 = vperm.xlu0 %3007, %v2930
    %v3009 = vpop.permute.xlu0 %3008
    %3010 = vset.pattern.permute.xlu0 1
    %3011 = vperm.xlu0 %3010, %v2931
    %v3012 = vpop.permute.xlu0 %3011
    %3013 = vset.pattern.permute.xlu0 1
    %3014 = vperm.xlu0 %3013, %v2932
    %v3015 = vpop.permute.xlu0 %3014
    %3016 = vset.pattern.permute.xlu0 1
    %3017 = vperm.xlu0 %3016, %v2933
    %v3018 = vpop.permute.xlu0 %3017
    %vm3019 = vcmp.eq.s32.totalorder %v2997, 1
    %vm3020 = vcmp.eq.s32.totalorder %v3000, 1
    %vm3021 = vcmp.eq.s32.totalorder %v3003, 1
    %vm3022 = vcmp.eq.s32.totalorder %v3006, 1
    %vm3023 = vcmp.eq.s32.totalorder %v3009, 1
    %vm3024 = vcmp.eq.s32.totalorder %v3012, 1
    %vm3025 = vcmp.eq.s32.totalorder %v3015, 1
    %vm3026 = vcmp.eq.s32.totalorder %v3018, 1
    %v3027 = vsel %vm3019, %v2889, -1e+30
    %v3028 = vsel %vm3020, %v2890, -1e+30
    %v3029 = vsel %vm3021, %v2891, -1e+30
    %v3030 = vsel %vm3022, %v2892, -1e+30
    %v3031 = vsel %vm3023, %v2893, -1e+30
    %v3032 = vsel %vm3024, %v2894, -1e+30
    %v3033 = vsel %vm3025, %v2895, -1e+30
    %v3034 = vsel %vm3026, %v2896, -1e+30
    %v3035 = vsel %vm491, %v3027, -inf
    %v3036 = vsel %vm491, %v3028, -inf
    %v3037 = vsel %vm491, %v3029, -inf
    %v3038 = vsel %vm491, %v3030, -inf
    %v3039 = vsel %vm491, %v3031, -inf
    %v3040 = vmax.f32 %v3035, %v3039
    %v3041 = vsel %vm491, %v3032, -inf
    %v3042 = vmax.f32 %v3036, %v3041
    %v3043 = vsel %vm491, %v3033, -inf
    %v3044 = vmax.f32 %v3037, %v3043
    %v3045 = vsel %vm491, %v3034, -inf
    %v3046 = vmax.f32 %v3038, %v3045
    %v3047 = vmax.f32 %v3040, %v3042
    %v3048 = vmax.f32 %v3044, %v3046
    %v3049 = vmax.f32 %v3047, %v3048
    %v3050 = vrot.slane %v3049, 4
    %v3051 = vmax.f32 %v3049, %v3050
    %v3052 = vrot.slane %v3051, 2
    %v3053 = vmax.f32 %v3051, %v3052
    %v3054 = vrot.slane %v3053, 1
    %v3055 = vmax.f32 %v3053, %v3054
    %vm3056 = vcmask 1040384
    %v3057 = vsel %vm3056, %v2994, %v3055
    %3059 = vrot.lane.b32.xlu0 %v2917, 32
    %v3060 = vpop.permute.xlu0 %3059
    %v3062 = vsel %vm491, %v3057, %v3060
    %v3063 = vld [vmem:[%s5 + $0xe8] sm:$0xff]
    %v3064 = vld [vmem:[%s5 + $0xf0] sm:$0xff]
    %v3065 = vld [vmem:[%s5 + $0xf8] sm:$0xff]
    %v3066 = vld [vmem:[%s5 + $0x100] sm:$0xff]
    %v3067 = vld [vmem:[%s5 + $0x108] sm:$0xff]
    %v3068 = vld [vmem:[%s5 + $0x110] sm:$0xff]
    %v3069 = vld [vmem:[%s5 + $0x118] sm:$0xff]
    %v3070 = vld [vmem:[%s5 + $0x120] sm:$0xff]
    %v3071 = vld [vmem:[%s6 + $0xa] sm:$0x1]
    %v3072 = vperm.slane %v3071, 0
    %v3074 = vsel %vm832, %v3062, 0
    %3076 = vmatpush.msra.mxu0 0.0
    %3077 = vmatpush.msra.mxu0 0.0
    %3078 = vmatpush.msra.mxu0 0.0
    %3079 = vmatpush.msra.mxu0 0.0
    %3080 = vmatpush.msra.mxu0 0.0
    %3081 = vmatpush.msra.mxu0 0.0
    %3082 = vmatpush.msra.mxu0 0.0
    %3083 = vmatpush.msra.mxu0 0.0
    %3084 = vmatpush.msra.mxu0 %v3070
    %3085 = vmatpush.msra.mxu0 %v3069
    %3086 = vmatpush.msra.mxu0 %v3068
    %3087 = vmatpush.msra.mxu0 %v3067
    %3088 = vmatpush.msra.mxu0 %v3066
    %3089 = vmatpush.msra.mxu0 %v3065
    %3090 = vmatpush.msra.mxu0 %v3064
    %3091 = vmatpush.msra.mxu0 %v3063
    %3092 = vmatmul.f32.gmra.mxu0 %v3074
    %v3093 = vpop.f32.mrf.mxu0
    %v3094 = vadd.f32 %v3072, %v3093
    %3095 = vdwg.mxu0
    %v3096 = vmul.f32 %v3094, 0.5
    %v3097 = vmul.f32 %v3094, 0.70710677
    %vm3098 = vcmp.ge.f32.partialorder %v3097, 0.0
    %v3099 = vsel %vm3098, 1.0, -1.0
    %v3100 = vand.u32 2147483647, %v3097
    %v3101 = vmul.f32 %v3100, 0.3275911
    %v3102 = vadd.f32 %v3101, 1.0
    %v3103 = vrcp.pop %v3102
    %v3104 = vmul.f32 %v3102, %v3103
    %v3105 = vsub.f32 1.0, %v3104
    %v3106 = vmul.f32 %v3103, %v3105
    %v3107 = vadd.f32 %v3103, %v3106
    %vm3108 = vweird.f32 %v3102
    %vm3109 = vweird.f32 %v3103
    %vm3110 = vmor %vm3108, %vm3109
    %v3111 = vsel %vm3110, %v3103, %v3107
    %v3112 = vand.u32 2147483647, %v3102
    %vm3113 = vcmp.eq.f32.partialorder %v3112, 8.507059e+37
    %v3114 = vand.u32 %v3102, 2147483648
    %v3115 = vor.u32 1.1754944e-38, %v3114
    %v3116 = vsel %vm3113, %v3115, %v3111
    %v3117 = vmul.f32 1.0, %v3116
    %v3118 = vmul.f32 %v3117, 1.0614054
    %v3119 = vadd.f32 %v3118, -1.4531521
    %v3120 = vmul.f32 %v3119, %v3117
    %v3121 = vadd.f32 %v3120, 1.4214138
    %v3122 = vmul.f32 %v3121, %v3117
    %v3123 = vadd.f32 %v3122, -0.28449672
    %v3124 = vmul.f32 %v3123, %v3117
    %v3125 = vadd.f32 %v3124, 0.2548296
    %v3126 = vmul.f32 %v3125, %v3117
    %v3127 = vsub.f32 0.0, %v3100
    %v3128 = vmul.f32 %v3127, %v3100
    %v3129 = vmul.f32 %v3128, 1.442695
    %v3130 = vpow.pop %v3129
    %v3131 = vmul.f32 %v3126, %v3130
    %v3132 = vsub.f32 1.0, %v3131
    %v3133 = vmul.f32 %v3099, %v3132
    %v3134 = vadd.f32 %v3133, 1.0
    %v3135 = vmul.f32 %v3096, %v3134
    %v3136 = vld [vmem:[%s5 + $0x128] sm:$0xff]
    %v3137 = vld [vmem:[%s5 + $0x130] sm:$0xff]
    %v3138 = vld [vmem:[%s5 + $0x138] sm:$0xff]
    %v3139 = vld [vmem:[%s5 + $0x140] sm:$0xff]
    %v3140 = vld [vmem:[%s6 + $0xb] sm:$0x1]
    %v3141 = vperm.slane %v3140, 0
    %v3143 = vsel %vm491, %v3135, 0
    %3145 = vmatpush.msra.mxu0 0.0
    %3146 = vmatpush.msra.mxu0 0.0
    %3147 = vmatpush.msra.mxu0 0.0
    %3148 = vmatpush.msra.mxu0 0.0
    %3149 = vmatpush.msra.mxu0 0.0
    %3150 = vmatpush.msra.mxu0 0.0
    %3151 = vmatpush.msra.mxu0 0.0
    %3152 = vmatpush.msra.mxu0 0.0
    %3153 = vmatpush.msra.mxu0 0.0
    %3154 = vmatpush.msra.mxu0 0.0
    %3155 = vmatpush.msra.mxu0 0.0
    %3156 = vmatpush.msra.mxu0 0.0
    %3157 = vmatpush.msra.mxu0 %v3139
    %3158 = vmatpush.msra.mxu0 %v3138
    %3159 = vmatpush.msra.mxu0 %v3137
    %3160 = vmatpush.msra.mxu0 %v3136
    %3161 = vmatmul.f32.gmra.mxu0 %v3143
    %v3162 = vpop.f32.mrf.mxu0
    %v3163 = vadd.f32 %v3141, %v3162
    %3164 = vdwg.mxu0
    %vm3165 = vcmask 9216
    %v3166 = vsel %vm3165, %v3163, -inf
    %3167 = vmax.xlane.f32.xlu0 %v3166
    %v3168 = vpop.xlane.xlu0 %3167
    %v3169 = vsub.f32 %v3163, %v3168
    %v3170 = vmul.f32 %v3169, 1.442695
    %v3171 = vpow.pop %v3170
    %v3172 = vsel %vm3165, %v3171, 0.0
    %3173 = vadd.xlane.f32.xlu0 %v3172
    %v3174 = vpop.xlane.xlu0 %3173
    %v3175 = vlog2.pop %v3174
    %v3176 = vmul.f32 %v3175, 0.6931472
    %v3177 = vadd.f32 %v3168, %v3176
    %v3178 = vsub.f32 %v3163, %v3177
    %3179 = vst.msk [vmem:[#allocation2] sm:$0x3] %vm3165, %v3178
    // Predicated region
    $region30: #{tpu_custom_call.1} parent=1 // pred_check
      _
    $region31: #{tpu_custom_call.1} parent=1 // pred_check_branch
      %3181 = sbr.rel (0) target = $region33
    $region32: #{tpu_custom_call.1} parent=1 // pred_region
      %3183 = vsyncadd [#allocation3], 0
      %s3185 = sshll.u32 [#allocation2], 4
      %s3186 = int_to_ptr.vmem [resolvable:$true] %s3185
      %s3187 = sshll.u32 %s7, 4
      %s3188 = int_to_ptr.hbm [resolvable:$true] %s3187
      %3190 = dma.vmem_to_hbm [thread:$0]  %s3186, 32, %s3188, [#allocation3]
    $region33: #{tpu_custom_call.1} parent=1 // pred_fallthru
      _
    // Predicated region
    $region34: #{tpu_custom_call.1} parent=1 // pred_check
      _
    $region35: #{tpu_custom_call.1} parent=1 // pred_check_branch
      %3192 = sbr.rel (0) target = $region37
    $region36: #{tpu_custom_call.1} parent=1 // pred_region
      %3194 = dma.done [#allocation3], 32
    $region37: #{tpu_custom_call.1} parent=1 // pred_fallthru
      _
    %3195 = vsyncpa [#allocation3], 1

</llo_original>
